<compile_context>
chip_gen: v6e
topology: v6e:2x2x1
jax: 0.10.0
libtpu: 0.0.40
codegen_flags: <defaults>
</compile_context>

<pallas_src>
import math

import jax
import jax.numpy as jnp
from jax.experimental import pallas as pl
from jax.experimental.pallas import tpu as pltpu

# ----------------------- model hyper-parameters (small) ---------------------
B, L = 2, 8            # batch, sequence length
D = 32                 # embed_dim
H, DH = 4, 8           # heads, head dim (H*DH == D)
FFN = 64               # ffn hidden dim
NLAYERS = 2            # transformer layers
VOCAB = 33             # ESM alphabet size
VPAD = 128             # lane-dense padded vocab for the logits GEMM
LORA_R = 8
LORA_ALPHA = 16
LORA_SCALING = LORA_ALPHA / LORA_R
RPAD = 32              # 3*LORA_R (=24) padded to a 32-row block
CONTRAST_HID = 256
CONTRAST_OUT = 128

# ---- packed layer GEMM-weight slab: row offsets (all 32-aligned, bf16) ------
_W_QKV, _W_A, _W_B, _W_O, _W_1, _W_2 = 0, 32, 64, 96, 128, 160
LW_ROWS = 224
LW_COLS = 96            # max(3*D, FFN)
# ---- packed layer vector-param slab: row ids --------------------------------
_V_LN1G, _V_LN1B, _V_BQKV, _V_BO, _V_LN2G, _V_LN2B, _V_B1, _V_B2 = range(8)
# ---- packed head vector slab: head-mask rows 0:32, then scalars -------------
_HV_MASK = 0
_HV_LNFG, _HV_LNFB, _HV_LMDB, _HV_LMLNG, _HV_LMLNB, _HV_LMPB = 32, 33, 34, 35, 36, 37
HV_ROWS = 38
# ---- packed head GEMM-weight slab -------------------------------------------
_HW_DW, _HW_PW = 0, 32


# ------------------------------ fused Pallas kernel --------------------------
def _fused_forward_kernel(x_ref, lvec_ref, lw_ref, hvec_ref, hw_ref,
                          tok_ref, logits_ref, mean_ref):
    f32, bf16 = jnp.float32, jnp.bfloat16
    rows = x_ref.shape[0]
    bb = rows // L                     # sequences in this block
    nl = lw_ref.shape[0]               # transformer layers

    def ln(x, g, b, eps=1e-5):
        mu = jnp.mean(x, axis=-1, keepdims=True)
        var = jnp.mean((x - mu) ** 2, axis=-1, keepdims=True)
        return (x - mu) * jax.lax.rsqrt(var + eps) * g + b

    # Static 0/1 mask: row-block h keeps only head h's feature lanes.
    head_mask = hvec_ref[_HV_MASK:_HV_MASK + H * L, 0:D]          # (H*L, D) f32

    x = x_ref[...]                                                # (rows, D) f32

    for li in range(nl):                                          # unrolled (NL=2)
        vp = lvec_ref[li]                                         # (8, 96) f32
        ln1g = vp[_V_LN1G:_V_LN1G + 1, 0:D]
        ln1b = vp[_V_LN1B:_V_LN1B + 1, 0:D]
        bqkv = vp[_V_BQKV:_V_BQKV + 1, 0:3 * D]
        bo   = vp[_V_BO:_V_BO + 1, 0:D]
        ln2g = vp[_V_LN2G:_V_LN2G + 1, 0:D]
        ln2b = vp[_V_LN2B:_V_LN2B + 1, 0:D]
        b1   = vp[_V_B1:_V_B1 + 1, 0:FFN]
        b2   = vp[_V_B2:_V_B2 + 1, 0:D]

        wqkv = lw_ref[li, _W_QKV:_W_QKV + D, 0:3 * D]             # (D, 3D)   bf16
        aqkv = lw_ref[li, _W_A:_W_A + D, 0:RPAD]                  # (D, RPAD) bf16
        bmat = lw_ref[li, _W_B:_W_B + RPAD, 0:3 * D]              # (RPAD,3D) bf16
        wo   = lw_ref[li, _W_O:_W_O + D, 0:D]                     # (D, D)    bf16
        w1   = lw_ref[li, _W_1:_W_1 + D, 0:FFN]                   # (D, FFN)  bf16
        w2   = lw_ref[li, _W_2:_W_2 + FFN, 0:D]                   # (FFN, D)  bf16

        # ---- attention block (pre-LN); batch folded into the QKV/LoRA GEMMs --
        h = ln(x, ln1g, ln1b)
        hb = h.astype(bf16)                                       # cast once, reused
        qkv = jnp.dot(hb, wqkv, preferred_element_type=f32) + bqkv
        la = jnp.dot(hb, aqkv, preferred_element_type=f32)        # LoRA-A (rows, RPAD)
        qkv = qkv + jnp.dot(la.astype(bf16), bmat, preferred_element_type=f32)
        q = qkv[:, 0:D]                                           # scale pre-folded
        k = qkv[:, D:2 * D]
        v = qkv[:, 2 * D:3 * D]

        attn_blocks = []
        for sb in range(bb):                                      # per-sequence (L,L) attn
            r0 = sb * L
            qb = q[r0:r0 + L, :]
            kb = k[r0:r0 + L, :]
            vb = v[r0:r0 + L, :]
            # All heads' scores in ONE matmul: row block h = q_h @ k_h.T
            qm = jnp.concatenate([qb] * H, axis=0) * head_mask    # (H*L, D)
            s = jax.lax.dot_general(qm, kb, (((1,), (1,)), ((), ())),
                                    preferred_element_type=f32)   # (H*L, L)
            s = s - jnp.max(s, axis=-1, keepdims=True)
            e = jnp.exp(s)
            p = e / jnp.sum(e, axis=-1, keepdims=True)            # one exact softmax
            pv = jnp.dot(p, vb, preferred_element_type=f32)       # (H*L, D)
            pv = pv * head_mask                                   # keep head-h lanes only
            o = pv[0:L, :]
            for hd in range(1, H):
                o = o + pv[hd * L:(hd + 1) * L, :]                # (L, D), heads already placed
            attn_blocks.append(o)
        attn = attn_blocks[0] if bb == 1 else jnp.concatenate(attn_blocks, axis=0)
        x = x + jnp.dot(attn.astype(bf16), wo, preferred_element_type=f32) + bo

        # ---- feed-forward block (pre-LN, GELU) --------------------------------
        h = ln(x, ln2g, ln2b)
        f = jnp.dot(h.astype(bf16), w1, preferred_element_type=f32) + b1
        # TODO(synk): ESM-2 / nn.GELU default is exact erf GELU; tanh approx here.
        f = jax.nn.gelu(f, approximate=True)
        x = x + jnp.dot(f.astype(bf16), w2, preferred_element_type=f32) + b2

    # representations[num_layers] = post final-LayerNorm hidden states
    lnfg = hvec_ref[_HV_LNFG:_HV_LNFG + 1, 0:D]
    lnfb = hvec_ref[_HV_LNFB:_HV_LNFB + 1, 0:D]
    tok = ln(x, lnfg, lnfb)                                       # (rows, D)
    tok_ref[...] = tok.astype(tok_ref.dtype)

    # lm head: dense -> gelu -> LN -> tied projection (lane-dense padded vocab)
    lm_db  = hvec_ref[_HV_LMDB:_HV_LMDB + 1, 0:D]
    lm_lng = hvec_ref[_HV_LMLNG:_HV_LMLNG + 1, 0:D]
    lm_lnb = hvec_ref[_HV_LMLNB:_HV_LMLNB + 1, 0:D]
    lm_pb  = hvec_ref[_HV_LMPB:_HV_LMPB + 1, 0:VPAD]
    lm_dw  = hw_ref[_HW_DW:_HW_DW + D, 0:D]                       # (D, D)    bf16
    lm_pw  = hw_ref[_HW_PW:_HW_PW + D, 0:VPAD]                    # (D, VPAD) bf16
    hh = jnp.dot(tok.astype(bf16), lm_dw, preferred_element_type=f32) + lm_db
    hh = jax.nn.gelu(hh, approximate=True)
    hh = ln(hh, lm_lng, lm_lnb)
    logits_ref[...] = (jnp.dot(hh.astype(bf16), lm_pw, preferred_element_type=f32)
                       + lm_pb).astype(logits_ref.dtype)

    # per-sequence mean of token embeddings (the contrast MLP itself runs in XLA)
    means = [jnp.mean(tok[sb * L:(sb + 1) * L, :], axis=0, keepdims=True)
             for sb in range(bb)]
    mean_ref[0] = (means[0] if bb == 1 else
                   jnp.concatenate(means, axis=0)).astype(mean_ref.dtype)


# ------------------------------ parameter init --------------------------------
def init_params(key):
    keys = iter(jax.random.split(key, 64))
    f32 = jnp.float32

    def nxt():
        return next(keys)

    def lin(din, dout):
        bound = 1.0 / math.sqrt(din)
        w = jax.random.uniform(nxt(), (din, dout), f32, -bound, bound)
        b = jax.random.uniform(nxt(), (1, dout), f32, -bound, bound)
        return w, b

    def lora_a(din):
        # nn.init.kaiming_uniform_(lora_A, a=sqrt(5)) -> U(-1/sqrt(din), 1/sqrt(din));
        # stored pre-transposed as (din, r).
        bound = 1.0 / math.sqrt(din)
        return jax.random.uniform(nxt(), (din, LORA_R), f32, -bound, bound)

    def pad2(a, shape):
        out = jnp.zeros(shape, f32)
        return out.at[:a.shape[0], :a.shape[1]].set(a)

    embed = 0.02 * jax.random.normal(nxt(), (VOCAB, D), f32)
    qscale = 1.0 / math.sqrt(DH)

    lvecs, lws = [], []
    for _ in range(NLAYERS):
        wq, bq = lin(D, D)
        wk, bk = lin(D, D)
        wv, bv = lin(D, D)
        aq, ak, av = lora_a(D), lora_a(D), lora_a(D)
        # fold the 1/sqrt(DH) attention scale into the q projection
        wq, bq = wq * qscale, bq * qscale
        wqkv = jnp.concatenate([wq, wk, wv], axis=1)              # (D, 3D)
        bqkv = jnp.concatenate([bq, bk, bv], axis=1)              # (1, 3D)
        aqkv = jnp.concatenate([aq, ak, av], axis=1)              # (D, 3r)
        # Block-diagonal LoRA-B carrying scaling*B_p.T per projection (with qscale
        # folded on the q block).  nn.init.zeros_(lora_B) -> all zeros at init.
        bmat = jnp.zeros((RPAD, 3 * D), f32)
        wo, bo = lin(D, D)
        w1, b1 = lin(D, FFN)
        w2, b2 = lin(FFN, D)
        ln1g = jnp.ones((1, D), f32); ln1b = jnp.zeros((1, D), f32)
        ln2g = jnp.ones((1, D), f32); ln2b = jnp.zeros((1, D), f32)

        lvecs.append(jnp.concatenate(
            [pad2(a, (1, LW_COLS)) for a in
             (ln1g, ln1b, bqkv, bo, ln2g, ln2b, b1, b2)], axis=0))        # (8, 96)
        lws.append(jnp.concatenate([
            pad2(wqkv, (32, LW_COLS)),
            pad2(aqkv, (32, LW_COLS)),
            pad2(bmat, (32, LW_COLS)),
            pad2(wo,   (32, LW_COLS)),
            pad2(w1,   (32, LW_COLS)),
            pad2(w2,   (64, LW_COLS)),
        ], axis=0))                                                        # (224, 96)

    lvec = jnp.stack(lvecs)                                       # (NL, 8, 96)   f32
    lw = jnp.stack(lws).astype(jnp.bfloat16)                      # (NL, 224, 96) bf16

    # head mask: row block h keeps head h's DH lanes
    row_head = (jnp.arange(H * L) // L)[:, None]
    col_head = (jnp.arange(D) // DH)[None, :]
    head_mask = (row_head == col_head).astype(f32)                # (H*L, D)

    lnfg = jnp.ones((1, D), f32); lnfb = jnp.zeros((1, D), f32)   # final LN
    lm_dw, lm_db = lin(D, D)
    lm_lng = jnp.ones((1, D), f32); lm_lnb = jnp.zeros((1, D), f32)
    lm_pb = jnp.zeros((1, VPAD), f32)
    hvec = jnp.concatenate([
        pad2(head_mask, (32, VPAD)),
        pad2(lnfg, (1, VPAD)), pad2(lnfb, (1, VPAD)),
        pad2(lm_db, (1, VPAD)),
        pad2(lm_lng, (1, VPAD)), pad2(lm_lnb, (1, VPAD)),
        lm_pb,
    ], axis=0)                                                    # (38, 128) f32

    lm_pw = pad2(embed.T, (D, VPAD))                              # tied proj, padded
    hw = jnp.concatenate([pad2(lm_dw, (32, VPAD)), lm_pw],
                         axis=0).astype(jnp.bfloat16)             # (64, 128) bf16

    # contrast head runs in plain XLA on the kernel's per-sequence means
    cw1, cb1 = lin(D, CONTRAST_HID)
    cw2, cb2 = lin(CONTRAST_HID, CONTRAST_OUT)

    return {"embed": embed, "lvec": lvec, "lw": lw, "hvec": hvec, "hw": hw,
            "cw1": cw1, "cb1": cb1, "cw2": cw2, "cb2": cb2}


# ------------------------------ helpers ---------------------------------------
def _pick_block_b(batch, seqlen, target_rows=256):
    """Largest divisor of batch whose row slab is <= ~target_rows (MXU fill)."""
    bb = max(1, min(batch, max(1, target_rows // max(seqlen, 1))))
    while batch % bb:
        bb -= 1
    return bb


def _cost_estimate(batch, l):
    per_layer = (2 * l * D * 3 * D + 2 * l * D * RPAD + 2 * l * RPAD * 3 * D
                 + 2 * (H * l) * D * l + 2 * (H * l) * l * D
                 + 2 * l * D * D + 4 * l * D * FFN)
    head = 2 * l * D * D + 2 * l * D * VPAD
    flops = batch * (NLAYERS * per_layer + head)
    transc = batch * (NLAYERS * (H * l * l + l * FFN) + l * D)
    bytes_acc = (batch * l * (D + D + VPAD) * 4 + batch * D * 4
                 + NLAYERS * (8 * LW_COLS * 4 + LW_ROWS * LW_COLS * 2)
                 + HV_ROWS * VPAD * 4 + 64 * VPAD * 2)
    return pl.CostEstimate(flops=int(flops), transcendentals=int(transc),
                           bytes_accessed=int(bytes_acc))


# ------------------------------ forward pass ----------------------------------
@jax.jit
def enhanced_esm_forward(params, tokens):
    """tokens: (B, L) int32 -> (token_embeddings, contrast_emb, logits)."""
    batch, l = tokens.shape
    # Embedding gather stays in XLA; the kernel consumes a lane-dense row slab.
    x0 = params["embed"][tokens].reshape(batch * l, D)            # (B*L, D)

    # Fold as many sequences as the MXU likes into each grid step (whole batch here).
    # TODO(synk): for large batches on v7x, shard blocks across the two TensorCores
    #             via pltpu.CORE_PARALLEL / pl.core_map.
    block_b = _pick_block_b(batch, l)
    nb = batch // block_b
    rows = block_b * l

    out_shape = (
        jax.ShapeDtypeStruct((batch * l, D), jnp.float32),        # token embeddings
        jax.ShapeDtypeStruct((batch * l, VPAD), jnp.float32),     # padded logits
        jax.ShapeDtypeStruct((nb, block_b, D), jnp.float32),      # per-seq means
    )
    in_specs = [
        pl.BlockSpec((rows, D), lambda i: (i, 0)),
        pl.BlockSpec(params["lvec"].shape, lambda i: (0, 0, 0)),
        pl.BlockSpec(params["lw"].shape, lambda i: (0, 0, 0)),
        pl.BlockSpec(params["hvec"].shape, lambda i: (0, 0)),
        pl.BlockSpec(params["hw"].shape, lambda i: (0, 0)),
    ]
    out_specs = (
        pl.BlockSpec((rows, D), lambda i: (i, 0)),
        pl.BlockSpec((rows, VPAD), lambda i: (i, 0)),
        pl.BlockSpec((1, block_b, D), lambda i: (i, 0, 0)),
    )

    tok_flat, logits_flat, means = pl.pallas_call(
        _fused_forward_kernel,
        out_shape=out_shape,
        grid=(nb,),
        in_specs=in_specs,
        out_specs=out_specs,
        compiler_params=pltpu.CompilerParams(
            dimension_semantics=("parallel",)),
        cost_estimate=_cost_estimate(batch, l),
    )(x0, params["lvec"], params["lw"], params["hvec"], params["hw"])

    tok = tok_flat.reshape(batch, l, D)
    logits = logits_flat.reshape(batch, l, VPAD)[..., :VOCAB]     # strip pad lanes

    # contrast head: Linear -> ReLU -> Linear on the per-sequence means (XLA)
    means = means.reshape(batch, D)
    hid = jnp.maximum(means @ params["cw1"] + params["cb1"], 0.0)
    contrast = hid @ params["cw2"] + params["cb2"]
    return tok, contrast, logits


# ----------------------------------- main --------------------------------------
if __name__ == "__main__":
    key = jax.random.PRNGKey(0)
    pkey, tkey = jax.random.split(key)
    params = init_params(pkey)
    tokens = jax.random.randint(tkey, (B, L), 0, VOCAB, dtype=jnp.int32)

    tok_emb, contrast_emb, logits = enhanced_esm_forward(params, tokens)
    jax.block_until_ready((tok_emb, contrast_emb, logits))

    assert tok_emb.shape == (B, L, D)
    assert contrast_emb.shape == (B, CONTRAST_OUT)
    assert logits.shape == (B, L, VOCAB)
    assert bool(jnp.all(jnp.isfinite(tok_emb)))
    assert bool(jnp.all(jnp.isfinite(contrast_emb)))
    assert bool(jnp.all(jnp.isfinite(logits)))
    print("KERNEL_OK")
</pallas_src>

<mosaic_0001>
module attributes {stable_mosaic.version = 11 : i64} {
  func.func @_fused_forward_kernel(%arg0: i32, %arg1: memref<16x32xf32, #tpu.memory_space<vmem>>, %arg2: memref<2x8x96xf32, #tpu.memory_space<vmem>>, %arg3: memref<2x224x96xbf16, #tpu.memory_space<vmem>>, %arg4: memref<38x128xf32, #tpu.memory_space<vmem>>, %arg5: memref<64x128xbf16, #tpu.memory_space<vmem>>, %arg6: memref<16x32xf32, #tpu.memory_space<vmem>>, %arg7: memref<16x128xf32, #tpu.memory_space<vmem>>, %arg8: memref<1x2x32xf32, #tpu.memory_space<vmem>>) attributes {dimension_semantics = [#tpu.dimension_semantics<parallel>], iteration_bounds = array<i64: 1>, scalar_prefetch = 0 : i64, scratch_operands = 0 : i64, tpu.core_type = #tpu.core_type<tc>, window_params = [{transform_indices = @transform_0, window_bounds = array<i64: 16, 32>}, {pipeline_mode = #tpu.pipeline_mode<synchronous>, transform_indices = @transform_1, window_bounds = array<i64: 2, 8, 96>}, {pipeline_mode = #tpu.pipeline_mode<synchronous>, transform_indices = @transform_2, window_bounds = array<i64: 2, 224, 96>}, {pipeline_mode = #tpu.pipeline_mode<synchronous>, transform_indices = @transform_3, window_bounds = array<i64: 38, 128>}, {pipeline_mode = #tpu.pipeline_mode<synchronous>, transform_indices = @transform_4, window_bounds = array<i64: 64, 128>}, {transform_indices = @transform_5, window_bounds = array<i64: 16, 32>}, {transform_indices = @transform_6, window_bounds = array<i64: 16, 128>}, {transform_indices = @transform_7, window_bounds = array<i64: 1, 2, 32>}]} {
    %c0 = arith.constant 0 : index
    %c0_0 = arith.constant 0 : index
    %0 = vector.load %arg4[%c0, %c0_0] : memref<38x128xf32, #tpu.memory_space<vmem>>, vector<32x32xf32>
    %c0_1 = arith.constant 0 : index
    %c0_2 = arith.constant 0 : index
    %1 = vector.load %arg1[%c0_1, %c0_2] : memref<16x32xf32, #tpu.memory_space<vmem>>, vector<16x32xf32>
    %c0_3 = arith.constant 0 : index
    %c0_4 = arith.constant 0 : index
    %c0_5 = arith.constant 0 : index
    %2 = vector.load %arg2[%c0_3, %c0_4, %c0_5] : memref<2x8x96xf32, #tpu.memory_space<vmem>>, vector<1x8x96xf32>
    %3 = vector.shape_cast %2 : vector<1x8x96xf32> to vector<8x96xf32>
    %4 = vector.extract_strided_slice %3 {offsets = [0, 0], sizes = [1, 32], strides = [1, 1]} : vector<8x96xf32> to vector<1x32xf32>
    %5 = vector.extract_strided_slice %3 {offsets = [1, 0], sizes = [1, 32], strides = [1, 1]} : vector<8x96xf32> to vector<1x32xf32>
    %6 = vector.extract_strided_slice %3 {offsets = [2, 0], sizes = [1, 96], strides = [1, 1]} : vector<8x96xf32> to vector<1x96xf32>
    %7 = vector.extract_strided_slice %3 {offsets = [3, 0], sizes = [1, 32], strides = [1, 1]} : vector<8x96xf32> to vector<1x32xf32>
    %8 = vector.extract_strided_slice %3 {offsets = [4, 0], sizes = [1, 32], strides = [1, 1]} : vector<8x96xf32> to vector<1x32xf32>
    %9 = vector.extract_strided_slice %3 {offsets = [5, 0], sizes = [1, 32], strides = [1, 1]} : vector<8x96xf32> to vector<1x32xf32>
    %10 = vector.extract_strided_slice %3 {offsets = [6, 0], sizes = [1, 64], strides = [1, 1]} : vector<8x96xf32> to vector<1x64xf32>
    %11 = vector.extract_strided_slice %3 {offsets = [7, 0], sizes = [1, 32], strides = [1, 1]} : vector<8x96xf32> to vector<1x32xf32>
    %c0_6 = arith.constant 0 : index
    %c0_7 = arith.constant 0 : index
    %c0_8 = arith.constant 0 : index
    %12 = vector.load %arg3[%c0_6, %c0_7, %c0_8] : memref<2x224x96xbf16, #tpu.memory_space<vmem>>, vector<1x32x96xbf16>
    %13 = vector.shape_cast %12 : vector<1x32x96xbf16> to vector<32x96xbf16>
    %c0_9 = arith.constant 0 : index
    %c32 = arith.constant 32 : index
    %c0_10 = arith.constant 0 : index
    %14 = vector.load %arg3[%c0_9, %c32, %c0_10] : memref<2x224x96xbf16, #tpu.memory_space<vmem>>, vector<1x32x32xbf16>
    %15 = vector.shape_cast %14 : vector<1x32x32xbf16> to vector<32x32xbf16>
    %c0_11 = arith.constant 0 : index
    %c64 = arith.constant 64 : index
    %c0_12 = arith.constant 0 : index
    %16 = vector.load %arg3[%c0_11, %c64, %c0_12] : memref<2x224x96xbf16, #tpu.memory_space<vmem>>, vector<1x32x96xbf16>
    %17 = vector.shape_cast %16 : vector<1x32x96xbf16> to vector<32x96xbf16>
    %c0_13 = arith.constant 0 : index
    %c96 = arith.constant 96 : index
    %c0_14 = arith.constant 0 : index
    %18 = vector.load %arg3[%c0_13, %c96, %c0_14] : memref<2x224x96xbf16, #tpu.memory_space<vmem>>, vector<1x32x32xbf16>
    %19 = vector.shape_cast %18 : vector<1x32x32xbf16> to vector<32x32xbf16>
    %c0_15 = arith.constant 0 : index
    %c128 = arith.constant 128 : index
    %c0_16 = arith.constant 0 : index
    %20 = vector.load %arg3[%c0_15, %c128, %c0_16] : memref<2x224x96xbf16, #tpu.memory_space<vmem>>, vector<1x32x64xbf16>
    %21 = vector.shape_cast %20 : vector<1x32x64xbf16> to vector<32x64xbf16>
    %c0_17 = arith.constant 0 : index
    %c160 = arith.constant 160 : index
    %c0_18 = arith.constant 0 : index
    %22 = vector.load %arg3[%c0_17, %c160, %c0_18] : memref<2x224x96xbf16, #tpu.memory_space<vmem>>, vector<1x64x32xbf16>
    %23 = vector.shape_cast %22 : vector<1x64x32xbf16> to vector<64x32xbf16>
    %cst = arith.constant dense<0.000000e+00> : vector<16xf32>
    %24 = vector.multi_reduction <add>, %1, %cst [1] : vector<16x32xf32> to vector<16xf32>
    %25 = vector.shape_cast %24 : vector<16xf32> to vector<16x1xf32>
    %cst_19 = arith.constant 3.200000e+01 : f32
    %26 = vector.broadcast %cst_19 : f32 to vector<16x1xf32>
    %27 = arith.divf %25, %26 : vector<16x1xf32>
    %28 = vector.broadcast %27 : vector<16x1xf32> to vector<16x32xf32>
    %29 = arith.subf %1, %28 : vector<16x32xf32>
    %30 = arith.mulf %29, %29 : vector<16x32xf32>
    %cst_20 = arith.constant dense<0.000000e+00> : vector<16xf32>
    %31 = vector.multi_reduction <add>, %30, %cst_20 [1] : vector<16x32xf32> to vector<16xf32>
    %32 = vector.shape_cast %31 : vector<16xf32> to vector<16x1xf32>
    %cst_21 = arith.constant 3.200000e+01 : f32
    %33 = vector.broadcast %cst_21 : f32 to vector<16x1xf32>
    %34 = arith.divf %32, %33 : vector<16x1xf32>
    %35 = vector.broadcast %27 : vector<16x1xf32> to vector<16x32xf32>
    %36 = arith.subf %1, %35 : vector<16x32xf32>
    %cst_22 = arith.constant 9.99999974E-6 : f32
    %37 = vector.broadcast %cst_22 : f32 to vector<16x1xf32>
    %38 = arith.addf %34, %37 : vector<16x1xf32>
    %39 = math.rsqrt %38 : vector<16x1xf32>
    %40 = vector.broadcast %39 : vector<16x1xf32> to vector<16x32xf32>
    %41 = arith.mulf %36, %40 : vector<16x32xf32>
    %42 = vector.broadcast %4 : vector<1x32xf32> to vector<16x32xf32>
    %43 = arith.mulf %41, %42 : vector<16x32xf32>
    %44 = vector.broadcast %5 : vector<1x32xf32> to vector<16x32xf32>
    %45 = arith.addf %43, %44 : vector<16x32xf32>
    %46 = arith.truncf %45 : vector<16x32xf32> to vector<16x32xbf16>
    %cst_23 = arith.constant dense<0.000000e+00> : vector<16x96xf32>
    %47 = tpu.matmul %46, %13, %cst_23 {dimension_numbers = #tpu.dot_dimension_numbers<[1], [0], [0], [1], [0, 0, 1, 1], [], []>} : vector<16x32xbf16>, vector<32x96xbf16>, vector<16x96xf32> -> vector<16x96xf32>
    %48 = vector.broadcast %6 : vector<1x96xf32> to vector<16x96xf32>
    %49 = arith.addf %47, %48 : vector<16x96xf32>
    %cst_24 = arith.constant dense<0.000000e+00> : vector<16x32xf32>
    %50 = tpu.matmul %46, %15, %cst_24 {dimension_numbers = #tpu.dot_dimension_numbers<[1], [0], [0], [1], [0, 0, 1, 1], [], []>} : vector<16x32xbf16>, vector<32x32xbf16>, vector<16x32xf32> -> vector<16x32xf32>
    %51 = arith.truncf %50 : vector<16x32xf32> to vector<16x32xbf16>
    %cst_25 = arith.constant dense<0.000000e+00> : vector<16x96xf32>
    %52 = tpu.matmul %51, %17, %cst_25 {dimension_numbers = #tpu.dot_dimension_numbers<[1], [0], [0], [1], [0, 0, 1, 1], [], []>} : vector<16x32xbf16>, vector<32x96xbf16>, vector<16x96xf32> -> vector<16x96xf32>
    %53 = arith.addf %49, %52 : vector<16x96xf32>
    %54 = vector.extract_strided_slice %53 {offsets = [0, 0], sizes = [16, 32], strides = [1, 1]} : vector<16x96xf32> to vector<16x32xf32>
    %55 = vector.extract_strided_slice %53 {offsets = [0, 32], sizes = [16, 32], strides = [1, 1]} : vector<16x96xf32> to vector<16x32xf32>
    %56 = vector.extract_strided_slice %53 {offsets = [0, 64], sizes = [16, 32], strides = [1, 1]} : vector<16x96xf32> to vector<16x32xf32>
    %57 = vector.extract_strided_slice %54 {offsets = [0, 0], sizes = [8, 32], strides = [1, 1]} : vector<16x32xf32> to vector<8x32xf32>
    %58 = vector.extract_strided_slice %55 {offsets = [0, 0], sizes = [8, 32], strides = [1, 1]} : vector<16x32xf32> to vector<8x32xf32>
    %59 = vector.extract_strided_slice %56 {offsets = [0, 0], sizes = [8, 32], strides = [1, 1]} : vector<16x32xf32> to vector<8x32xf32>
    %60 = tpu.concatenate %57, %57, %57, %57 in 0 : vector<8x32xf32>, vector<8x32xf32>, vector<8x32xf32>, vector<8x32xf32> -> vector<32x32xf32>
    %61 = arith.mulf %60, %0 : vector<32x32xf32>
    %cst_26 = arith.constant dense<0.000000e+00> : vector<32x8xf32>
    %62 = tpu.matmul %61, %58, %cst_26 {dimension_numbers = #tpu.dot_dimension_numbers<[1], [1], [0], [0], [0, 0, 1, 0], [], []>} : vector<32x32xf32>, vector<8x32xf32>, vector<32x8xf32> -> vector<32x8xf32>
    %cst_27 = arith.constant dense<0xFF800000> : vector<32xf32>
    %63 = vector.multi_reduction <maximumf>, %62, %cst_27 [1] : vector<32x8xf32> to vector<32xf32>
    %64 = vector.shape_cast %63 : vector<32xf32> to vector<32x1xf32>
    %65 = vector.broadcast %64 : vector<32x1xf32> to vector<32x8xf32>
    %66 = arith.subf %62, %65 : vector<32x8xf32>
    %67 = math.exp %66 : vector<32x8xf32>
    %cst_28 = arith.constant dense<0.000000e+00> : vector<32xf32>
    %68 = vector.multi_reduction <add>, %67, %cst_28 [1] : vector<32x8xf32> to vector<32xf32>
    %69 = vector.shape_cast %68 : vector<32xf32> to vector<32x1xf32>
    %70 = vector.broadcast %69 : vector<32x1xf32> to vector<32x8xf32>
    %71 = arith.divf %67, %70 : vector<32x8xf32>
    %cst_29 = arith.constant dense<0.000000e+00> : vector<32x32xf32>
    %72 = tpu.matmul %71, %59, %cst_29 {dimension_numbers = #tpu.dot_dimension_numbers<[1], [0], [0], [1], [0, 0, 1, 1], [], []>} : vector<32x8xf32>, vector<8x32xf32>, vector<32x32xf32> -> vector<32x32xf32>
    %73 = arith.mulf %72, %0 : vector<32x32xf32>
    %74 = vector.extract_strided_slice %73 {offsets = [0, 0], sizes = [8, 32], strides = [1, 1]} : vector<32x32xf32> to vector<8x32xf32>
    %75 = vector.extract_strided_slice %73 {offsets = [8, 0], sizes = [8, 32], strides = [1, 1]} : vector<32x32xf32> to vector<8x32xf32>
    %76 = arith.addf %74, %75 : vector<8x32xf32>
    %77 = vector.extract_strided_slice %73 {offsets = [16, 0], sizes = [8, 32], strides = [1, 1]} : vector<32x32xf32> to vector<8x32xf32>
    %78 = arith.addf %76, %77 : vector<8x32xf32>
    %79 = vector.extract_strided_slice %73 {offsets = [24, 0], sizes = [8, 32], strides = [1, 1]} : vector<32x32xf32> to vector<8x32xf32>
    %80 = arith.addf %78, %79 : vector<8x32xf32>
    %81 = vector.extract_strided_slice %54 {offsets = [8, 0], sizes = [8, 32], strides = [1, 1]} : vector<16x32xf32> to vector<8x32xf32>
    %82 = vector.extract_strided_slice %55 {offsets = [8, 0], sizes = [8, 32], strides = [1, 1]} : vector<16x32xf32> to vector<8x32xf32>
    %83 = vector.extract_strided_slice %56 {offsets = [8, 0], sizes = [8, 32], strides = [1, 1]} : vector<16x32xf32> to vector<8x32xf32>
    %84 = tpu.concatenate %81, %81, %81, %81 in 0 : vector<8x32xf32>, vector<8x32xf32>, vector<8x32xf32>, vector<8x32xf32> -> vector<32x32xf32>
    %85 = arith.mulf %84, %0 : vector<32x32xf32>
    %cst_30 = arith.constant dense<0.000000e+00> : vector<32x8xf32>
    %86 = tpu.matmul %85, %82, %cst_30 {dimension_numbers = #tpu.dot_dimension_numbers<[1], [1], [0], [0], [0, 0, 1, 0], [], []>} : vector<32x32xf32>, vector<8x32xf32>, vector<32x8xf32> -> vector<32x8xf32>
    %cst_31 = arith.constant dense<0xFF800000> : vector<32xf32>
    %87 = vector.multi_reduction <maximumf>, %86, %cst_31 [1] : vector<32x8xf32> to vector<32xf32>
    %88 = vector.shape_cast %87 : vector<32xf32> to vector<32x1xf32>
    %89 = vector.broadcast %88 : vector<32x1xf32> to vector<32x8xf32>
    %90 = arith.subf %86, %89 : vector<32x8xf32>
    %91 = math.exp %90 : vector<32x8xf32>
    %cst_32 = arith.constant dense<0.000000e+00> : vector<32xf32>
    %92 = vector.multi_reduction <add>, %91, %cst_32 [1] : vector<32x8xf32> to vector<32xf32>
    %93 = vector.shape_cast %92 : vector<32xf32> to vector<32x1xf32>
    %94 = vector.broadcast %93 : vector<32x1xf32> to vector<32x8xf32>
    %95 = arith.divf %91, %94 : vector<32x8xf32>
    %cst_33 = arith.constant dense<0.000000e+00> : vector<32x32xf32>
    %96 = tpu.matmul %95, %83, %cst_33 {dimension_numbers = #tpu.dot_dimension_numbers<[1], [0], [0], [1], [0, 0, 1, 1], [], []>} : vector<32x8xf32>, vector<8x32xf32>, vector<32x32xf32> -> vector<32x32xf32>
    %97 = arith.mulf %96, %0 : vector<32x32xf32>
    %98 = vector.extract_strided_slice %97 {offsets = [0, 0], sizes = [8, 32], strides = [1, 1]} : vector<32x32xf32> to vector<8x32xf32>
    %99 = vector.extract_strided_slice %97 {offsets = [8, 0], sizes = [8, 32], strides = [1, 1]} : vector<32x32xf32> to vector<8x32xf32>
    %100 = arith.addf %98, %99 : vector<8x32xf32>
    %101 = vector.extract_strided_slice %97 {offsets = [16, 0], sizes = [8, 32], strides = [1, 1]} : vector<32x32xf32> to vector<8x32xf32>
    %102 = arith.addf %100, %101 : vector<8x32xf32>
    %103 = vector.extract_strided_slice %97 {offsets = [24, 0], sizes = [8, 32], strides = [1, 1]} : vector<32x32xf32> to vector<8x32xf32>
    %104 = arith.addf %102, %103 : vector<8x32xf32>
    %105 = tpu.concatenate %80, %104 in 0 : vector<8x32xf32>, vector<8x32xf32> -> vector<16x32xf32>
    %106 = arith.truncf %105 : vector<16x32xf32> to vector<16x32xbf16>
    %cst_34 = arith.constant dense<0.000000e+00> : vector<16x32xf32>
    %107 = tpu.matmul %106, %19, %cst_34 {dimension_numbers = #tpu.dot_dimension_numbers<[1], [0], [0], [1], [0, 0, 1, 1], [], []>} : vector<16x32xbf16>, vector<32x32xbf16>, vector<16x32xf32> -> vector<16x32xf32>
    %108 = arith.addf %1, %107 : vector<16x32xf32>
    %109 = vector.broadcast %7 : vector<1x32xf32> to vector<16x32xf32>
    %110 = arith.addf %108, %109 : vector<16x32xf32>
    %cst_35 = arith.constant dense<0.000000e+00> : vector<16xf32>
    %111 = vector.multi_reduction <add>, %110, %cst_35 [1] : vector<16x32xf32> to vector<16xf32>
    %112 = vector.shape_cast %111 : vector<16xf32> to vector<16x1xf32>
    %cst_36 = arith.constant 3.200000e+01 : f32
    %113 = vector.broadcast %cst_36 : f32 to vector<16x1xf32>
    %114 = arith.divf %112, %113 : vector<16x1xf32>
    %115 = vector.broadcast %114 : vector<16x1xf32> to vector<16x32xf32>
    %116 = arith.subf %110, %115 : vector<16x32xf32>
    %117 = arith.mulf %116, %116 : vector<16x32xf32>
    %cst_37 = arith.constant dense<0.000000e+00> : vector<16xf32>
    %118 = vector.multi_reduction <add>, %117, %cst_37 [1] : vector<16x32xf32> to vector<16xf32>
    %119 = vector.shape_cast %118 : vector<16xf32> to vector<16x1xf32>
    %cst_38 = arith.constant 3.200000e+01 : f32
    %120 = vector.broadcast %cst_38 : f32 to vector<16x1xf32>
    %121 = arith.divf %119, %120 : vector<16x1xf32>
    %122 = vector.broadcast %114 : vector<16x1xf32> to vector<16x32xf32>
    %123 = arith.subf %110, %122 : vector<16x32xf32>
    %cst_39 = arith.constant 9.99999974E-6 : f32
    %124 = vector.broadcast %cst_39 : f32 to vector<16x1xf32>
    %125 = arith.addf %121, %124 : vector<16x1xf32>
    %126 = math.rsqrt %125 : vector<16x1xf32>
    %127 = vector.broadcast %126 : vector<16x1xf32> to vector<16x32xf32>
    %128 = arith.mulf %123, %127 : vector<16x32xf32>
    %129 = vector.broadcast %8 : vector<1x32xf32> to vector<16x32xf32>
    %130 = arith.mulf %128, %129 : vector<16x32xf32>
    %131 = vector.broadcast %9 : vector<1x32xf32> to vector<16x32xf32>
    %132 = arith.addf %130, %131 : vector<16x32xf32>
    %133 = arith.truncf %132 : vector<16x32xf32> to vector<16x32xbf16>
    %cst_40 = arith.constant dense<0.000000e+00> : vector<16x64xf32>
    %134 = tpu.matmul %133, %21, %cst_40 {dimension_numbers = #tpu.dot_dimension_numbers<[1], [0], [0], [1], [0, 0, 1, 1], [], []>} : vector<16x32xbf16>, vector<32x64xbf16>, vector<16x64xf32> -> vector<16x64xf32>
    %135 = vector.broadcast %10 : vector<1x64xf32> to vector<16x64xf32>
    %136 = arith.addf %134, %135 : vector<16x64xf32>
    %137 = arith.mulf %136, %136 : vector<16x64xf32>
    %138 = arith.mulf %136, %137 : vector<16x64xf32>
    %cst_41 = arith.constant 4.471500e-02 : f32
    %139 = vector.broadcast %cst_41 : f32 to vector<16x64xf32>
    %140 = arith.mulf %139, %138 : vector<16x64xf32>
    %141 = arith.addf %136, %140 : vector<16x64xf32>
    %cst_42 = arith.constant 0.797884583 : f32
    %142 = vector.broadcast %cst_42 : f32 to vector<16x64xf32>
    %143 = arith.mulf %142, %141 : vector<16x64xf32>
    %144 = math.tanh %143 : vector<16x64xf32>
    %cst_43 = arith.constant 1.000000e+00 : f32
    %145 = vector.broadcast %cst_43 : f32 to vector<16x64xf32>
    %146 = arith.addf %145, %144 : vector<16x64xf32>
    %cst_44 = arith.constant 5.000000e-01 : f32
    %147 = vector.broadcast %cst_44 : f32 to vector<16x64xf32>
    %148 = arith.mulf %147, %146 : vector<16x64xf32>
    %149 = arith.mulf %136, %148 : vector<16x64xf32>
    %150 = arith.truncf %149 : vector<16x64xf32> to vector<16x64xbf16>
    %cst_45 = arith.constant dense<0.000000e+00> : vector<16x32xf32>
    %151 = tpu.matmul %150, %23, %cst_45 {dimension_numbers = #tpu.dot_dimension_numbers<[1], [0], [0], [1], [0, 0, 1, 1], [], []>} : vector<16x64xbf16>, vector<64x32xbf16>, vector<16x32xf32> -> vector<16x32xf32>
    %152 = arith.addf %110, %151 : vector<16x32xf32>
    %153 = vector.broadcast %11 : vector<1x32xf32> to vector<16x32xf32>
    %154 = arith.addf %152, %153 : vector<16x32xf32>
    %c1 = arith.constant 1 : index
    %c0_46 = arith.constant 0 : index
    %c0_47 = arith.constant 0 : index
    %155 = vector.load %arg2[%c1, %c0_46, %c0_47] : memref<2x8x96xf32, #tpu.memory_space<vmem>>, vector<1x8x96xf32>
    %156 = vector.shape_cast %155 : vector<1x8x96xf32> to vector<8x96xf32>
    %157 = vector.extract_strided_slice %156 {offsets = [0, 0], sizes = [1, 32], strides = [1, 1]} : vector<8x96xf32> to vector<1x32xf32>
    %158 = vector.extract_strided_slice %156 {offsets = [1, 0], sizes = [1, 32], strides = [1, 1]} : vector<8x96xf32> to vector<1x32xf32>
    %159 = vector.extract_strided_slice %156 {offsets = [2, 0], sizes = [1, 96], strides = [1, 1]} : vector<8x96xf32> to vector<1x96xf32>
    %160 = vector.extract_strided_slice %156 {offsets = [3, 0], sizes = [1, 32], strides = [1, 1]} : vector<8x96xf32> to vector<1x32xf32>
    %161 = vector.extract_strided_slice %156 {offsets = [4, 0], sizes = [1, 32], strides = [1, 1]} : vector<8x96xf32> to vector<1x32xf32>
    %162 = vector.extract_strided_slice %156 {offsets = [5, 0], sizes = [1, 32], strides = [1, 1]} : vector<8x96xf32> to vector<1x32xf32>
    %163 = vector.extract_strided_slice %156 {offsets = [6, 0], sizes = [1, 64], strides = [1, 1]} : vector<8x96xf32> to vector<1x64xf32>
    %164 = vector.extract_strided_slice %156 {offsets = [7, 0], sizes = [1, 32], strides = [1, 1]} : vector<8x96xf32> to vector<1x32xf32>
    %c1_48 = arith.constant 1 : index
    %c0_49 = arith.constant 0 : index
    %c0_50 = arith.constant 0 : index
    %165 = vector.load %arg3[%c1_48, %c0_49, %c0_50] : memref<2x224x96xbf16, #tpu.memory_space<vmem>>, vector<1x32x96xbf16>
    %166 = vector.shape_cast %165 : vector<1x32x96xbf16> to vector<32x96xbf16>
    %c1_51 = arith.constant 1 : index
    %c32_52 = arith.constant 32 : index
    %c0_53 = arith.constant 0 : index
    %167 = vector.load %arg3[%c1_51, %c32_52, %c0_53] : memref<2x224x96xbf16, #tpu.memory_space<vmem>>, vector<1x32x32xbf16>
    %168 = vector.shape_cast %167 : vector<1x32x32xbf16> to vector<32x32xbf16>
    %c1_54 = arith.constant 1 : index
    %c64_55 = arith.constant 64 : index
    %c0_56 = arith.constant 0 : index
    %169 = vector.load %arg3[%c1_54, %c64_55, %c0_56] : memref<2x224x96xbf16, #tpu.memory_space<vmem>>, vector<1x32x96xbf16>
    %170 = vector.shape_cast %169 : vector<1x32x96xbf16> to vector<32x96xbf16>
    %c1_57 = arith.constant 1 : index
    %c96_58 = arith.constant 96 : index
    %c0_59 = arith.constant 0 : index
    %171 = vector.load %arg3[%c1_57, %c96_58, %c0_59] : memref<2x224x96xbf16, #tpu.memory_space<vmem>>, vector<1x32x32xbf16>
    %172 = vector.shape_cast %171 : vector<1x32x32xbf16> to vector<32x32xbf16>
    %c1_60 = arith.constant 1 : index
    %c128_61 = arith.constant 128 : index
    %c0_62 = arith.constant 0 : index
    %173 = vector.load %arg3[%c1_60, %c128_61, %c0_62] : memref<2x224x96xbf16, #tpu.memory_space<vmem>>, vector<1x32x64xbf16>
    %174 = vector.shape_cast %173 : vector<1x32x64xbf16> to vector<32x64xbf16>
    %c1_63 = arith.constant 1 : index
    %c160_64 = arith.constant 160 : index
    %c0_65 = arith.constant 0 : index
    %175 = vector.load %arg3[%c1_63, %c160_64, %c0_65] : memref<2x224x96xbf16, #tpu.memory_space<vmem>>, vector<1x64x32xbf16>
    %176 = vector.shape_cast %175 : vector<1x64x32xbf16> to vector<64x32xbf16>
    %cst_66 = arith.constant dense<0.000000e+00> : vector<16xf32>
    %177 = vector.multi_reduction <add>, %154, %cst_66 [1] : vector<16x32xf32> to vector<16xf32>
    %178 = vector.shape_cast %177 : vector<16xf32> to vector<16x1xf32>
    %cst_67 = arith.constant 3.200000e+01 : f32
    %179 = vector.broadcast %cst_67 : f32 to vector<16x1xf32>
    %180 = arith.divf %178, %179 : vector<16x1xf32>
    %181 = vector.broadcast %180 : vector<16x1xf32> to vector<16x32xf32>
    %182 = arith.subf %154, %181 : vector<16x32xf32>
    %183 = arith.mulf %182, %182 : vector<16x32xf32>
    %cst_68 = arith.constant dense<0.000000e+00> : vector<16xf32>
    %184 = vector.multi_reduction <add>, %183, %cst_68 [1] : vector<16x32xf32> to vector<16xf32>
    %185 = vector.shape_cast %184 : vector<16xf32> to vector<16x1xf32>
    %cst_69 = arith.constant 3.200000e+01 : f32
    %186 = vector.broadcast %cst_69 : f32 to vector<16x1xf32>
    %187 = arith.divf %185, %186 : vector<16x1xf32>
    %188 = vector.broadcast %180 : vector<16x1xf32> to vector<16x32xf32>
    %189 = arith.subf %154, %188 : vector<16x32xf32>
    %cst_70 = arith.constant 9.99999974E-6 : f32
    %190 = vector.broadcast %cst_70 : f32 to vector<16x1xf32>
    %191 = arith.addf %187, %190 : vector<16x1xf32>
    %192 = math.rsqrt %191 : vector<16x1xf32>
    %193 = vector.broadcast %192 : vector<16x1xf32> to vector<16x32xf32>
    %194 = arith.mulf %189, %193 : vector<16x32xf32>
    %195 = vector.broadcast %157 : vector<1x32xf32> to vector<16x32xf32>
    %196 = arith.mulf %194, %195 : vector<16x32xf32>
    %197 = vector.broadcast %158 : vector<1x32xf32> to vector<16x32xf32>
    %198 = arith.addf %196, %197 : vector<16x32xf32>
    %199 = arith.truncf %198 : vector<16x32xf32> to vector<16x32xbf16>
    %cst_71 = arith.constant dense<0.000000e+00> : vector<16x96xf32>
    %200 = tpu.matmul %199, %166, %cst_71 {dimension_numbers = #tpu.dot_dimension_numbers<[1], [0], [0], [1], [0, 0, 1, 1], [], []>} : vector<16x32xbf16>, vector<32x96xbf16>, vector<16x96xf32> -> vector<16x96xf32>
    %201 = vector.broadcast %159 : vector<1x96xf32> to vector<16x96xf32>
    %202 = arith.addf %200, %201 : vector<16x96xf32>
    %cst_72 = arith.constant dense<0.000000e+00> : vector<16x32xf32>
    %203 = tpu.matmul %199, %168, %cst_72 {dimension_numbers = #tpu.dot_dimension_numbers<[1], [0], [0], [1], [0, 0, 1, 1], [], []>} : vector<16x32xbf16>, vector<32x32xbf16>, vector<16x32xf32> -> vector<16x32xf32>
    %204 = arith.truncf %203 : vector<16x32xf32> to vector<16x32xbf16>
    %cst_73 = arith.constant dense<0.000000e+00> : vector<16x96xf32>
    %205 = tpu.matmul %204, %170, %cst_73 {dimension_numbers = #tpu.dot_dimension_numbers<[1], [0], [0], [1], [0, 0, 1, 1], [], []>} : vector<16x32xbf16>, vector<32x96xbf16>, vector<16x96xf32> -> vector<16x96xf32>
    %206 = arith.addf %202, %205 : vector<16x96xf32>
    %207 = vector.extract_strided_slice %206 {offsets = [0, 0], sizes = [16, 32], strides = [1, 1]} : vector<16x96xf32> to vector<16x32xf32>
    %208 = vector.extract_strided_slice %206 {offsets = [0, 32], sizes = [16, 32], strides = [1, 1]} : vector<16x96xf32> to vector<16x32xf32>
    %209 = vector.extract_strided_slice %206 {offsets = [0, 64], sizes = [16, 32], strides = [1, 1]} : vector<16x96xf32> to vector<16x32xf32>
    %210 = vector.extract_strided_slice %207 {offsets = [0, 0], sizes = [8, 32], strides = [1, 1]} : vector<16x32xf32> to vector<8x32xf32>
    %211 = vector.extract_strided_slice %208 {offsets = [0, 0], sizes = [8, 32], strides = [1, 1]} : vector<16x32xf32> to vector<8x32xf32>
    %212 = vector.extract_strided_slice %209 {offsets = [0, 0], sizes = [8, 32], strides = [1, 1]} : vector<16x32xf32> to vector<8x32xf32>
    %213 = tpu.concatenate %210, %210, %210, %210 in 0 : vector<8x32xf32>, vector<8x32xf32>, vector<8x32xf32>, vector<8x32xf32> -> vector<32x32xf32>
    %214 = arith.mulf %213, %0 : vector<32x32xf32>
    %cst_74 = arith.constant dense<0.000000e+00> : vector<32x8xf32>
    %215 = tpu.matmul %214, %211, %cst_74 {dimension_numbers = #tpu.dot_dimension_numbers<[1], [1], [0], [0], [0, 0, 1, 0], [], []>} : vector<32x32xf32>, vector<8x32xf32>, vector<32x8xf32> -> vector<32x8xf32>
    %cst_75 = arith.constant dense<0xFF800000> : vector<32xf32>
    %216 = vector.multi_reduction <maximumf>, %215, %cst_75 [1] : vector<32x8xf32> to vector<32xf32>
    %217 = vector.shape_cast %216 : vector<32xf32> to vector<32x1xf32>
    %218 = vector.broadcast %217 : vector<32x1xf32> to vector<32x8xf32>
    %219 = arith.subf %215, %218 : vector<32x8xf32>
    %220 = math.exp %219 : vector<32x8xf32>
    %cst_76 = arith.constant dense<0.000000e+00> : vector<32xf32>
    %221 = vector.multi_reduction <add>, %220, %cst_76 [1] : vector<32x8xf32> to vector<32xf32>
    %222 = vector.shape_cast %221 : vector<32xf32> to vector<32x1xf32>
    %223 = vector.broadcast %222 : vector<32x1xf32> to vector<32x8xf32>
    %224 = arith.divf %220, %223 : vector<32x8xf32>
    %cst_77 = arith.constant dense<0.000000e+00> : vector<32x32xf32>
    %225 = tpu.matmul %224, %212, %cst_77 {dimension_numbers = #tpu.dot_dimension_numbers<[1], [0], [0], [1], [0, 0, 1, 1], [], []>} : vector<32x8xf32>, vector<8x32xf32>, vector<32x32xf32> -> vector<32x32xf32>
    %226 = arith.mulf %225, %0 : vector<32x32xf32>
    %227 = vector.extract_strided_slice %226 {offsets = [0, 0], sizes = [8, 32], strides = [1, 1]} : vector<32x32xf32> to vector<8x32xf32>
    %228 = vector.extract_strided_slice %226 {offsets = [8, 0], sizes = [8, 32], strides = [1, 1]} : vector<32x32xf32> to vector<8x32xf32>
    %229 = arith.addf %227, %228 : vector<8x32xf32>
    %230 = vector.extract_strided_slice %226 {offsets = [16, 0], sizes = [8, 32], strides = [1, 1]} : vector<32x32xf32> to vector<8x32xf32>
    %231 = arith.addf %229, %230 : vector<8x32xf32>
    %232 = vector.extract_strided_slice %226 {offsets = [24, 0], sizes = [8, 32], strides = [1, 1]} : vector<32x32xf32> to vector<8x32xf32>
    %233 = arith.addf %231, %232 : vector<8x32xf32>
    %234 = vector.extract_strided_slice %207 {offsets = [8, 0], sizes = [8, 32], strides = [1, 1]} : vector<16x32xf32> to vector<8x32xf32>
    %235 = vector.extract_strided_slice %208 {offsets = [8, 0], sizes = [8, 32], strides = [1, 1]} : vector<16x32xf32> to vector<8x32xf32>
    %236 = vector.extract_strided_slice %209 {offsets = [8, 0], sizes = [8, 32], strides = [1, 1]} : vector<16x32xf32> to vector<8x32xf32>
    %237 = tpu.concatenate %234, %234, %234, %234 in 0 : vector<8x32xf32>, vector<8x32xf32>, vector<8x32xf32>, vector<8x32xf32> -> vector<32x32xf32>
    %238 = arith.mulf %237, %0 : vector<32x32xf32>
    %cst_78 = arith.constant dense<0.000000e+00> : vector<32x8xf32>
    %239 = tpu.matmul %238, %235, %cst_78 {dimension_numbers = #tpu.dot_dimension_numbers<[1], [1], [0], [0], [0, 0, 1, 0], [], []>} : vector<32x32xf32>, vector<8x32xf32>, vector<32x8xf32> -> vector<32x8xf32>
    %cst_79 = arith.constant dense<0xFF800000> : vector<32xf32>
    %240 = vector.multi_reduction <maximumf>, %239, %cst_79 [1] : vector<32x8xf32> to vector<32xf32>
    %241 = vector.shape_cast %240 : vector<32xf32> to vector<32x1xf32>
    %242 = vector.broadcast %241 : vector<32x1xf32> to vector<32x8xf32>
    %243 = arith.subf %239, %242 : vector<32x8xf32>
    %244 = math.exp %243 : vector<32x8xf32>
    %cst_80 = arith.constant dense<0.000000e+00> : vector<32xf32>
    %245 = vector.multi_reduction <add>, %244, %cst_80 [1] : vector<32x8xf32> to vector<32xf32>
    %246 = vector.shape_cast %245 : vector<32xf32> to vector<32x1xf32>
    %247 = vector.broadcast %246 : vector<32x1xf32> to vector<32x8xf32>
    %248 = arith.divf %244, %247 : vector<32x8xf32>
    %cst_81 = arith.constant dense<0.000000e+00> : vector<32x32xf32>
    %249 = tpu.matmul %248, %236, %cst_81 {dimension_numbers = #tpu.dot_dimension_numbers<[1], [0], [0], [1], [0, 0, 1, 1], [], []>} : vector<32x8xf32>, vector<8x32xf32>, vector<32x32xf32> -> vector<32x32xf32>
    %250 = arith.mulf %249, %0 : vector<32x32xf32>
    %251 = vector.extract_strided_slice %250 {offsets = [0, 0], sizes = [8, 32], strides = [1, 1]} : vector<32x32xf32> to vector<8x32xf32>
    %252 = vector.extract_strided_slice %250 {offsets = [8, 0], sizes = [8, 32], strides = [1, 1]} : vector<32x32xf32> to vector<8x32xf32>
    %253 = arith.addf %251, %252 : vector<8x32xf32>
    %254 = vector.extract_strided_slice %250 {offsets = [16, 0], sizes = [8, 32], strides = [1, 1]} : vector<32x32xf32> to vector<8x32xf32>
    %255 = arith.addf %253, %254 : vector<8x32xf32>
    %256 = vector.extract_strided_slice %250 {offsets = [24, 0], sizes = [8, 32], strides = [1, 1]} : vector<32x32xf32> to vector<8x32xf32>
    %257 = arith.addf %255, %256 : vector<8x32xf32>
    %258 = tpu.concatenate %233, %257 in 0 : vector<8x32xf32>, vector<8x32xf32> -> vector<16x32xf32>
    %259 = arith.truncf %258 : vector<16x32xf32> to vector<16x32xbf16>
    %cst_82 = arith.constant dense<0.000000e+00> : vector<16x32xf32>
    %260 = tpu.matmul %259, %172, %cst_82 {dimension_numbers = #tpu.dot_dimension_numbers<[1], [0], [0], [1], [0, 0, 1, 1], [], []>} : vector<16x32xbf16>, vector<32x32xbf16>, vector<16x32xf32> -> vector<16x32xf32>
    %261 = arith.addf %154, %260 : vector<16x32xf32>
    %262 = vector.broadcast %160 : vector<1x32xf32> to vector<16x32xf32>
    %263 = arith.addf %261, %262 : vector<16x32xf32>
    %cst_83 = arith.constant dense<0.000000e+00> : vector<16xf32>
    %264 = vector.multi_reduction <add>, %263, %cst_83 [1] : vector<16x32xf32> to vector<16xf32>
    %265 = vector.shape_cast %264 : vector<16xf32> to vector<16x1xf32>
    %cst_84 = arith.constant 3.200000e+01 : f32
    %266 = vector.broadcast %cst_84 : f32 to vector<16x1xf32>
    %267 = arith.divf %265, %266 : vector<16x1xf32>
    %268 = vector.broadcast %267 : vector<16x1xf32> to vector<16x32xf32>
    %269 = arith.subf %263, %268 : vector<16x32xf32>
    %270 = arith.mulf %269, %269 : vector<16x32xf32>
    %cst_85 = arith.constant dense<0.000000e+00> : vector<16xf32>
    %271 = vector.multi_reduction <add>, %270, %cst_85 [1] : vector<16x32xf32> to vector<16xf32>
    %272 = vector.shape_cast %271 : vector<16xf32> to vector<16x1xf32>
    %cst_86 = arith.constant 3.200000e+01 : f32
    %273 = vector.broadcast %cst_86 : f32 to vector<16x1xf32>
    %274 = arith.divf %272, %273 : vector<16x1xf32>
    %275 = vector.broadcast %267 : vector<16x1xf32> to vector<16x32xf32>
    %276 = arith.subf %263, %275 : vector<16x32xf32>
    %cst_87 = arith.constant 9.99999974E-6 : f32
    %277 = vector.broadcast %cst_87 : f32 to vector<16x1xf32>
    %278 = arith.addf %274, %277 : vector<16x1xf32>
    %279 = math.rsqrt %278 : vector<16x1xf32>
    %280 = vector.broadcast %279 : vector<16x1xf32> to vector<16x32xf32>
    %281 = arith.mulf %276, %280 : vector<16x32xf32>
    %282 = vector.broadcast %161 : vector<1x32xf32> to vector<16x32xf32>
    %283 = arith.mulf %281, %282 : vector<16x32xf32>
    %284 = vector.broadcast %162 : vector<1x32xf32> to vector<16x32xf32>
    %285 = arith.addf %283, %284 : vector<16x32xf32>
    %286 = arith.truncf %285 : vector<16x32xf32> to vector<16x32xbf16>
    %cst_88 = arith.constant dense<0.000000e+00> : vector<16x64xf32>
    %287 = tpu.matmul %286, %174, %cst_88 {dimension_numbers = #tpu.dot_dimension_numbers<[1], [0], [0], [1], [0, 0, 1, 1], [], []>} : vector<16x32xbf16>, vector<32x64xbf16>, vector<16x64xf32> -> vector<16x64xf32>
    %288 = vector.broadcast %163 : vector<1x64xf32> to vector<16x64xf32>
    %289 = arith.addf %287, %288 : vector<16x64xf32>
    %290 = arith.mulf %289, %289 : vector<16x64xf32>
    %291 = arith.mulf %289, %290 : vector<16x64xf32>
    %cst_89 = arith.constant 4.471500e-02 : f32
    %292 = vector.broadcast %cst_89 : f32 to vector<16x64xf32>
    %293 = arith.mulf %292, %291 : vector<16x64xf32>
    %294 = arith.addf %289, %293 : vector<16x64xf32>
    %cst_90 = arith.constant 0.797884583 : f32
    %295 = vector.broadcast %cst_90 : f32 to vector<16x64xf32>
    %296 = arith.mulf %295, %294 : vector<16x64xf32>
    %297 = math.tanh %296 : vector<16x64xf32>
    %cst_91 = arith.constant 1.000000e+00 : f32
    %298 = vector.broadcast %cst_91 : f32 to vector<16x64xf32>
    %299 = arith.addf %298, %297 : vector<16x64xf32>
    %cst_92 = arith.constant 5.000000e-01 : f32
    %300 = vector.broadcast %cst_92 : f32 to vector<16x64xf32>
    %301 = arith.mulf %300, %299 : vector<16x64xf32>
    %302 = arith.mulf %289, %301 : vector<16x64xf32>
    %303 = arith.truncf %302 : vector<16x64xf32> to vector<16x64xbf16>
    %cst_93 = arith.constant dense<0.000000e+00> : vector<16x32xf32>
    %304 = tpu.matmul %303, %176, %cst_93 {dimension_numbers = #tpu.dot_dimension_numbers<[1], [0], [0], [1], [0, 0, 1, 1], [], []>} : vector<16x64xbf16>, vector<64x32xbf16>, vector<16x32xf32> -> vector<16x32xf32>
    %305 = arith.addf %263, %304 : vector<16x32xf32>
    %306 = vector.broadcast %164 : vector<1x32xf32> to vector<16x32xf32>
    %307 = arith.addf %305, %306 : vector<16x32xf32>
    %c32_94 = arith.constant 32 : index
    %c0_95 = arith.constant 0 : index
    %308 = vector.load %arg4[%c32_94, %c0_95] : memref<38x128xf32, #tpu.memory_space<vmem>>, vector<1x32xf32>
    %c33 = arith.constant 33 : index
    %c0_96 = arith.constant 0 : index
    %309 = vector.load %arg4[%c33, %c0_96] : memref<38x128xf32, #tpu.memory_space<vmem>>, vector<1x32xf32>
    %cst_97 = arith.constant dense<0.000000e+00> : vector<16xf32>
    %310 = vector.multi_reduction <add>, %307, %cst_97 [1] : vector<16x32xf32> to vector<16xf32>
    %311 = vector.shape_cast %310 : vector<16xf32> to vector<16x1xf32>
    %cst_98 = arith.constant 3.200000e+01 : f32
    %312 = vector.broadcast %cst_98 : f32 to vector<16x1xf32>
    %313 = arith.divf %311, %312 : vector<16x1xf32>
    %314 = vector.broadcast %313 : vector<16x1xf32> to vector<16x32xf32>
    %315 = arith.subf %307, %314 : vector<16x32xf32>
    %316 = arith.mulf %315, %315 : vector<16x32xf32>
    %cst_99 = arith.constant dense<0.000000e+00> : vector<16xf32>
    %317 = vector.multi_reduction <add>, %316, %cst_99 [1] : vector<16x32xf32> to vector<16xf32>
    %318 = vector.shape_cast %317 : vector<16xf32> to vector<16x1xf32>
    %cst_100 = arith.constant 3.200000e+01 : f32
    %319 = vector.broadcast %cst_100 : f32 to vector<16x1xf32>
    %320 = arith.divf %318, %319 : vector<16x1xf32>
    %321 = vector.broadcast %313 : vector<16x1xf32> to vector<16x32xf32>
    %322 = arith.subf %307, %321 : vector<16x32xf32>
    %cst_101 = arith.constant 9.99999974E-6 : f32
    %323 = vector.broadcast %cst_101 : f32 to vector<16x1xf32>
    %324 = arith.addf %320, %323 : vector<16x1xf32>
    %325 = math.rsqrt %324 : vector<16x1xf32>
    %326 = vector.broadcast %325 : vector<16x1xf32> to vector<16x32xf32>
    %327 = arith.mulf %322, %326 : vector<16x32xf32>
    %328 = vector.broadcast %308 : vector<1x32xf32> to vector<16x32xf32>
    %329 = arith.mulf %327, %328 : vector<16x32xf32>
    %330 = vector.broadcast %309 : vector<1x32xf32> to vector<16x32xf32>
    %331 = arith.addf %329, %330 : vector<16x32xf32>
    %c0_102 = arith.constant 0 : index
    %c0_103 = arith.constant 0 : index
    %332 = vector.load %arg6[%c0_102, %c0_103] : memref<16x32xf32, #tpu.memory_space<vmem>>, vector<16x32xf32>
    tpu.vector_store %arg6[%c0_102, %c0_103], %331 {strides = array<i32>} : memref<16x32xf32, #tpu.memory_space<vmem>>, vector<16x32xf32>,
    %c34 = arith.constant 34 : index
    %c0_104 = arith.constant 0 : index
    %333 = vector.load %arg4[%c34, %c0_104] : memref<38x128xf32, #tpu.memory_space<vmem>>, vector<1x32xf32>
    %c35 = arith.constant 35 : index
    %c0_105 = arith.constant 0 : index
    %334 = vector.load %arg4[%c35, %c0_105] : memref<38x128xf32, #tpu.memory_space<vmem>>, vector<1x32xf32>
    %c36 = arith.constant 36 : index
    %c0_106 = arith.constant 0 : index
    %335 = vector.load %arg4[%c36, %c0_106] : memref<38x128xf32, #tpu.memory_space<vmem>>, vector<1x32xf32>
    %c37 = arith.constant 37 : index
    %c0_107 = arith.constant 0 : index
    %336 = vector.load %arg4[%c37, %c0_107] : memref<38x128xf32, #tpu.memory_space<vmem>>, vector<1x128xf32>
    %c0_108 = arith.constant 0 : index
    %c0_109 = arith.constant 0 : index
    %337 = vector.load %arg5[%c0_108, %c0_109] : memref<64x128xbf16, #tpu.memory_space<vmem>>, vector<32x32xbf16>
    %c32_110 = arith.constant 32 : index
    %c0_111 = arith.constant 0 : index
    %338 = vector.load %arg5[%c32_110, %c0_111] : memref<64x128xbf16, #tpu.memory_space<vmem>>, vector<32x128xbf16>
    %339 = arith.truncf %331 : vector<16x32xf32> to vector<16x32xbf16>
    %cst_112 = arith.constant dense<0.000000e+00> : vector<16x32xf32>
    %340 = tpu.matmul %339, %337, %cst_112 {dimension_numbers = #tpu.dot_dimension_numbers<[1], [0], [0], [1], [0, 0, 1, 1], [], []>} : vector<16x32xbf16>, vector<32x32xbf16>, vector<16x32xf32> -> vector<16x32xf32>
    %341 = vector.broadcast %333 : vector<1x32xf32> to vector<16x32xf32>
    %342 = arith.addf %340, %341 : vector<16x32xf32>
    %343 = arith.mulf %342, %342 : vector<16x32xf32>
    %344 = arith.mulf %342, %343 : vector<16x32xf32>
    %cst_113 = arith.constant 4.471500e-02 : f32
    %345 = vector.broadcast %cst_113 : f32 to vector<16x32xf32>
    %346 = arith.mulf %345, %344 : vector<16x32xf32>
    %347 = arith.addf %342, %346 : vector<16x32xf32>
    %cst_114 = arith.constant 0.797884583 : f32
    %348 = vector.broadcast %cst_114 : f32 to vector<16x32xf32>
    %349 = arith.mulf %348, %347 : vector<16x32xf32>
    %350 = math.tanh %349 : vector<16x32xf32>
    %cst_115 = arith.constant 1.000000e+00 : f32
    %351 = vector.broadcast %cst_115 : f32 to vector<16x32xf32>
    %352 = arith.addf %351, %350 : vector<16x32xf32>
    %cst_116 = arith.constant 5.000000e-01 : f32
    %353 = vector.broadcast %cst_116 : f32 to vector<16x32xf32>
    %354 = arith.mulf %353, %352 : vector<16x32xf32>
    %355 = arith.mulf %342, %354 : vector<16x32xf32>
    %cst_117 = arith.constant dense<0.000000e+00> : vector<16xf32>
    %356 = vector.multi_reduction <add>, %355, %cst_117 [1] : vector<16x32xf32> to vector<16xf32>
    %357 = vector.shape_cast %356 : vector<16xf32> to vector<16x1xf32>
    %cst_118 = arith.constant 3.200000e+01 : f32
    %358 = vector.broadcast %cst_118 : f32 to vector<16x1xf32>
    %359 = arith.divf %357, %358 : vector<16x1xf32>
    %360 = vector.broadcast %359 : vector<16x1xf32> to vector<16x32xf32>
    %361 = arith.subf %355, %360 : vector<16x32xf32>
    %362 = arith.mulf %361, %361 : vector<16x32xf32>
    %cst_119 = arith.constant dense<0.000000e+00> : vector<16xf32>
    %363 = vector.multi_reduction <add>, %362, %cst_119 [1] : vector<16x32xf32> to vector<16xf32>
    %364 = vector.shape_cast %363 : vector<16xf32> to vector<16x1xf32>
    %cst_120 = arith.constant 3.200000e+01 : f32
    %365 = vector.broadcast %cst_120 : f32 to vector<16x1xf32>
    %366 = arith.divf %364, %365 : vector<16x1xf32>
    %367 = vector.broadcast %359 : vector<16x1xf32> to vector<16x32xf32>
    %368 = arith.subf %355, %367 : vector<16x32xf32>
    %cst_121 = arith.constant 9.99999974E-6 : f32
    %369 = vector.broadcast %cst_121 : f32 to vector<16x1xf32>
    %370 = arith.addf %366, %369 : vector<16x1xf32>
    %371 = math.rsqrt %370 : vector<16x1xf32>
    %372 = vector.broadcast %371 : vector<16x1xf32> to vector<16x32xf32>
    %373 = arith.mulf %368, %372 : vector<16x32xf32>
    %374 = vector.broadcast %334 : vector<1x32xf32> to vector<16x32xf32>
    %375 = arith.mulf %373, %374 : vector<16x32xf32>
    %376 = vector.broadcast %335 : vector<1x32xf32> to vector<16x32xf32>
    %377 = arith.addf %375, %376 : vector<16x32xf32>
    %378 = arith.truncf %377 : vector<16x32xf32> to vector<16x32xbf16>
    %cst_122 = arith.constant dense<0.000000e+00> : vector<16x128xf32>
    %379 = tpu.matmul %378, %338, %cst_122 {dimension_numbers = #tpu.dot_dimension_numbers<[1], [0], [0], [1], [0, 0, 1, 1], [], []>} : vector<16x32xbf16>, vector<32x128xbf16>, vector<16x128xf32> -> vector<16x128xf32>
    %380 = vector.broadcast %336 : vector<1x128xf32> to vector<16x128xf32>
    %381 = arith.addf %379, %380 : vector<16x128xf32>
    %c0_123 = arith.constant 0 : index
    %c0_124 = arith.constant 0 : index
    %382 = vector.load %arg7[%c0_123, %c0_124] : memref<16x128xf32, #tpu.memory_space<vmem>>, vector<16x128xf32>
    tpu.vector_store %arg7[%c0_123, %c0_124], %381 {strides = array<i32>} : memref<16x128xf32, #tpu.memory_space<vmem>>, vector<16x128xf32>,
    %383 = vector.extract_strided_slice %331 {offsets = [0, 0], sizes = [8, 32], strides = [1, 1]} : vector<16x32xf32> to vector<8x32xf32>
    %cst_125 = arith.constant dense<0.000000e+00> : vector<32xf32>
    %384 = vector.multi_reduction <add>, %383, %cst_125 [0] : vector<8x32xf32> to vector<32xf32>
    %385 = vector.shape_cast %384 : vector<32xf32> to vector<1x32xf32>
    %cst_126 = arith.constant 8.000000e+00 : f32
    %386 = vector.broadcast %cst_126 : f32 to vector<1x32xf32>
    %387 = arith.divf %385, %386 : vector<1x32xf32>
    %388 = vector.extract_strided_slice %331 {offsets = [8, 0], sizes = [8, 32], strides = [1, 1]} : vector<16x32xf32> to vector<8x32xf32>
    %cst_127 = arith.constant dense<0.000000e+00> : vector<32xf32>
    %389 = vector.multi_reduction <add>, %388, %cst_127 [0] : vector<8x32xf32> to vector<32xf32>
    %390 = vector.shape_cast %389 : vector<32xf32> to vector<1x32xf32>
    %cst_128 = arith.constant 8.000000e+00 : f32
    %391 = vector.broadcast %cst_128 : f32 to vector<1x32xf32>
    %392 = arith.divf %390, %391 : vector<1x32xf32>
    %393 = tpu.concatenate %387, %392 in 0 : vector<1x32xf32>, vector<1x32xf32> -> vector<2x32xf32>
    %c0_129 = arith.constant 0 : index
    %c0_130 = arith.constant 0 : index
    %c0_131 = arith.constant 0 : index
    %394 = vector.load %arg8[%c0_129, %c0_130, %c0_131] : memref<1x2x32xf32, #tpu.memory_space<vmem>>, vector<1x2x32xf32>
    %395 = vector.shape_cast %394 : vector<1x2x32xf32> to vector<2x32xf32>
    %396 = vector.shape_cast %393 : vector<2x32xf32> to vector<1x2x32xf32>
    tpu.vector_store %arg8[%c0_129, %c0_130, %c0_131], %396 {strides = array<i32>} : memref<1x2x32xf32, #tpu.memory_space<vmem>>, vector<1x2x32xf32>,
    return
  }
  func.func @transform_0(%arg0: i32) -> (i32, i32) {
    %c0_i32 = arith.constant 0 : i32
    %c0_i32_0 = arith.constant 0 : i32
    return %arg0, %c0_i32 : i32, i32
  }
  func.func @transform_1(%arg0: i32) -> (i32, i32, i32) {
    %c0_i32 = arith.constant 0 : i32
    %c0_i32_0 = arith.constant 0 : i32
    %c0_i32_1 = arith.constant 0 : i32
    %c0_i32_2 = arith.constant 0 : i32
    return %c0_i32, %c0_i32_0, %c0_i32_1 : i32, i32, i32
  }
  func.func @transform_2(%arg0: i32) -> (i32, i32, i32) {
    %c0_i32 = arith.constant 0 : i32
    %c0_i32_0 = arith.constant 0 : i32
    %c0_i32_1 = arith.constant 0 : i32
    %c0_i32_2 = arith.constant 0 : i32
    return %c0_i32, %c0_i32_0, %c0_i32_1 : i32, i32, i32
  }
  func.func @transform_3(%arg0: i32) -> (i32, i32) {
    %c0_i32 = arith.constant 0 : i32
    %c0_i32_0 = arith.constant 0 : i32
    %c0_i32_1 = arith.constant 0 : i32
    return %c0_i32, %c0_i32_0 : i32, i32
  }
  func.func @transform_4(%arg0: i32) -> (i32, i32) {
    %c0_i32 = arith.constant 0 : i32
    %c0_i32_0 = arith.constant 0 : i32
    %c0_i32_1 = arith.constant 0 : i32
    return %c0_i32, %c0_i32_0 : i32, i32
  }
  func.func @transform_5(%arg0: i32) -> (i32, i32) {
    %c0_i32 = arith.constant 0 : i32
    %c0_i32_0 = arith.constant 0 : i32
    return %arg0, %c0_i32 : i32, i32
  }
  func.func @transform_6(%arg0: i32) -> (i32, i32) {
    %c0_i32 = arith.constant 0 : i32
    %c0_i32_0 = arith.constant 0 : i32
    return %arg0, %c0_i32 : i32, i32
  }
  func.func @transform_7(%arg0: i32) -> (i32, i32, i32) {
    %c0_i32 = arith.constant 0 : i32
    %c0_i32_0 = arith.constant 0 : i32
    %c0_i32_1 = arith.constant 0 : i32
    return %arg0, %c0_i32, %c0_i32_0 : i32, i32, i32
  }
}

</mosaic_0001>

<llo_original>
// kernel: enhanced_esm_forward.1
$region0: #{enhanced_esm_forward.1}
  #allocation0 [shape = 'u32[]', space=smem, size = 0x4, offset = 0x4, fixed_abs, tag = 'smem constant byte address 0x4 - core index']
  #allocation1 [shape = 'u32[144,128]{1,0:T(1,128)}', space=vmem, size = 0x12000, scoped, tag = 'internal scratch']
  %s0 = inlined_call_operand.vmem [shape: f32[16,32], index: 0, kind: input, shape index: {}]
  %s1 = inlined_call_operand.vmem [shape: f32[2,8,96], index: 1, kind: input, shape index: {}]
  %s2 = inlined_call_operand.vmem [shape: bf16[2,224,96], index: 2, kind: input, shape index: {}]
  %s3 = inlined_call_operand.vmem [shape: f32[38,128], index: 3, kind: input, shape index: {}]
  %s4 = inlined_call_operand.vmem [shape: bf16[64,128], index: 4, kind: input, shape index: {}]
  %s5 = inlined_call_operand.hbm [shape: f32[16,32], index: 5, kind: output, shape index: {0}]
  %s6 = inlined_call_operand.hbm [shape: f32[16,128], index: 6, kind: output, shape index: {1}]
  %s7 = inlined_call_operand.vmem [shape: f32[1,2,32], index: 7, kind: output, shape index: {2}]
  %8 = xla_tuple %s5, %s6, %s7
  %s9 = sld [smem:[#allocation0]]
  $region46: #{enhanced_esm_forward.1} parent=0
    _
  %s11 = ssub.s32 1, %s9
  %s12 = scalar_select 0, %s11, %s9
  $region1: #{enhanced_esm_forward.1} parent=0
    #allocation2 [shape = 'u8[8192]{0}', space=vmem, size = 0x2000, scoped, tag = 'output window, operand 0, single buffered']
    #allocation3 [shape = 's32[1]{0}', space=sflag, size = 0x4, scoped, tag = 'scoped memory for enhanced_esm_forward.1']
    #allocation4 [shape = 'u8[8192]{0}', space=vmem, size = 0x2000, scoped, tag = 'output window, operand 1, single buffered']
    #allocation5 [shape = 's32[1]{0}', space=sflag, size = 0x4, scoped, tag = 'scoped memory for enhanced_esm_forward.1']
    %13 = vsyncpa [#allocation3], 0
    %14 = vsyncpa [#allocation5], 0
    // Predicated region
    $region2: #{enhanced_esm_forward.1} parent=1 // pred_check
      _
    $region3: #{enhanced_esm_forward.1} parent=1 // pred_check_branch
      %16 = sbr.rel (0) target = $region5
    $region4: #{enhanced_esm_forward.1} parent=1 // pred_region
      _
    $region5: #{enhanced_esm_forward.1} parent=1 // pred_fallthru
      _
    // Predicated region
    $region6: #{enhanced_esm_forward.1} parent=1 // pred_check
      _
    $region7: #{enhanced_esm_forward.1} parent=1 // pred_check_branch
      %18 = sbr.rel (0) target = $region9
    $region8: #{enhanced_esm_forward.1} parent=1 // pred_region
      _
    $region9: #{enhanced_esm_forward.1} parent=1 // pred_fallthru
      _
    // Predicated region
    $region10: #{enhanced_esm_forward.1} parent=1 // pred_check
      _
    $region11: #{enhanced_esm_forward.1} parent=1 // pred_check_branch
      %20 = sbr.rel (0) target = $region13
    $region12: #{enhanced_esm_forward.1} parent=1 // pred_region
      _
    $region13: #{enhanced_esm_forward.1} parent=1 // pred_fallthru
      _
    // Predicated region
    $region14: #{enhanced_esm_forward.1} parent=1 // pred_check
      _
    $region15: #{enhanced_esm_forward.1} parent=1 // pred_check_branch
      %22 = sbr.rel (0) target = $region17
    $region16: #{enhanced_esm_forward.1} parent=1 // pred_region
      _
    $region17: #{enhanced_esm_forward.1} parent=1 // pred_fallthru
      _
    // Predicated region
    $region18: #{enhanced_esm_forward.1} parent=1 // pred_check
      _
    $region19: #{enhanced_esm_forward.1} parent=1 // pred_check_branch
      %24 = sbr.rel (0) target = $region21
    $region20: #{enhanced_esm_forward.1} parent=1 // pred_region
      _
    $region21: #{enhanced_esm_forward.1} parent=1 // pred_fallthru
      _
    %v26 = vld [vmem:[%s3] sm:$0xff]
    %v27 = vld [vmem:[%s3 + $0x8] sm:$0xff]
    %v28 = vld [vmem:[%s3 + $0x10] sm:$0xff]
    %v29 = vld [vmem:[%s3 + $0x18] sm:$0xff]
    %v30 = vld [vmem:[%s0] sm:$0xff]
    %v31 = vld [vmem:[%s0 + $0x8] sm:$0xff]
    %v32 = vld [vmem:[%s1] sm:$0xff]
    %v33 = vld [vmem:[%s2] sm:$0xf]
    %v34 = vld [vmem:[%s2 + $0x4] sm:$0xf]
    %v35 = vld [vmem:[%s2 + $0x8] sm:$0xf]
    %v36 = vld [vmem:[%s2 + $0xc] sm:$0xf]
    %v37 = vld [vmem:[%s2 + $0x10] sm:$0xf]
    %v38 = vld [vmem:[%s2 + $0x14] sm:$0xf]
    %v39 = vld [vmem:[%s2 + $0x18] sm:$0xf]
    %v40 = vld [vmem:[%s2 + $0x1c] sm:$0xf]
    %v41 = vld [vmem:[%s2 + $0x20] sm:$0xf]
    %v42 = vld [vmem:[%s2 + $0x24] sm:$0xf]
    %v43 = vld [vmem:[%s2 + $0x28] sm:$0xf]
    %v44 = vld [vmem:[%s2 + $0x2c] sm:$0xf]
    %v45 = vld [vmem:[%s2 + $0x30] sm:$0xf]
    %v46 = vld [vmem:[%s2 + $0x34] sm:$0xf]
    %v47 = vld [vmem:[%s2 + $0x38] sm:$0xf]
    %v48 = vld [vmem:[%s2 + $0x3c] sm:$0xf]
    %v49 = vld [vmem:[%s2 + $0x40] sm:$0xf]
    %v50 = vld [vmem:[%s2 + $0x44] sm:$0xf]
    %v51 = vld [vmem:[%s2 + $0x48] sm:$0xf]
    %v52 = vld [vmem:[%s2 + $0x4c] sm:$0xf]
    %v53 = vld [vmem:[%s2 + $0x50] sm:$0xf]
    %v54 = vld [vmem:[%s2 + $0x54] sm:$0xf]
    %v55 = vld [vmem:[%s2 + $0x58] sm:$0xf]
    %v56 = vld [vmem:[%s2 + $0x5c] sm:$0xf]
    %v57 = vld [vmem:[%s2 + $0x60] sm:$0xf]
    %v58 = vld [vmem:[%s2 + $0x64] sm:$0xf]
    %v59 = vld [vmem:[%s2 + $0x68] sm:$0xf]
    %v60 = vld [vmem:[%s2 + $0x6c] sm:$0xf]
    %vm61 = vcmask 261120
    %v62 = vsel %vm61, %v30, 0.0
    %63 = vadd.xlane.f32.xlu0 %v62
    %v64 = vpop.xlane.xlu0 %63
    %v65 = vsel %vm61, %v31, 0.0
    %66 = vadd.xlane.f32.xlu0 %v65
    %v67 = vpop.xlane.xlu0 %66
    %v68 = vrcp.pop 32.0
    %v69 = vmul.f32 %v64, %v68
    %v70 = vmul.f32 %v67, %v68
    %v71 = vsub.f32 %v30, %v69
    %v72 = vsub.f32 %v31, %v70
    %v73 = vmul.f32 %v71, %v71
    %v74 = vmul.f32 %v72, %v72
    %v75 = vsel %vm61, %v73, 0.0
    %76 = vadd.xlane.f32.xlu0 %v75
    %v77 = vpop.xlane.xlu0 %76
    %v78 = vsel %vm61, %v74, 0.0
    %79 = vadd.xlane.f32.xlu0 %v78
    %v80 = vpop.xlane.xlu0 %79
    %v81 = vmul.f32 %v77, %v68
    %v82 = vmul.f32 %v80, %v68
    %v83 = vadd.f32 %v81, 1e-05
    %v84 = vadd.f32 %v82, 1e-05
    %v85 = vrsqrt.pop %v83
    %v86 = vrsqrt.pop %v84
    %v87 = vmul.f32 %v71, %v85
    %v88 = vmul.f32 %v72, %v86
    %v89 = vlaneseq
    %v90 = vshrl.u32 %v89, 7
    %v91 = vsub.s32 0, %v90
    %v92 = vrot.slane %v32, %v91
    %v93 = vmul.f32 %v87, %v92
    %v94 = vmul.f32 %v88, %v92
    %v95 = vlaneseq
    %v96 = vshrl.u32 %v95, 7
    %v97 = vsub.s32 1, %v96
    %v98 = vrot.slane %v32, %v97
    %v99 = vadd.f32 %v93, %v98
    %v100 = vadd.f32 %v94, %v98
    %v101 = vpack.c.bf16 %v100, %v99
    %v102 = vlaneseq
    %v103 = vshrl.u32 %v102, 7
    %v104 = vsub.s32 2, %v103
    %v105 = vrot.slane %v32, %v104
    %v110 = vunpack.c.l.b16 %v33
    %v111 = vunpack.c.l.b16 %v34
    %v112 = vunpack.c.l.b16 %v35
    %v113 = vunpack.c.l.b16 %v36
    %v114 = vpack.c.b16 %v111, %v110
    %v115 = vpack.c.b16 %v113, %v112
    %v119 = vsel %vm61, %v101, 0
    %121 = vmatprep.subr.bf16.mxu0 0
    %122 = vmatpush1.bf16.msra.mxu0 0
    %123 = vmatprep.subr.bf16.mxu0 0
    %124 = vmatpush1.bf16.msra.mxu0 0
    %125 = vmatprep.subr.bf16.mxu0 0
    %126 = vmatpush1.bf16.msra.mxu0 0
    %127 = vmatprep.subr.bf16.mxu0 0
    %128 = vmatpush1.bf16.msra.mxu0 0
    %129 = vmatprep.subr.bf16.mxu0 0
    %130 = vmatpush1.bf16.msra.mxu0 0
    %131 = vmatprep.subr.bf16.mxu0 0
    %132 = vmatpush1.bf16.msra.mxu0 0
    %133 = vmatprep.subr.bf16.mxu0 0
    %134 = vmatpush1.bf16.msra.mxu0 %v115
    %135 = vmatprep.subr.bf16.mxu0 0
    %136 = vmatpush1.bf16.msra.mxu0 %v114
    %137 = vmatprep.subr.bf16.mxu0 0
    %138 = vmatpush2.bf16.msra.mxu0 0
    %139 = vmatprep.subr.bf16.mxu0 0
    %140 = vmatpush2.bf16.msra.mxu0 0
    %141 = vmatprep.subr.bf16.mxu0 0
    %142 = vmatpush2.bf16.msra.mxu0 0
    %143 = vmatprep.subr.bf16.mxu0 0
    %144 = vmatpush2.bf16.msra.mxu0 0
    %145 = vmatprep.subr.bf16.mxu0 0
    %146 = vmatpush2.bf16.msra.mxu0 0
    %147 = vmatprep.subr.bf16.mxu0 0
    %148 = vmatpush2.bf16.msra.mxu0 0
    %149 = vmatprep.subr.bf16.mxu0 0
    %150 = vmatpush2.bf16.msra.mxu0 0
    %151 = vmatprep.subr.bf16.mxu0 0
    %152 = vmatpush2.bf16.msra.mxu0 0
    %153 = vmatprep.mubr.bf16.mxu0 0
    %154 = vmatmul.mubr.bf16.gmra.mxu0 %v119
    %v155 = vpop.f32.mrf.mxu0
    %v156 = vadd.f32 %v105, %v155
    %v157 = vpop.f32.mrf.mxu0
    %v158 = vpop.f32.mrf.mxu0
    %v159 = vadd.f32 %v105, %v158
    %v160 = vpop.f32.mrf.mxu0
    %161 = vdwg.mxu0
    %v166 = vunpack.c.l.b16 %v37
    %v167 = vunpack.c.l.b16 %v38
    %v168 = vunpack.c.l.b16 %v39
    %v169 = vunpack.c.l.b16 %v40
    %v170 = vpack.c.b16 %v167, %v166
    %v171 = vpack.c.b16 %v169, %v168
    %174 = vmatprep.subr.bf16.mxu0 0
    %175 = vmatpush1.bf16.msra.mxu0 0
    %176 = vmatprep.subr.bf16.mxu0 0
    %177 = vmatpush1.bf16.msra.mxu0 0
    %178 = vmatprep.subr.bf16.mxu0 0
    %179 = vmatpush1.bf16.msra.mxu0 0
    %180 = vmatprep.subr.bf16.mxu0 0
    %181 = vmatpush1.bf16.msra.mxu0 0
    %182 = vmatprep.subr.bf16.mxu0 0
    %183 = vmatpush1.bf16.msra.mxu0 0
    %184 = vmatprep.subr.bf16.mxu0 0
    %185 = vmatpush1.bf16.msra.mxu0 0
    %186 = vmatprep.subr.bf16.mxu0 0
    %187 = vmatpush1.bf16.msra.mxu0 %v171
    %188 = vmatprep.subr.bf16.mxu0 0
    %189 = vmatpush1.bf16.msra.mxu0 %v170
    %190 = vmatprep.subr.bf16.mxu0 0
    %191 = vmatpush2.bf16.msra.mxu0 0
    %192 = vmatprep.subr.bf16.mxu0 0
    %193 = vmatpush2.bf16.msra.mxu0 0
    %194 = vmatprep.subr.bf16.mxu0 0
    %195 = vmatpush2.bf16.msra.mxu0 0
    %196 = vmatprep.subr.bf16.mxu0 0
    %197 = vmatpush2.bf16.msra.mxu0 0
    %198 = vmatprep.subr.bf16.mxu0 0
    %199 = vmatpush2.bf16.msra.mxu0 0
    %200 = vmatprep.subr.bf16.mxu0 0
    %201 = vmatpush2.bf16.msra.mxu0 0
    %202 = vmatprep.subr.bf16.mxu0 0
    %203 = vmatpush2.bf16.msra.mxu0 0
    %204 = vmatprep.subr.bf16.mxu0 0
    %205 = vmatpush2.bf16.msra.mxu0 0
    %206 = vmatprep.mubr.bf16.mxu0 0
    %207 = vmatmul.mubr.bf16.gmra.mxu0 %v119
    %v208 = vpop.f32.mrf.mxu0
    %v209 = vadd.f32 0.0, %v208
    %v210 = vpop.f32.mrf.mxu0
    %v211 = vpop.f32.mrf.mxu0
    %v212 = vadd.f32 0.0, %v211
    %v213 = vpop.f32.mrf.mxu0
    %214 = vdwg.mxu0
    %v215 = vpack.c.bf16 %v212, %v209
    %v220 = vunpack.c.l.b16 %v41
    %v221 = vunpack.c.l.b16 %v42
    %v222 = vunpack.c.l.b16 %v43
    %v223 = vunpack.c.l.b16 %v44
    %v224 = vpack.c.b16 %v221, %v220
    %v225 = vpack.c.b16 %v223, %v222
    %v229 = vsel %vm61, %v215, 0
    %231 = vmatprep.subr.bf16.mxu0 0
    %232 = vmatpush1.bf16.msra.mxu0 0
    %233 = vmatprep.subr.bf16.mxu0 0
    %234 = vmatpush1.bf16.msra.mxu0 0
    %235 = vmatprep.subr.bf16.mxu0 0
    %236 = vmatpush1.bf16.msra.mxu0 0
    %237 = vmatprep.subr.bf16.mxu0 0
    %238 = vmatpush1.bf16.msra.mxu0 0
    %239 = vmatprep.subr.bf16.mxu0 0
    %240 = vmatpush1.bf16.msra.mxu0 0
    %241 = vmatprep.subr.bf16.mxu0 0
    %242 = vmatpush1.bf16.msra.mxu0 0
    %243 = vmatprep.subr.bf16.mxu0 0
    %244 = vmatpush1.bf16.msra.mxu0 %v225
    %245 = vmatprep.subr.bf16.mxu0 0
    %246 = vmatpush1.bf16.msra.mxu0 %v224
    %247 = vmatprep.subr.bf16.mxu0 0
    %248 = vmatpush2.bf16.msra.mxu0 0
    %249 = vmatprep.subr.bf16.mxu0 0
    %250 = vmatpush2.bf16.msra.mxu0 0
    %251 = vmatprep.subr.bf16.mxu0 0
    %252 = vmatpush2.bf16.msra.mxu0 0
    %253 = vmatprep.subr.bf16.mxu0 0
    %254 = vmatpush2.bf16.msra.mxu0 0
    %255 = vmatprep.subr.bf16.mxu0 0
    %256 = vmatpush2.bf16.msra.mxu0 0
    %257 = vmatprep.subr.bf16.mxu0 0
    %258 = vmatpush2.bf16.msra.mxu0 0
    %259 = vmatprep.subr.bf16.mxu0 0
    %260 = vmatpush2.bf16.msra.mxu0 0
    %261 = vmatprep.subr.bf16.mxu0 0
    %262 = vmatpush2.bf16.msra.mxu0 0
    %263 = vmatprep.mubr.bf16.mxu0 0
    %264 = vmatmul.mubr.bf16.gmra.mxu0 %v229
    %v265 = vpop.f32.mrf.mxu0
    %v266 = vadd.f32 0.0, %v265
    %v267 = vpop.f32.mrf.mxu0
    %v268 = vpop.f32.mrf.mxu0
    %v269 = vadd.f32 0.0, %v268
    %v270 = vpop.f32.mrf.mxu0
    %271 = vdwg.mxu0
    %v272 = vadd.f32 %v156, %v266
    %v273 = vadd.f32 %v159, %v269
    %v274 = vmul.f32 %v272, %v26
    %v275 = vmul.f32 %v272, %v27
    %v276 = vmul.f32 %v272, %v28
    %v277 = vmul.f32 %v272, %v29
    %279 = vrot.lane.b32.xlu0 %v272, 96
    %v280 = vpop.permute.xlu0 %279
    %v282 = vsel %vm61, %v274, 0
    %v285 = vsel %vm61, %v275, 0
    %v288 = vsel %vm61, %v276, 0
    %v291 = vsel %vm61, %v277, 0
    %v293 = vsel %vm61, %v280, 0
    %295 = vmatprep.subr.mxu0 0.0
    %296 = vmatpush1.xpose.msra.mxu0 0.0
    %297 = vmatprep.subr.mxu0 0.0
    %298 = vmatpush1.xpose.msra.mxu0 0.0
    %299 = vmatprep.subr.mxu0 0.0
    %300 = vmatpush1.xpose.msra.mxu0 0.0
    %301 = vmatprep.subr.mxu0 0.0
    %302 = vmatpush1.xpose.msra.mxu0 0.0
    %303 = vmatprep.subr.mxu0 0.0
    %304 = vmatpush1.xpose.msra.mxu0 0.0
    %305 = vmatprep.subr.mxu0 0.0
    %306 = vmatpush1.xpose.msra.mxu0 0.0
    %307 = vmatprep.subr.mxu0 0.0
    %308 = vmatpush1.xpose.msra.mxu0 0.0
    %309 = vmatprep.subr.mxu0 0.0
    %310 = vmatpush1.xpose.msra.mxu0 0.0
    %311 = vmatprep.subr.mxu0 0.0
    %312 = vmatpush1.xpose.msra.mxu0 0.0
    %313 = vmatprep.subr.mxu0 0.0
    %314 = vmatpush1.xpose.msra.mxu0 0.0
    %315 = vmatprep.subr.mxu0 0.0
    %316 = vmatpush1.xpose.msra.mxu0 0.0
    %317 = vmatprep.subr.mxu0 0.0
    %318 = vmatpush1.xpose.msra.mxu0 0.0
    %319 = vmatprep.subr.mxu0 0.0
    %320 = vmatpush1.xpose.msra.mxu0 0.0
    %321 = vmatprep.subr.mxu0 0.0
    %322 = vmatpush1.xpose.msra.mxu0 0.0
    %323 = vmatprep.subr.mxu0 0.0
    %324 = vmatpush1.xpose.msra.mxu0 0.0
    %325 = vmatprep.subr.mxu0 0.0
    %326 = vmatpush1.xpose.msra.mxu0 %v293
    %327 = vmatprep.subr.mxu0 0.0
    %328 = vmatpush2.xpose.msra.mxu0 0.0
    %329 = vmatprep.subr.mxu0 0.0
    %330 = vmatpush2.xpose.msra.mxu0 0.0
    %331 = vmatprep.subr.mxu0 0.0
    %332 = vmatpush2.xpose.msra.mxu0 0.0
    %333 = vmatprep.subr.mxu0 0.0
    %334 = vmatpush2.xpose.msra.mxu0 0.0
    %335 = vmatprep.subr.mxu0 0.0
    %336 = vmatpush2.xpose.msra.mxu0 0.0
    %337 = vmatprep.subr.mxu0 0.0
    %338 = vmatpush2.xpose.msra.mxu0 0.0
    %339 = vmatprep.subr.mxu0 0.0
    %340 = vmatpush2.xpose.msra.mxu0 0.0
    %341 = vmatprep.subr.mxu0 0.0
    %342 = vmatpush2.xpose.msra.mxu0 0.0
    %343 = vmatprep.subr.mxu0 0.0
    %344 = vmatpush2.xpose.msra.mxu0 0.0
    %345 = vmatprep.subr.mxu0 0.0
    %346 = vmatpush2.xpose.msra.mxu0 0.0
    %347 = vmatprep.subr.mxu0 0.0
    %348 = vmatpush2.xpose.msra.mxu0 0.0
    %349 = vmatprep.subr.mxu0 0.0
    %350 = vmatpush2.xpose.msra.mxu0 0.0
    %351 = vmatprep.subr.mxu0 0.0
    %352 = vmatpush2.xpose.msra.mxu0 0.0
    %353 = vmatprep.subr.mxu0 0.0
    %354 = vmatpush2.xpose.msra.mxu0 0.0
    %355 = vmatprep.subr.mxu0 0.0
    %356 = vmatpush2.xpose.msra.mxu0 0.0
    %357 = vmatprep.subr.mxu0 0.0
    %358 = vmatpush2.xpose.msra.mxu0 0.0
    %359 = vmatprep.mubr.f32.mxu0 0.0
    %360 = vmatmul.mubr.f32.gmra.mxu0 %v282
    %v361 = vpop.f32.mrf.mxu0
    %v362 = vadd.f32 0.0, %v361
    %v363 = vpop.f32.mrf.mxu0
    %364 = vmatprep.mubr.f32.mxu0 0.0
    %365 = vmatmul.mubr.f32.gmra.mxu0 %v285
    %v366 = vpop.f32.mrf.mxu0
    %v367 = vadd.f32 0.0, %v366
    %v368 = vpop.f32.mrf.mxu0
    %369 = vmatprep.mubr.f32.mxu0 0.0
    %370 = vmatmul.mubr.f32.gmra.mxu0 %v288
    %v371 = vpop.f32.mrf.mxu0
    %v372 = vadd.f32 0.0, %v371
    %v373 = vpop.f32.mrf.mxu0
    %374 = vmatprep.mubr.f32.mxu0 0.0
    %375 = vmatmul.mubr.f32.gmra.mxu0 %v291
    %v376 = vpop.f32.mrf.mxu0
    %v377 = vadd.f32 0.0, %v376
    %v378 = vpop.f32.mrf.mxu0
    %379 = vdwg.mxu0
    %vm380 = vcmask 64512
    %v381 = vsel %vm380, %v362, -inf
    %382 = vmax.xlane.f32.xlu0 %v381
    %v383 = vpop.xlane.xlu0 %382
    %v384 = vsel %vm380, %v367, -inf
    %385 = vmax.xlane.f32.xlu0 %v384
    %v386 = vpop.xlane.xlu0 %385
    %v387 = vsel %vm380, %v372, -inf
    %388 = vmax.xlane.f32.xlu0 %v387
    %v389 = vpop.xlane.xlu0 %388
    %v390 = vsel %vm380, %v377, -inf
    %391 = vmax.xlane.f32.xlu0 %v390
    %v392 = vpop.xlane.xlu0 %391
    %v393 = vsub.f32 %v362, %v383
    %v394 = vsub.f32 %v367, %v386
    %v395 = vsub.f32 %v372, %v389
    %v396 = vsub.f32 %v377, %v392
    %v397 = vmul.f32 %v393, 1.442695
    %v398 = vpow.pop %v397
    %v399 = vmul.f32 %v394, 1.442695
    %v400 = vpow.pop %v399
    %v401 = vmul.f32 %v395, 1.442695
    %v402 = vpow.pop %v401
    %v403 = vmul.f32 %v396, 1.442695
    %v404 = vpow.pop %v403
    %v405 = vsel %vm380, %v398, 0.0
    %406 = vadd.xlane.f32.xlu0 %v405
    %v407 = vpop.xlane.xlu0 %406
    %v408 = vsel %vm380, %v400, 0.0
    %409 = vadd.xlane.f32.xlu0 %v408
    %v410 = vpop.xlane.xlu0 %409
    %v411 = vsel %vm380, %v402, 0.0
    %412 = vadd.xlane.f32.xlu0 %v411
    %v413 = vpop.xlane.xlu0 %412
    %v414 = vsel %vm380, %v404, 0.0
    %415 = vadd.xlane.f32.xlu0 %v414
    %v416 = vpop.xlane.xlu0 %415
    %v417 = vrcp.pop %v407
    %v418 = vmul.f32 %v398, %v417
    %v419 = vrcp.pop %v410
    %v420 = vmul.f32 %v400, %v419
    %v421 = vrcp.pop %v413
    %v422 = vmul.f32 %v402, %v421
    %v423 = vrcp.pop %v416
    %v424 = vmul.f32 %v404, %v423
    %425 = vrot.lane.b32.xlu0 %v272, 64
    %v426 = vpop.permute.xlu0 %425
    %v429 = vsel %vm380, %v418, 0
    %v432 = vsel %vm380, %v420, 0
    %v435 = vsel %vm380, %v422, 0
    %v438 = vsel %vm380, %v424, 0
    %440 = vmatprep.subr.mxu0 0.0
    %441 = vmatpush1.msra.mxu0 0.0
    %442 = vmatprep.subr.mxu0 0.0
    %443 = vmatpush1.msra.mxu0 0.0
    %444 = vmatprep.subr.mxu0 0.0
    %445 = vmatpush1.msra.mxu0 0.0
    %446 = vmatprep.subr.mxu0 0.0
    %447 = vmatpush1.msra.mxu0 0.0
    %448 = vmatprep.subr.mxu0 0.0
    %449 = vmatpush1.msra.mxu0 0.0
    %450 = vmatprep.subr.mxu0 0.0
    %451 = vmatpush1.msra.mxu0 0.0
    %452 = vmatprep.subr.mxu0 0.0
    %453 = vmatpush1.msra.mxu0 0.0
    %454 = vmatprep.subr.mxu0 0.0
    %455 = vmatpush1.msra.mxu0 0.0
    %456 = vmatprep.subr.mxu0 0.0
    %457 = vmatpush1.msra.mxu0 0.0
    %458 = vmatprep.subr.mxu0 0.0
    %459 = vmatpush1.msra.mxu0 0.0
    %460 = vmatprep.subr.mxu0 0.0
    %461 = vmatpush1.msra.mxu0 0.0
    %462 = vmatprep.subr.mxu0 0.0
    %463 = vmatpush1.msra.mxu0 0.0
    %464 = vmatprep.subr.mxu0 0.0
    %465 = vmatpush1.msra.mxu0 0.0
    %466 = vmatprep.subr.mxu0 0.0
    %467 = vmatpush1.msra.mxu0 0.0
    %468 = vmatprep.subr.mxu0 0.0
    %469 = vmatpush1.msra.mxu0 0.0
    %470 = vmatprep.subr.mxu0 0.0
    %471 = vmatpush1.msra.mxu0 %v426
    %472 = vmatprep.subr.mxu0 0.0
    %473 = vmatpush2.msra.mxu0 0.0
    %474 = vmatprep.subr.mxu0 0.0
    %475 = vmatpush2.msra.mxu0 0.0
    %476 = vmatprep.subr.mxu0 0.0
    %477 = vmatpush2.msra.mxu0 0.0
    %478 = vmatprep.subr.mxu0 0.0
    %479 = vmatpush2.msra.mxu0 0.0
    %480 = vmatprep.subr.mxu0 0.0
    %481 = vmatpush2.msra.mxu0 0.0
    %482 = vmatprep.subr.mxu0 0.0
    %483 = vmatpush2.msra.mxu0 0.0
    %484 = vmatprep.subr.mxu0 0.0
    %485 = vmatpush2.msra.mxu0 0.0
    %486 = vmatprep.subr.mxu0 0.0
    %487 = vmatpush2.msra.mxu0 0.0
    %488 = vmatprep.subr.mxu0 0.0
    %489 = vmatpush2.msra.mxu0 0.0
    %490 = vmatprep.subr.mxu0 0.0
    %491 = vmatpush2.msra.mxu0 0.0
    %492 = vmatprep.subr.mxu0 0.0
    %493 = vmatpush2.msra.mxu0 0.0
    %494 = vmatprep.subr.mxu0 0.0
    %495 = vmatpush2.msra.mxu0 0.0
    %496 = vmatprep.subr.mxu0 0.0
    %497 = vmatpush2.msra.mxu0 0.0
    %498 = vmatprep.subr.mxu0 0.0
    %499 = vmatpush2.msra.mxu0 0.0
    %500 = vmatprep.subr.mxu0 0.0
    %501 = vmatpush2.msra.mxu0 0.0
    %502 = vmatprep.subr.mxu0 0.0
    %503 = vmatpush2.msra.mxu0 0.0
    %504 = vmatprep.mubr.f32.mxu0 0.0
    %505 = vmatmul.mubr.f32.gmra.mxu0 %v429
    %v506 = vpop.f32.mrf.mxu0
    %v507 = vadd.f32 0.0, %v506
    %v508 = vpop.f32.mrf.mxu0
    %509 = vmatprep.mubr.f32.mxu0 0.0
    %510 = vmatmul.mubr.f32.gmra.mxu0 %v432
    %v511 = vpop.f32.mrf.mxu0
    %v512 = vadd.f32 0.0, %v511
    %v513 = vpop.f32.mrf.mxu0
    %514 = vmatprep.mubr.f32.mxu0 0.0
    %515 = vmatmul.mubr.f32.gmra.mxu0 %v435
    %v516 = vpop.f32.mrf.mxu0
    %v517 = vadd.f32 0.0, %v516
    %v518 = vpop.f32.mrf.mxu0
    %519 = vmatprep.mubr.f32.mxu0 0.0
    %520 = vmatmul.mubr.f32.gmra.mxu0 %v438
    %v521 = vpop.f32.mrf.mxu0
    %v522 = vadd.f32 0.0, %v521
    %v523 = vpop.f32.mrf.mxu0
    %524 = vdwg.mxu0
    %v525 = vmul.f32 %v507, %v26
    %v526 = vmul.f32 %v512, %v27
    %v527 = vmul.f32 %v517, %v28
    %v528 = vmul.f32 %v522, %v29
    %v529 = vadd.f32 %v525, %v526
    %v530 = vadd.f32 %v529, %v527
    %v531 = vadd.f32 %v530, %v528
    %v532 = vmul.f32 %v273, %v26
    %v533 = vmul.f32 %v273, %v27
    %v534 = vmul.f32 %v273, %v28
    %v535 = vmul.f32 %v273, %v29
    %537 = vrot.lane.b32.xlu0 %v273, 96
    %v538 = vpop.permute.xlu0 %537
    %v540 = vsel %vm61, %v532, 0
    %v543 = vsel %vm61, %v533, 0
    %v546 = vsel %vm61, %v534, 0
    %v549 = vsel %vm61, %v535, 0
    %v551 = vsel %vm61, %v538, 0
    %553 = vmatprep.subr.mxu0 0.0
    %554 = vmatpush1.xpose.msra.mxu0 0.0
    %555 = vmatprep.subr.mxu0 0.0
    %556 = vmatpush1.xpose.msra.mxu0 0.0
    %557 = vmatprep.subr.mxu0 0.0
    %558 = vmatpush1.xpose.msra.mxu0 0.0
    %559 = vmatprep.subr.mxu0 0.0
    %560 = vmatpush1.xpose.msra.mxu0 0.0
    %561 = vmatprep.subr.mxu0 0.0
    %562 = vmatpush1.xpose.msra.mxu0 0.0
    %563 = vmatprep.subr.mxu0 0.0
    %564 = vmatpush1.xpose.msra.mxu0 0.0
    %565 = vmatprep.subr.mxu0 0.0
    %566 = vmatpush1.xpose.msra.mxu0 0.0
    %567 = vmatprep.subr.mxu0 0.0
    %568 = vmatpush1.xpose.msra.mxu0 0.0
    %569 = vmatprep.subr.mxu0 0.0
    %570 = vmatpush1.xpose.msra.mxu0 0.0
    %571 = vmatprep.subr.mxu0 0.0
    %572 = vmatpush1.xpose.msra.mxu0 0.0
    %573 = vmatprep.subr.mxu0 0.0
    %574 = vmatpush1.xpose.msra.mxu0 0.0
    %575 = vmatprep.subr.mxu0 0.0
    %576 = vmatpush1.xpose.msra.mxu0 0.0
    %577 = vmatprep.subr.mxu0 0.0
    %578 = vmatpush1.xpose.msra.mxu0 0.0
    %579 = vmatprep.subr.mxu0 0.0
    %580 = vmatpush1.xpose.msra.mxu0 0.0
    %581 = vmatprep.subr.mxu0 0.0
    %582 = vmatpush1.xpose.msra.mxu0 0.0
    %583 = vmatprep.subr.mxu0 0.0
    %584 = vmatpush1.xpose.msra.mxu0 %v551
    %585 = vmatprep.subr.mxu0 0.0
    %586 = vmatpush2.xpose.msra.mxu0 0.0
    %587 = vmatprep.subr.mxu0 0.0
    %588 = vmatpush2.xpose.msra.mxu0 0.0
    %589 = vmatprep.subr.mxu0 0.0
    %590 = vmatpush2.xpose.msra.mxu0 0.0
    %591 = vmatprep.subr.mxu0 0.0
    %592 = vmatpush2.xpose.msra.mxu0 0.0
    %593 = vmatprep.subr.mxu0 0.0
    %594 = vmatpush2.xpose.msra.mxu0 0.0
    %595 = vmatprep.subr.mxu0 0.0
    %596 = vmatpush2.xpose.msra.mxu0 0.0
    %597 = vmatprep.subr.mxu0 0.0
    %598 = vmatpush2.xpose.msra.mxu0 0.0
    %599 = vmatprep.subr.mxu0 0.0
    %600 = vmatpush2.xpose.msra.mxu0 0.0
    %601 = vmatprep.subr.mxu0 0.0
    %602 = vmatpush2.xpose.msra.mxu0 0.0
    %603 = vmatprep.subr.mxu0 0.0
    %604 = vmatpush2.xpose.msra.mxu0 0.0
    %605 = vmatprep.subr.mxu0 0.0
    %606 = vmatpush2.xpose.msra.mxu0 0.0
    %607 = vmatprep.subr.mxu0 0.0
    %608 = vmatpush2.xpose.msra.mxu0 0.0
    %609 = vmatprep.subr.mxu0 0.0
    %610 = vmatpush2.xpose.msra.mxu0 0.0
    %611 = vmatprep.subr.mxu0 0.0
    %612 = vmatpush2.xpose.msra.mxu0 0.0
    %613 = vmatprep.subr.mxu0 0.0
    %614 = vmatpush2.xpose.msra.mxu0 0.0
    %615 = vmatprep.subr.mxu0 0.0
    %616 = vmatpush2.xpose.msra.mxu0 0.0
    %617 = vmatprep.mubr.f32.mxu0 0.0
    %618 = vmatmul.mubr.f32.gmra.mxu0 %v540
    %v619 = vpop.f32.mrf.mxu0
    %v620 = vadd.f32 0.0, %v619
    %v621 = vpop.f32.mrf.mxu0
    %622 = vmatprep.mubr.f32.mxu0 0.0
    %623 = vmatmul.mubr.f32.gmra.mxu0 %v543
    %v624 = vpop.f32.mrf.mxu0
    %v625 = vadd.f32 0.0, %v624
    %v626 = vpop.f32.mrf.mxu0
    %627 = vmatprep.mubr.f32.mxu0 0.0
    %628 = vmatmul.mubr.f32.gmra.mxu0 %v546
    %v629 = vpop.f32.mrf.mxu0
    %v630 = vadd.f32 0.0, %v629
    %v631 = vpop.f32.mrf.mxu0
    %632 = vmatprep.mubr.f32.mxu0 0.0
    %633 = vmatmul.mubr.f32.gmra.mxu0 %v549
    %v634 = vpop.f32.mrf.mxu0
    %v635 = vadd.f32 0.0, %v634
    %v636 = vpop.f32.mrf.mxu0
    %637 = vdwg.mxu0
    %v638 = vsel %vm380, %v620, -inf
    %639 = vmax.xlane.f32.xlu0 %v638
    %v640 = vpop.xlane.xlu0 %639
    %v641 = vsel %vm380, %v625, -inf
    %642 = vmax.xlane.f32.xlu0 %v641
    %v643 = vpop.xlane.xlu0 %642
    %v644 = vsel %vm380, %v630, -inf
    %645 = vmax.xlane.f32.xlu0 %v644
    %v646 = vpop.xlane.xlu0 %645
    %v647 = vsel %vm380, %v635, -inf
    %648 = vmax.xlane.f32.xlu0 %v647
    %v649 = vpop.xlane.xlu0 %648
    %v650 = vsub.f32 %v620, %v640
    %v651 = vsub.f32 %v625, %v643
    %v652 = vsub.f32 %v630, %v646
    %v653 = vsub.f32 %v635, %v649
    %v654 = vmul.f32 %v650, 1.442695
    %v655 = vpow.pop %v654
    %v656 = vmul.f32 %v651, 1.442695
    %v657 = vpow.pop %v656
    %v658 = vmul.f32 %v652, 1.442695
    %v659 = vpow.pop %v658
    %v660 = vmul.f32 %v653, 1.442695
    %v661 = vpow.pop %v660
    %v662 = vsel %vm380, %v655, 0.0
    %663 = vadd.xlane.f32.xlu0 %v662
    %v664 = vpop.xlane.xlu0 %663
    %v665 = vsel %vm380, %v657, 0.0
    %666 = vadd.xlane.f32.xlu0 %v665
    %v667 = vpop.xlane.xlu0 %666
    %v668 = vsel %vm380, %v659, 0.0
    %669 = vadd.xlane.f32.xlu0 %v668
    %v670 = vpop.xlane.xlu0 %669
    %v671 = vsel %vm380, %v661, 0.0
    %672 = vadd.xlane.f32.xlu0 %v671
    %v673 = vpop.xlane.xlu0 %672
    %v674 = vrcp.pop %v664
    %v675 = vmul.f32 %v655, %v674
    %v676 = vrcp.pop %v667
    %v677 = vmul.f32 %v657, %v676
    %v678 = vrcp.pop %v670
    %v679 = vmul.f32 %v659, %v678
    %v680 = vrcp.pop %v673
    %v681 = vmul.f32 %v661, %v680
    %682 = vrot.lane.b32.xlu0 %v273, 64
    %v683 = vpop.permute.xlu0 %682
    %v686 = vsel %vm380, %v675, 0
    %v689 = vsel %vm380, %v677, 0
    %v692 = vsel %vm380, %v679, 0
    %v695 = vsel %vm380, %v681, 0
    %697 = vmatprep.subr.mxu0 0.0
    %698 = vmatpush1.msra.mxu0 0.0
    %699 = vmatprep.subr.mxu0 0.0
    %700 = vmatpush1.msra.mxu0 0.0
    %701 = vmatprep.subr.mxu0 0.0
    %702 = vmatpush1.msra.mxu0 0.0
    %703 = vmatprep.subr.mxu0 0.0
    %704 = vmatpush1.msra.mxu0 0.0
    %705 = vmatprep.subr.mxu0 0.0
    %706 = vmatpush1.msra.mxu0 0.0
    %707 = vmatprep.subr.mxu0 0.0
    %708 = vmatpush1.msra.mxu0 0.0
    %709 = vmatprep.subr.mxu0 0.0
    %710 = vmatpush1.msra.mxu0 0.0
    %711 = vmatprep.subr.mxu0 0.0
    %712 = vmatpush1.msra.mxu0 0.0
    %713 = vmatprep.subr.mxu0 0.0
    %714 = vmatpush1.msra.mxu0 0.0
    %715 = vmatprep.subr.mxu0 0.0
    %716 = vmatpush1.msra.mxu0 0.0
    %717 = vmatprep.subr.mxu0 0.0
    %718 = vmatpush1.msra.mxu0 0.0
    %719 = vmatprep.subr.mxu0 0.0
    %720 = vmatpush1.msra.mxu0 0.0
    %721 = vmatprep.subr.mxu0 0.0
    %722 = vmatpush1.msra.mxu0 0.0
    %723 = vmatprep.subr.mxu0 0.0
    %724 = vmatpush1.msra.mxu0 0.0
    %725 = vmatprep.subr.mxu0 0.0
    %726 = vmatpush1.msra.mxu0 0.0
    %727 = vmatprep.subr.mxu0 0.0
    %728 = vmatpush1.msra.mxu0 %v683
    %729 = vmatprep.subr.mxu0 0.0
    %730 = vmatpush2.msra.mxu0 0.0
    %731 = vmatprep.subr.mxu0 0.0
    %732 = vmatpush2.msra.mxu0 0.0
    %733 = vmatprep.subr.mxu0 0.0
    %734 = vmatpush2.msra.mxu0 0.0
    %735 = vmatprep.subr.mxu0 0.0
    %736 = vmatpush2.msra.mxu0 0.0
    %737 = vmatprep.subr.mxu0 0.0
    %738 = vmatpush2.msra.mxu0 0.0
    %739 = vmatprep.subr.mxu0 0.0
    %740 = vmatpush2.msra.mxu0 0.0
    %741 = vmatprep.subr.mxu0 0.0
    %742 = vmatpush2.msra.mxu0 0.0
    %743 = vmatprep.subr.mxu0 0.0
    %744 = vmatpush2.msra.mxu0 0.0
    %745 = vmatprep.subr.mxu0 0.0
    %746 = vmatpush2.msra.mxu0 0.0
    %747 = vmatprep.subr.mxu0 0.0
    %748 = vmatpush2.msra.mxu0 0.0
    %749 = vmatprep.subr.mxu0 0.0
    %750 = vmatpush2.msra.mxu0 0.0
    %751 = vmatprep.subr.mxu0 0.0
    %752 = vmatpush2.msra.mxu0 0.0
    %753 = vmatprep.subr.mxu0 0.0
    %754 = vmatpush2.msra.mxu0 0.0
    %755 = vmatprep.subr.mxu0 0.0
    %756 = vmatpush2.msra.mxu0 0.0
    %757 = vmatprep.subr.mxu0 0.0
    %758 = vmatpush2.msra.mxu0 0.0
    %759 = vmatprep.subr.mxu0 0.0
    %760 = vmatpush2.msra.mxu0 0.0
    %761 = vmatprep.mubr.f32.mxu0 0.0
    %762 = vmatmul.mubr.f32.gmra.mxu0 %v686
    %v763 = vpop.f32.mrf.mxu0
    %v764 = vadd.f32 0.0, %v763
    %v765 = vpop.f32.mrf.mxu0
    %766 = vmatprep.mubr.f32.mxu0 0.0
    %767 = vmatmul.mubr.f32.gmra.mxu0 %v689
    %v768 = vpop.f32.mrf.mxu0
    %v769 = vadd.f32 0.0, %v768
    %v770 = vpop.f32.mrf.mxu0
    %771 = vmatprep.mubr.f32.mxu0 0.0
    %772 = vmatmul.mubr.f32.gmra.mxu0 %v692
    %v773 = vpop.f32.mrf.mxu0
    %v774 = vadd.f32 0.0, %v773
    %v775 = vpop.f32.mrf.mxu0
    %776 = vmatprep.mubr.f32.mxu0 0.0
    %777 = vmatmul.mubr.f32.gmra.mxu0 %v695
    %v778 = vpop.f32.mrf.mxu0
    %v779 = vadd.f32 0.0, %v778
    %v780 = vpop.f32.mrf.mxu0
    %781 = vdwg.mxu0
    %v782 = vmul.f32 %v764, %v26
    %v783 = vmul.f32 %v769, %v27
    %v784 = vmul.f32 %v774, %v28
    %v785 = vmul.f32 %v779, %v29
    %v786 = vadd.f32 %v782, %v783
    %v787 = vadd.f32 %v786, %v784
    %v788 = vadd.f32 %v787, %v785
    %v789 = vpack.c.bf16 %v788, %v531
    %v794 = vunpack.c.l.b16 %v45
    %v795 = vunpack.c.l.b16 %v46
    %v796 = vunpack.c.l.b16 %v47
    %v797 = vunpack.c.l.b16 %v48
    %v798 = vpack.c.b16 %v795, %v794
    %v799 = vpack.c.b16 %v797, %v796
    %v803 = vsel %vm61, %v789, 0
    %805 = vmatprep.subr.bf16.mxu0 0
    %806 = vmatpush1.bf16.msra.mxu0 0
    %807 = vmatprep.subr.bf16.mxu0 0
    %808 = vmatpush1.bf16.msra.mxu0 0
    %809 = vmatprep.subr.bf16.mxu0 0
    %810 = vmatpush1.bf16.msra.mxu0 0
    %811 = vmatprep.subr.bf16.mxu0 0
    %812 = vmatpush1.bf16.msra.mxu0 0
    %813 = vmatprep.subr.bf16.mxu0 0
    %814 = vmatpush1.bf16.msra.mxu0 0
    %815 = vmatprep.subr.bf16.mxu0 0
    %816 = vmatpush1.bf16.msra.mxu0 0
    %817 = vmatprep.subr.bf16.mxu0 0
    %818 = vmatpush1.bf16.msra.mxu0 %v799
    %819 = vmatprep.subr.bf16.mxu0 0
    %820 = vmatpush1.bf16.msra.mxu0 %v798
    %821 = vmatprep.subr.bf16.mxu0 0
    %822 = vmatpush2.bf16.msra.mxu0 0
    %823 = vmatprep.subr.bf16.mxu0 0
    %824 = vmatpush2.bf16.msra.mxu0 0
    %825 = vmatprep.subr.bf16.mxu0 0
    %826 = vmatpush2.bf16.msra.mxu0 0
    %827 = vmatprep.subr.bf16.mxu0 0
    %828 = vmatpush2.bf16.msra.mxu0 0
    %829 = vmatprep.subr.bf16.mxu0 0
    %830 = vmatpush2.bf16.msra.mxu0 0
    %831 = vmatprep.subr.bf16.mxu0 0
    %832 = vmatpush2.bf16.msra.mxu0 0
    %833 = vmatprep.subr.bf16.mxu0 0
    %834 = vmatpush2.bf16.msra.mxu0 0
    %835 = vmatprep.subr.bf16.mxu0 0
    %836 = vmatpush2.bf16.msra.mxu0 0
    %837 = vmatprep.mubr.bf16.mxu0 0
    %838 = vmatmul.mubr.bf16.gmra.mxu0 %v803
    %v839 = vpop.f32.mrf.mxu0
    %v840 = vadd.f32 0.0, %v839
    %v841 = vpop.f32.mrf.mxu0
    %v842 = vpop.f32.mrf.mxu0
    %v843 = vadd.f32 0.0, %v842
    %v844 = vpop.f32.mrf.mxu0
    %845 = vdwg.mxu0
    %v846 = vadd.f32 %v30, %v840
    %v847 = vadd.f32 %v31, %v843
    %v848 = vlaneseq
    %v849 = vshrl.u32 %v848, 7
    %v850 = vsub.s32 3, %v849
    %v851 = vrot.slane %v32, %v850
    %v852 = vadd.f32 %v846, %v851
    %v853 = vadd.f32 %v847, %v851
    %v854 = vsel %vm61, %v852, 0.0
    %855 = vadd.xlane.f32.xlu0 %v854
    %v856 = vpop.xlane.xlu0 %855
    %v857 = vsel %vm61, %v853, 0.0
    %858 = vadd.xlane.f32.xlu0 %v857
    %v859 = vpop.xlane.xlu0 %858
    %v860 = vmul.f32 %v856, %v68
    %v861 = vmul.f32 %v859, %v68
    %v862 = vsub.f32 %v852, %v860
    %v863 = vsub.f32 %v853, %v861
    %v864 = vmul.f32 %v862, %v862
    %v865 = vmul.f32 %v863, %v863
    %v866 = vsel %vm61, %v864, 0.0
    %867 = vadd.xlane.f32.xlu0 %v866
    %v868 = vpop.xlane.xlu0 %867
    %v869 = vsel %vm61, %v865, 0.0
    %870 = vadd.xlane.f32.xlu0 %v869
    %v871 = vpop.xlane.xlu0 %870
    %v872 = vmul.f32 %v868, %v68
    %v873 = vmul.f32 %v871, %v68
    %v874 = vadd.f32 %v872, 1e-05
    %v875 = vadd.f32 %v873, 1e-05
    %v876 = vrsqrt.pop %v874
    %v877 = vrsqrt.pop %v875
    %v878 = vmul.f32 %v862, %v876
    %v879 = vmul.f32 %v863, %v877
    %v880 = vlaneseq
    %v881 = vshrl.u32 %v880, 7
    %v882 = vsub.s32 4, %v881
    %v883 = vrot.slane %v32, %v882
    %v884 = vmul.f32 %v878, %v883
    %v885 = vmul.f32 %v879, %v883
    %v886 = vlaneseq
    %v887 = vshrl.u32 %v886, 7
    %v888 = vsub.s32 5, %v887
    %v889 = vrot.slane %v32, %v888
    %v890 = vadd.f32 %v884, %v889
    %v891 = vadd.f32 %v885, %v889
    %v892 = vpack.c.bf16 %v891, %v890
    %v893 = vlaneseq
    %v894 = vshrl.u32 %v893, 7
    %v895 = vsub.s32 6, %v894
    %v896 = vrot.slane %v32, %v895
    %v901 = vunpack.c.l.b16 %v49
    %v902 = vunpack.c.l.b16 %v50
    %v903 = vunpack.c.l.b16 %v51
    %v904 = vunpack.c.l.b16 %v52
    %v905 = vpack.c.b16 %v902, %v901
    %v906 = vpack.c.b16 %v904, %v903
    %v910 = vsel %vm61, %v892, 0
    %912 = vmatprep.subr.bf16.mxu0 0
    %913 = vmatpush1.bf16.msra.mxu0 0
    %914 = vmatprep.subr.bf16.mxu0 0
    %915 = vmatpush1.bf16.msra.mxu0 0
    %916 = vmatprep.subr.bf16.mxu0 0
    %917 = vmatpush1.bf16.msra.mxu0 0
    %918 = vmatprep.subr.bf16.mxu0 0
    %919 = vmatpush1.bf16.msra.mxu0 0
    %920 = vmatprep.subr.bf16.mxu0 0
    %921 = vmatpush1.bf16.msra.mxu0 0
    %922 = vmatprep.subr.bf16.mxu0 0
    %923 = vmatpush1.bf16.msra.mxu0 0
    %924 = vmatprep.subr.bf16.mxu0 0
    %925 = vmatpush1.bf16.msra.mxu0 %v906
    %926 = vmatprep.subr.bf16.mxu0 0
    %927 = vmatpush1.bf16.msra.mxu0 %v905
    %928 = vmatprep.subr.bf16.mxu0 0
    %929 = vmatpush2.bf16.msra.mxu0 0
    %930 = vmatprep.subr.bf16.mxu0 0
    %931 = vmatpush2.bf16.msra.mxu0 0
    %932 = vmatprep.subr.bf16.mxu0 0
    %933 = vmatpush2.bf16.msra.mxu0 0
    %934 = vmatprep.subr.bf16.mxu0 0
    %935 = vmatpush2.bf16.msra.mxu0 0
    %936 = vmatprep.subr.bf16.mxu0 0
    %937 = vmatpush2.bf16.msra.mxu0 0
    %938 = vmatprep.subr.bf16.mxu0 0
    %939 = vmatpush2.bf16.msra.mxu0 0
    %940 = vmatprep.subr.bf16.mxu0 0
    %941 = vmatpush2.bf16.msra.mxu0 0
    %942 = vmatprep.subr.bf16.mxu0 0
    %943 = vmatpush2.bf16.msra.mxu0 0
    %944 = vmatprep.mubr.bf16.mxu0 0
    %945 = vmatmul.mubr.bf16.gmra.mxu0 %v910
    %v946 = vpop.f32.mrf.mxu0
    %v947 = vadd.f32 %v896, %v946
    %v948 = vpop.f32.mrf.mxu0
    %v949 = vpop.f32.mrf.mxu0
    %v950 = vadd.f32 %v896, %v949
    %v951 = vpop.f32.mrf.mxu0
    %952 = vdwg.mxu0
    %v953 = vmul.f32 %v947, %v947
    %v954 = vmul.f32 %v950, %v950
    %v955 = vmul.f32 %v947, %v953
    %v956 = vmul.f32 %v950, %v954
    %v957 = vmul.f32 %v955, 0.044715
    %v958 = vmul.f32 %v956, 0.044715
    %v959 = vadd.f32 %v947, %v957
    %v960 = vadd.f32 %v950, %v958
    %v961 = vmul.f32 %v959, 0.7978846
    %v962 = vmul.f32 %v960, 0.7978846
    %v963 = vtanh.pop %v961
    %v964 = vtanh.pop %v962
    %v965 = vadd.f32 %v963, 1.0
    %v966 = vadd.f32 %v964, 1.0
    %v967 = vmul.f32 %v965, 0.5
    %v968 = vmul.f32 %v966, 0.5
    %v969 = vmul.f32 %v947, %v967
    %v970 = vmul.f32 %v950, %v968
    %v971 = vpack.c.bf16 %v970, %v969
    %v980 = vunpack.c.l.b16 %v53
    %v981 = vunpack.c.l.b16 %v54
    %v982 = vunpack.c.l.b16 %v55
    %v983 = vunpack.c.l.b16 %v56
    %v984 = vunpack.c.l.b16 %v57
    %v985 = vunpack.c.l.b16 %v58
    %v986 = vunpack.c.l.b16 %v59
    %v987 = vunpack.c.l.b16 %v60
    %v988 = vpack.c.b16 %v981, %v980
    %v989 = vpack.c.b16 %v983, %v982
    %v990 = vpack.c.b16 %v985, %v984
    %v991 = vpack.c.b16 %v987, %v986
    %vm996 = vcmask 523264
    %v998 = vsel %vm996, %v971, 0
    %1000 = vmatprep.subr.bf16.mxu0 0
    %1001 = vmatpush1.bf16.msra.mxu0 0
    %1002 = vmatprep.subr.bf16.mxu0 0
    %1003 = vmatpush1.bf16.msra.mxu0 0
    %1004 = vmatprep.subr.bf16.mxu0 0
    %1005 = vmatpush1.bf16.msra.mxu0 0
    %1006 = vmatprep.subr.bf16.mxu0 0
    %1007 = vmatpush1.bf16.msra.mxu0 0
    %1008 = vmatprep.subr.bf16.mxu0 0
    %1009 = vmatpush1.bf16.msra.mxu0 %v991
    %1010 = vmatprep.subr.bf16.mxu0 0
    %1011 = vmatpush1.bf16.msra.mxu0 %v990
    %1012 = vmatprep.subr.bf16.mxu0 0
    %1013 = vmatpush1.bf16.msra.mxu0 %v989
    %1014 = vmatprep.subr.bf16.mxu0 0
    %1015 = vmatpush1.bf16.msra.mxu0 %v988
    %1016 = vmatprep.subr.bf16.mxu0 0
    %1017 = vmatpush2.bf16.msra.mxu0 0
    %1018 = vmatprep.subr.bf16.mxu0 0
    %1019 = vmatpush2.bf16.msra.mxu0 0
    %1020 = vmatprep.subr.bf16.mxu0 0
    %1021 = vmatpush2.bf16.msra.mxu0 0
    %1022 = vmatprep.subr.bf16.mxu0 0
    %1023 = vmatpush2.bf16.msra.mxu0 0
    %1024 = vmatprep.subr.bf16.mxu0 0
    %1025 = vmatpush2.bf16.msra.mxu0 0
    %1026 = vmatprep.subr.bf16.mxu0 0
    %1027 = vmatpush2.bf16.msra.mxu0 0
    %1028 = vmatprep.subr.bf16.mxu0 0
    %1029 = vmatpush2.bf16.msra.mxu0 0
    %1030 = vmatprep.subr.bf16.mxu0 0
    %1031 = vmatpush2.bf16.msra.mxu0 0
    %1032 = vmatprep.mubr.bf16.mxu0 0
    %1033 = vmatmul.mubr.bf16.gmra.mxu0 %v998
    %v1034 = vpop.f32.mrf.mxu0
    %v1035 = vadd.f32 0.0, %v1034
    %v1036 = vpop.f32.mrf.mxu0
    %v1037 = vpop.f32.mrf.mxu0
    %v1038 = vadd.f32 0.0, %v1037
    %v1039 = vpop.f32.mrf.mxu0
    %1040 = vdwg.mxu0
    %v1041 = vadd.f32 %v852, %v1035
    %v1042 = vadd.f32 %v853, %v1038
    %v1043 = vlaneseq
    %v1044 = vshrl.u32 %v1043, 7
    %v1045 = vsub.s32 7, %v1044
    %v1046 = vrot.slane %v32, %v1045
    %v1047 = vadd.f32 %v1041, %v1046
    %v1048 = vadd.f32 %v1042, %v1046
    %s1049 = scalar_lea.vmem %s1, 8
    %v1050 = vld [vmem:[%s1049] sm:$0xff]
    %s1051 = scalar_lea.vmem %s2, 112
    %v1052 = vld [vmem:[%s1051] sm:$0xf]
    %v1053 = vld [vmem:[%s1051 + $0x4] sm:$0xf]
    %v1054 = vld [vmem:[%s1051 + $0x8] sm:$0xf]
    %v1055 = vld [vmem:[%s1051 + $0xc] sm:$0xf]
    %v1056 = vld [vmem:[%s1051 + $0x10] sm:$0xf]
    %v1057 = vld [vmem:[%s1051 + $0x14] sm:$0xf]
    %v1058 = vld [vmem:[%s1051 + $0x18] sm:$0xf]
    %v1059 = vld [vmem:[%s1051 + $0x1c] sm:$0xf]
    %v1060 = vld [vmem:[%s1051 + $0x20] sm:$0xf]
    %v1061 = vld [vmem:[%s1051 + $0x24] sm:$0xf]
    %v1062 = vld [vmem:[%s1051 + $0x28] sm:$0xf]
    %v1063 = vld [vmem:[%s1051 + $0x2c] sm:$0xf]
    %v1064 = vld [vmem:[%s1051 + $0x30] sm:$0xf]
    %v1065 = vld [vmem:[%s1051 + $0x34] sm:$0xf]
    %v1066 = vld [vmem:[%s1051 + $0x38] sm:$0xf]
    %v1067 = vld [vmem:[%s1051 + $0x3c] sm:$0xf]
    %v1068 = vld [vmem:[%s1051 + $0x40] sm:$0xf]
    %v1069 = vld [vmem:[%s1051 + $0x44] sm:$0xf]
    %v1070 = vld [vmem:[%s1051 + $0x48] sm:$0xf]
    %v1071 = vld [vmem:[%s1051 + $0x4c] sm:$0xf]
    %v1072 = vld [vmem:[%s1051 + $0x50] sm:$0xf]
    %v1073 = vld [vmem:[%s1051 + $0x54] sm:$0xf]
    %v1074 = vld [vmem:[%s1051 + $0x58] sm:$0xf]
    %v1075 = vld [vmem:[%s1051 + $0x5c] sm:$0xf]
    %v1076 = vld [vmem:[%s1051 + $0x60] sm:$0xf]
    %v1077 = vld [vmem:[%s1051 + $0x64] sm:$0xf]
    %v1078 = vld [vmem:[%s1051 + $0x68] sm:$0xf]
    %v1079 = vld [vmem:[%s1051 + $0x6c] sm:$0xf]
    %v1080 = vsel %vm61, %v1047, 0.0
    %1081 = vadd.xlane.f32.xlu0 %v1080
    %v1082 = vpop.xlane.xlu0 %1081
    %v1083 = vsel %vm61, %v1048, 0.0
    %1084 = vadd.xlane.f32.xlu0 %v1083
    %v1085 = vpop.xlane.xlu0 %1084
    %v1086 = vmul.f32 %v1082, %v68
    %v1087 = vmul.f32 %v1085, %v68
    %v1088 = vsub.f32 %v1047, %v1086
    %v1089 = vsub.f32 %v1048, %v1087
    %v1090 = vmul.f32 %v1088, %v1088
    %v1091 = vmul.f32 %v1089, %v1089
    %v1092 = vsel %vm61, %v1090, 0.0
    %1093 = vadd.xlane.f32.xlu0 %v1092
    %v1094 = vpop.xlane.xlu0 %1093
    %v1095 = vsel %vm61, %v1091, 0.0
    %1096 = vadd.xlane.f32.xlu0 %v1095
    %v1097 = vpop.xlane.xlu0 %1096
    %v1098 = vmul.f32 %v1094, %v68
    %v1099 = vmul.f32 %v1097, %v68
    %v1100 = vadd.f32 %v1098, 1e-05
    %v1101 = vadd.f32 %v1099, 1e-05
    %v1102 = vrsqrt.pop %v1100
    %v1103 = vrsqrt.pop %v1101
    %v1104 = vmul.f32 %v1088, %v1102
    %v1105 = vmul.f32 %v1089, %v1103
    %v1106 = vlaneseq
    %v1107 = vshrl.u32 %v1106, 7
    %v1108 = vsub.s32 0, %v1107
    %v1109 = vrot.slane %v1050, %v1108
    %v1110 = vmul.f32 %v1104, %v1109
    %v1111 = vmul.f32 %v1105, %v1109
    %v1112 = vlaneseq
    %v1113 = vshrl.u32 %v1112, 7
    %v1114 = vsub.s32 1, %v1113
    %v1115 = vrot.slane %v1050, %v1114
    %v1116 = vadd.f32 %v1110, %v1115
    %v1117 = vadd.f32 %v1111, %v1115
    %v1118 = vpack.c.bf16 %v1117, %v1116
    %v1119 = vlaneseq
    %v1120 = vshrl.u32 %v1119, 7
    %v1121 = vsub.s32 2, %v1120
    %v1122 = vrot.slane %v1050, %v1121
    %v1127 = vunpack.c.l.b16 %v1052
    %v1128 = vunpack.c.l.b16 %v1053
    %v1129 = vunpack.c.l.b16 %v1054
    %v1130 = vunpack.c.l.b16 %v1055
    %v1131 = vpack.c.b16 %v1128, %v1127
    %v1132 = vpack.c.b16 %v1130, %v1129
    %v1136 = vsel %vm61, %v1118, 0
    %1138 = vmatprep.subr.bf16.mxu0 0
    %1139 = vmatpush1.bf16.msra.mxu0 0
    %1140 = vmatprep.subr.bf16.mxu0 0
    %1141 = vmatpush1.bf16.msra.mxu0 0
    %1142 = vmatprep.subr.bf16.mxu0 0
    %1143 = vmatpush1.bf16.msra.mxu0 0
    %1144 = vmatprep.subr.bf16.mxu0 0
    %1145 = vmatpush1.bf16.msra.mxu0 0
    %1146 = vmatprep.subr.bf16.mxu0 0
    %1147 = vmatpush1.bf16.msra.mxu0 0
    %1148 = vmatprep.subr.bf16.mxu0 0
    %1149 = vmatpush1.bf16.msra.mxu0 0
    %1150 = vmatprep.subr.bf16.mxu0 0
    %1151 = vmatpush1.bf16.msra.mxu0 %v1132
    %1152 = vmatprep.subr.bf16.mxu0 0
    %1153 = vmatpush1.bf16.msra.mxu0 %v1131
    %1154 = vmatprep.subr.bf16.mxu0 0
    %1155 = vmatpush2.bf16.msra.mxu0 0
    %1156 = vmatprep.subr.bf16.mxu0 0
    %1157 = vmatpush2.bf16.msra.mxu0 0
    %1158 = vmatprep.subr.bf16.mxu0 0
    %1159 = vmatpush2.bf16.msra.mxu0 0
    %1160 = vmatprep.subr.bf16.mxu0 0
    %1161 = vmatpush2.bf16.msra.mxu0 0
    %1162 = vmatprep.subr.bf16.mxu0 0
    %1163 = vmatpush2.bf16.msra.mxu0 0
    %1164 = vmatprep.subr.bf16.mxu0 0
    %1165 = vmatpush2.bf16.msra.mxu0 0
    %1166 = vmatprep.subr.bf16.mxu0 0
    %1167 = vmatpush2.bf16.msra.mxu0 0
    %1168 = vmatprep.subr.bf16.mxu0 0
    %1169 = vmatpush2.bf16.msra.mxu0 0
    %1170 = vmatprep.mubr.bf16.mxu0 0
    %1171 = vmatmul.mubr.bf16.gmra.mxu0 %v1136
    %v1172 = vpop.f32.mrf.mxu0
    %v1173 = vadd.f32 %v1122, %v1172
    %v1174 = vpop.f32.mrf.mxu0
    %v1175 = vpop.f32.mrf.mxu0
    %v1176 = vadd.f32 %v1122, %v1175
    %v1177 = vpop.f32.mrf.mxu0
    %1178 = vdwg.mxu0
    %v1183 = vunpack.c.l.b16 %v1056
    %v1184 = vunpack.c.l.b16 %v1057
    %v1185 = vunpack.c.l.b16 %v1058
    %v1186 = vunpack.c.l.b16 %v1059
    %v1187 = vpack.c.b16 %v1184, %v1183
    %v1188 = vpack.c.b16 %v1186, %v1185
    %1191 = vmatprep.subr.bf16.mxu0 0
    %1192 = vmatpush1.bf16.msra.mxu0 0
    %1193 = vmatprep.subr.bf16.mxu0 0
    %1194 = vmatpush1.bf16.msra.mxu0 0
    %1195 = vmatprep.subr.bf16.mxu0 0
    %1196 = vmatpush1.bf16.msra.mxu0 0
    %1197 = vmatprep.subr.bf16.mxu0 0
    %1198 = vmatpush1.bf16.msra.mxu0 0
    %1199 = vmatprep.subr.bf16.mxu0 0
    %1200 = vmatpush1.bf16.msra.mxu0 0
    %1201 = vmatprep.subr.bf16.mxu0 0
    %1202 = vmatpush1.bf16.msra.mxu0 0
    %1203 = vmatprep.subr.bf16.mxu0 0
    %1204 = vmatpush1.bf16.msra.mxu0 %v1188
    %1205 = vmatprep.subr.bf16.mxu0 0
    %1206 = vmatpush1.bf16.msra.mxu0 %v1187
    %1207 = vmatprep.subr.bf16.mxu0 0
    %1208 = vmatpush2.bf16.msra.mxu0 0
    %1209 = vmatprep.subr.bf16.mxu0 0
    %1210 = vmatpush2.bf16.msra.mxu0 0
    %1211 = vmatprep.subr.bf16.mxu0 0
    %1212 = vmatpush2.bf16.msra.mxu0 0
    %1213 = vmatprep.subr.bf16.mxu0 0
    %1214 = vmatpush2.bf16.msra.mxu0 0
    %1215 = vmatprep.subr.bf16.mxu0 0
    %1216 = vmatpush2.bf16.msra.mxu0 0
    %1217 = vmatprep.subr.bf16.mxu0 0
    %1218 = vmatpush2.bf16.msra.mxu0 0
    %1219 = vmatprep.subr.bf16.mxu0 0
    %1220 = vmatpush2.bf16.msra.mxu0 0
    %1221 = vmatprep.subr.bf16.mxu0 0
    %1222 = vmatpush2.bf16.msra.mxu0 0
    %1223 = vmatprep.mubr.bf16.mxu0 0
    %1224 = vmatmul.mubr.bf16.gmra.mxu0 %v1136
    %v1225 = vpop.f32.mrf.mxu0
    %v1226 = vadd.f32 0.0, %v1225
    %v1227 = vpop.f32.mrf.mxu0
    %v1228 = vpop.f32.mrf.mxu0
    %v1229 = vadd.f32 0.0, %v1228
    %v1230 = vpop.f32.mrf.mxu0
    %1231 = vdwg.mxu0
    %v1232 = vpack.c.bf16 %v1229, %v1226
    %v1237 = vunpack.c.l.b16 %v1060
    %v1238 = vunpack.c.l.b16 %v1061
    %v1239 = vunpack.c.l.b16 %v1062
    %v1240 = vunpack.c.l.b16 %v1063
    %v1241 = vpack.c.b16 %v1238, %v1237
    %v1242 = vpack.c.b16 %v1240, %v1239
    %v1246 = vsel %vm61, %v1232, 0
    %1248 = vmatprep.subr.bf16.mxu0 0
    %1249 = vmatpush1.bf16.msra.mxu0 0
    %1250 = vmatprep.subr.bf16.mxu0 0
    %1251 = vmatpush1.bf16.msra.mxu0 0
    %1252 = vmatprep.subr.bf16.mxu0 0
    %1253 = vmatpush1.bf16.msra.mxu0 0
    %1254 = vmatprep.subr.bf16.mxu0 0
    %1255 = vmatpush1.bf16.msra.mxu0 0
    %1256 = vmatprep.subr.bf16.mxu0 0
    %1257 = vmatpush1.bf16.msra.mxu0 0
    %1258 = vmatprep.subr.bf16.mxu0 0
    %1259 = vmatpush1.bf16.msra.mxu0 0
    %1260 = vmatprep.subr.bf16.mxu0 0
    %1261 = vmatpush1.bf16.msra.mxu0 %v1242
    %1262 = vmatprep.subr.bf16.mxu0 0
    %1263 = vmatpush1.bf16.msra.mxu0 %v1241
    %1264 = vmatprep.subr.bf16.mxu0 0
    %1265 = vmatpush2.bf16.msra.mxu0 0
    %1266 = vmatprep.subr.bf16.mxu0 0
    %1267 = vmatpush2.bf16.msra.mxu0 0
    %1268 = vmatprep.subr.bf16.mxu0 0
    %1269 = vmatpush2.bf16.msra.mxu0 0
    %1270 = vmatprep.subr.bf16.mxu0 0
    %1271 = vmatpush2.bf16.msra.mxu0 0
    %1272 = vmatprep.subr.bf16.mxu0 0
    %1273 = vmatpush2.bf16.msra.mxu0 0
    %1274 = vmatprep.subr.bf16.mxu0 0
    %1275 = vmatpush2.bf16.msra.mxu0 0
    %1276 = vmatprep.subr.bf16.mxu0 0
    %1277 = vmatpush2.bf16.msra.mxu0 0
    %1278 = vmatprep.subr.bf16.mxu0 0
    %1279 = vmatpush2.bf16.msra.mxu0 0
    %1280 = vmatprep.mubr.bf16.mxu0 0
    %1281 = vmatmul.mubr.bf16.gmra.mxu0 %v1246
    %v1282 = vpop.f32.mrf.mxu0
    %v1283 = vadd.f32 0.0, %v1282
    %v1284 = vpop.f32.mrf.mxu0
    %v1285 = vpop.f32.mrf.mxu0
    %v1286 = vadd.f32 0.0, %v1285
    %v1287 = vpop.f32.mrf.mxu0
    %1288 = vdwg.mxu0
    %v1289 = vadd.f32 %v1173, %v1283
    %v1290 = vadd.f32 %v1176, %v1286
    %v1291 = vmul.f32 %v1289, %v26
    %v1292 = vmul.f32 %v1289, %v27
    %v1293 = vmul.f32 %v1289, %v28
    %v1294 = vmul.f32 %v1289, %v29
    %1296 = vrot.lane.b32.xlu0 %v1289, 96
    %v1297 = vpop.permute.xlu0 %1296
    %v1299 = vsel %vm61, %v1291, 0
    %v1302 = vsel %vm61, %v1292, 0
    %v1305 = vsel %vm61, %v1293, 0
    %v1308 = vsel %vm61, %v1294, 0
    %v1310 = vsel %vm61, %v1297, 0
    %1312 = vmatprep.subr.mxu0 0.0
    %1313 = vmatpush1.xpose.msra.mxu0 0.0
    %1314 = vmatprep.subr.mxu0 0.0
    %1315 = vmatpush1.xpose.msra.mxu0 0.0
    %1316 = vmatprep.subr.mxu0 0.0
    %1317 = vmatpush1.xpose.msra.mxu0 0.0
    %1318 = vmatprep.subr.mxu0 0.0
    %1319 = vmatpush1.xpose.msra.mxu0 0.0
    %1320 = vmatprep.subr.mxu0 0.0
    %1321 = vmatpush1.xpose.msra.mxu0 0.0
    %1322 = vmatprep.subr.mxu0 0.0
    %1323 = vmatpush1.xpose.msra.mxu0 0.0
    %1324 = vmatprep.subr.mxu0 0.0
    %1325 = vmatpush1.xpose.msra.mxu0 0.0
    %1326 = vmatprep.subr.mxu0 0.0
    %1327 = vmatpush1.xpose.msra.mxu0 0.0
    %1328 = vmatprep.subr.mxu0 0.0
    %1329 = vmatpush1.xpose.msra.mxu0 0.0
    %1330 = vmatprep.subr.mxu0 0.0
    %1331 = vmatpush1.xpose.msra.mxu0 0.0
    %1332 = vmatprep.subr.mxu0 0.0
    %1333 = vmatpush1.xpose.msra.mxu0 0.0
    %1334 = vmatprep.subr.mxu0 0.0
    %1335 = vmatpush1.xpose.msra.mxu0 0.0
    %1336 = vmatprep.subr.mxu0 0.0
    %1337 = vmatpush1.xpose.msra.mxu0 0.0
    %1338 = vmatprep.subr.mxu0 0.0
    %1339 = vmatpush1.xpose.msra.mxu0 0.0
    %1340 = vmatprep.subr.mxu0 0.0
    %1341 = vmatpush1.xpose.msra.mxu0 0.0
    %1342 = vmatprep.subr.mxu0 0.0
    %1343 = vmatpush1.xpose.msra.mxu0 %v1310
    %1344 = vmatprep.subr.mxu0 0.0
    %1345 = vmatpush2.xpose.msra.mxu0 0.0
    %1346 = vmatprep.subr.mxu0 0.0
    %1347 = vmatpush2.xpose.msra.mxu0 0.0
    %1348 = vmatprep.subr.mxu0 0.0
    %1349 = vmatpush2.xpose.msra.mxu0 0.0
    %1350 = vmatprep.subr.mxu0 0.0
    %1351 = vmatpush2.xpose.msra.mxu0 0.0
    %1352 = vmatprep.subr.mxu0 0.0
    %1353 = vmatpush2.xpose.msra.mxu0 0.0
    %1354 = vmatprep.subr.mxu0 0.0
    %1355 = vmatpush2.xpose.msra.mxu0 0.0
    %1356 = vmatprep.subr.mxu0 0.0
    %1357 = vmatpush2.xpose.msra.mxu0 0.0
    %1358 = vmatprep.subr.mxu0 0.0
    %1359 = vmatpush2.xpose.msra.mxu0 0.0
    %1360 = vmatprep.subr.mxu0 0.0
    %1361 = vmatpush2.xpose.msra.mxu0 0.0
    %1362 = vmatprep.subr.mxu0 0.0
    %1363 = vmatpush2.xpose.msra.mxu0 0.0
    %1364 = vmatprep.subr.mxu0 0.0
    %1365 = vmatpush2.xpose.msra.mxu0 0.0
    %1366 = vmatprep.subr.mxu0 0.0
    %1367 = vmatpush2.xpose.msra.mxu0 0.0
    %1368 = vmatprep.subr.mxu0 0.0
    %1369 = vmatpush2.xpose.msra.mxu0 0.0
    %1370 = vmatprep.subr.mxu0 0.0
    %1371 = vmatpush2.xpose.msra.mxu0 0.0
    %1372 = vmatprep.subr.mxu0 0.0
    %1373 = vmatpush2.xpose.msra.mxu0 0.0
    %1374 = vmatprep.subr.mxu0 0.0
    %1375 = vmatpush2.xpose.msra.mxu0 0.0
    %1376 = vmatprep.mubr.f32.mxu0 0.0
    %1377 = vmatmul.mubr.f32.gmra.mxu0 %v1299
    %v1378 = vpop.f32.mrf.mxu0
    %v1379 = vadd.f32 0.0, %v1378
    %v1380 = vpop.f32.mrf.mxu0
    %1381 = vmatprep.mubr.f32.mxu0 0.0
    %1382 = vmatmul.mubr.f32.gmra.mxu0 %v1302
    %v1383 = vpop.f32.mrf.mxu0
    %v1384 = vadd.f32 0.0, %v1383
    %v1385 = vpop.f32.mrf.mxu0
    %1386 = vmatprep.mubr.f32.mxu0 0.0
    %1387 = vmatmul.mubr.f32.gmra.mxu0 %v1305
    %v1388 = vpop.f32.mrf.mxu0
    %v1389 = vadd.f32 0.0, %v1388
    %v1390 = vpop.f32.mrf.mxu0
    %1391 = vmatprep.mubr.f32.mxu0 0.0
    %1392 = vmatmul.mubr.f32.gmra.mxu0 %v1308
    %v1393 = vpop.f32.mrf.mxu0
    %v1394 = vadd.f32 0.0, %v1393
    %v1395 = vpop.f32.mrf.mxu0
    %1396 = vdwg.mxu0
    %v1397 = vsel %vm380, %v1379, -inf
    %1398 = vmax.xlane.f32.xlu0 %v1397
    %v1399 = vpop.xlane.xlu0 %1398
    %v1400 = vsel %vm380, %v1384, -inf
    %1401 = vmax.xlane.f32.xlu0 %v1400
    %v1402 = vpop.xlane.xlu0 %1401
    %v1403 = vsel %vm380, %v1389, -inf
    %1404 = vmax.xlane.f32.xlu0 %v1403
    %v1405 = vpop.xlane.xlu0 %1404
    %v1406 = vsel %vm380, %v1394, -inf
    %1407 = vmax.xlane.f32.xlu0 %v1406
    %v1408 = vpop.xlane.xlu0 %1407
    %v1409 = vsub.f32 %v1379, %v1399
    %v1410 = vsub.f32 %v1384, %v1402
    %v1411 = vsub.f32 %v1389, %v1405
    %v1412 = vsub.f32 %v1394, %v1408
    %v1413 = vmul.f32 %v1409, 1.442695
    %v1414 = vpow.pop %v1413
    %v1415 = vmul.f32 %v1410, 1.442695
    %v1416 = vpow.pop %v1415
    %v1417 = vmul.f32 %v1411, 1.442695
    %v1418 = vpow.pop %v1417
    %v1419 = vmul.f32 %v1412, 1.442695
    %v1420 = vpow.pop %v1419
    %v1421 = vsel %vm380, %v1414, 0.0
    %1422 = vadd.xlane.f32.xlu0 %v1421
    %v1423 = vpop.xlane.xlu0 %1422
    %v1424 = vsel %vm380, %v1416, 0.0
    %1425 = vadd.xlane.f32.xlu0 %v1424
    %v1426 = vpop.xlane.xlu0 %1425
    %v1427 = vsel %vm380, %v1418, 0.0
    %1428 = vadd.xlane.f32.xlu0 %v1427
    %v1429 = vpop.xlane.xlu0 %1428
    %v1430 = vsel %vm380, %v1420, 0.0
    %1431 = vadd.xlane.f32.xlu0 %v1430
    %v1432 = vpop.xlane.xlu0 %1431
    %v1433 = vrcp.pop %v1423
    %v1434 = vmul.f32 %v1414, %v1433
    %v1435 = vrcp.pop %v1426
    %v1436 = vmul.f32 %v1416, %v1435
    %v1437 = vrcp.pop %v1429
    %v1438 = vmul.f32 %v1418, %v1437
    %v1439 = vrcp.pop %v1432
    %v1440 = vmul.f32 %v1420, %v1439
    %1441 = vrot.lane.b32.xlu0 %v1289, 64
    %v1442 = vpop.permute.xlu0 %1441
    %v1445 = vsel %vm380, %v1434, 0
    %v1448 = vsel %vm380, %v1436, 0
    %v1451 = vsel %vm380, %v1438, 0
    %v1454 = vsel %vm380, %v1440, 0
    %1456 = vmatprep.subr.mxu0 0.0
    %1457 = vmatpush1.msra.mxu0 0.0
    %1458 = vmatprep.subr.mxu0 0.0
    %1459 = vmatpush1.msra.mxu0 0.0
    %1460 = vmatprep.subr.mxu0 0.0
    %1461 = vmatpush1.msra.mxu0 0.0
    %1462 = vmatprep.subr.mxu0 0.0
    %1463 = vmatpush1.msra.mxu0 0.0
    %1464 = vmatprep.subr.mxu0 0.0
    %1465 = vmatpush1.msra.mxu0 0.0
    %1466 = vmatprep.subr.mxu0 0.0
    %1467 = vmatpush1.msra.mxu0 0.0
    %1468 = vmatprep.subr.mxu0 0.0
    %1469 = vmatpush1.msra.mxu0 0.0
    %1470 = vmatprep.subr.mxu0 0.0
    %1471 = vmatpush1.msra.mxu0 0.0
    %1472 = vmatprep.subr.mxu0 0.0
    %1473 = vmatpush1.msra.mxu0 0.0
    %1474 = vmatprep.subr.mxu0 0.0
    %1475 = vmatpush1.msra.mxu0 0.0
    %1476 = vmatprep.subr.mxu0 0.0
    %1477 = vmatpush1.msra.mxu0 0.0
    %1478 = vmatprep.subr.mxu0 0.0
    %1479 = vmatpush1.msra.mxu0 0.0
    %1480 = vmatprep.subr.mxu0 0.0
    %1481 = vmatpush1.msra.mxu0 0.0
    %1482 = vmatprep.subr.mxu0 0.0
    %1483 = vmatpush1.msra.mxu0 0.0
    %1484 = vmatprep.subr.mxu0 0.0
    %1485 = vmatpush1.msra.mxu0 0.0
    %1486 = vmatprep.subr.mxu0 0.0
    %1487 = vmatpush1.msra.mxu0 %v1442
    %1488 = vmatprep.subr.mxu0 0.0
    %1489 = vmatpush2.msra.mxu0 0.0
    %1490 = vmatprep.subr.mxu0 0.0
    %1491 = vmatpush2.msra.mxu0 0.0
    %1492 = vmatprep.subr.mxu0 0.0
    %1493 = vmatpush2.msra.mxu0 0.0
    %1494 = vmatprep.subr.mxu0 0.0
    %1495 = vmatpush2.msra.mxu0 0.0
    %1496 = vmatprep.subr.mxu0 0.0
    %1497 = vmatpush2.msra.mxu0 0.0
    %1498 = vmatprep.subr.mxu0 0.0
    %1499 = vmatpush2.msra.mxu0 0.0
    %1500 = vmatprep.subr.mxu0 0.0
    %1501 = vmatpush2.msra.mxu0 0.0
    %1502 = vmatprep.subr.mxu0 0.0
    %1503 = vmatpush2.msra.mxu0 0.0
    %1504 = vmatprep.subr.mxu0 0.0
    %1505 = vmatpush2.msra.mxu0 0.0
    %1506 = vmatprep.subr.mxu0 0.0
    %1507 = vmatpush2.msra.mxu0 0.0
    %1508 = vmatprep.subr.mxu0 0.0
    %1509 = vmatpush2.msra.mxu0 0.0
    %1510 = vmatprep.subr.mxu0 0.0
    %1511 = vmatpush2.msra.mxu0 0.0
    %1512 = vmatprep.subr.mxu0 0.0
    %1513 = vmatpush2.msra.mxu0 0.0
    %1514 = vmatprep.subr.mxu0 0.0
    %1515 = vmatpush2.msra.mxu0 0.0
    %1516 = vmatprep.subr.mxu0 0.0
    %1517 = vmatpush2.msra.mxu0 0.0
    %1518 = vmatprep.subr.mxu0 0.0
    %1519 = vmatpush2.msra.mxu0 0.0
    %1520 = vmatprep.mubr.f32.mxu0 0.0
    %1521 = vmatmul.mubr.f32.gmra.mxu0 %v1445
    %v1522 = vpop.f32.mrf.mxu0
    %v1523 = vadd.f32 0.0, %v1522
    %v1524 = vpop.f32.mrf.mxu0
    %1525 = vmatprep.mubr.f32.mxu0 0.0
    %1526 = vmatmul.mubr.f32.gmra.mxu0 %v1448
    %v1527 = vpop.f32.mrf.mxu0
    %v1528 = vadd.f32 0.0, %v1527
    %v1529 = vpop.f32.mrf.mxu0
    %1530 = vmatprep.mubr.f32.mxu0 0.0
    %1531 = vmatmul.mubr.f32.gmra.mxu0 %v1451
    %v1532 = vpop.f32.mrf.mxu0
    %v1533 = vadd.f32 0.0, %v1532
    %v1534 = vpop.f32.mrf.mxu0
    %1535 = vmatprep.mubr.f32.mxu0 0.0
    %1536 = vmatmul.mubr.f32.gmra.mxu0 %v1454
    %v1537 = vpop.f32.mrf.mxu0
    %v1538 = vadd.f32 0.0, %v1537
    %v1539 = vpop.f32.mrf.mxu0
    %1540 = vdwg.mxu0
    %v1541 = vmul.f32 %v1523, %v26
    %v1542 = vmul.f32 %v1528, %v27
    %v1543 = vmul.f32 %v1533, %v28
    %v1544 = vmul.f32 %v1538, %v29
    %v1545 = vadd.f32 %v1541, %v1542
    %v1546 = vadd.f32 %v1545, %v1543
    %v1547 = vadd.f32 %v1546, %v1544
    %v1548 = vmul.f32 %v1290, %v26
    %v1549 = vmul.f32 %v1290, %v27
    %v1550 = vmul.f32 %v1290, %v28
    %v1551 = vmul.f32 %v1290, %v29
    %1553 = vrot.lane.b32.xlu0 %v1290, 96
    %v1554 = vpop.permute.xlu0 %1553
    %v1556 = vsel %vm61, %v1548, 0
    %v1559 = vsel %vm61, %v1549, 0
    %v1562 = vsel %vm61, %v1550, 0
    %v1565 = vsel %vm61, %v1551, 0
    %v1567 = vsel %vm61, %v1554, 0
    %1569 = vmatprep.subr.mxu0 0.0
    %1570 = vmatpush1.xpose.msra.mxu0 0.0
    %1571 = vmatprep.subr.mxu0 0.0
    %1572 = vmatpush1.xpose.msra.mxu0 0.0
    %1573 = vmatprep.subr.mxu0 0.0
    %1574 = vmatpush1.xpose.msra.mxu0 0.0
    %1575 = vmatprep.subr.mxu0 0.0
    %1576 = vmatpush1.xpose.msra.mxu0 0.0
    %1577 = vmatprep.subr.mxu0 0.0
    %1578 = vmatpush1.xpose.msra.mxu0 0.0
    %1579 = vmatprep.subr.mxu0 0.0
    %1580 = vmatpush1.xpose.msra.mxu0 0.0
    %1581 = vmatprep.subr.mxu0 0.0
    %1582 = vmatpush1.xpose.msra.mxu0 0.0
    %1583 = vmatprep.subr.mxu0 0.0
    %1584 = vmatpush1.xpose.msra.mxu0 0.0
    %1585 = vmatprep.subr.mxu0 0.0
    %1586 = vmatpush1.xpose.msra.mxu0 0.0
    %1587 = vmatprep.subr.mxu0 0.0
    %1588 = vmatpush1.xpose.msra.mxu0 0.0
    %1589 = vmatprep.subr.mxu0 0.0
    %1590 = vmatpush1.xpose.msra.mxu0 0.0
    %1591 = vmatprep.subr.mxu0 0.0
    %1592 = vmatpush1.xpose.msra.mxu0 0.0
    %1593 = vmatprep.subr.mxu0 0.0
    %1594 = vmatpush1.xpose.msra.mxu0 0.0
    %1595 = vmatprep.subr.mxu0 0.0
    %1596 = vmatpush1.xpose.msra.mxu0 0.0
    %1597 = vmatprep.subr.mxu0 0.0
    %1598 = vmatpush1.xpose.msra.mxu0 0.0
    %1599 = vmatprep.subr.mxu0 0.0
    %1600 = vmatpush1.xpose.msra.mxu0 %v1567
    %1601 = vmatprep.subr.mxu0 0.0
    %1602 = vmatpush2.xpose.msra.mxu0 0.0
    %1603 = vmatprep.subr.mxu0 0.0
    %1604 = vmatpush2.xpose.msra.mxu0 0.0
    %1605 = vmatprep.subr.mxu0 0.0
    %1606 = vmatpush2.xpose.msra.mxu0 0.0
    %1607 = vmatprep.subr.mxu0 0.0
    %1608 = vmatpush2.xpose.msra.mxu0 0.0
    %1609 = vmatprep.subr.mxu0 0.0
    %1610 = vmatpush2.xpose.msra.mxu0 0.0
    %1611 = vmatprep.subr.mxu0 0.0
    %1612 = vmatpush2.xpose.msra.mxu0 0.0
    %1613 = vmatprep.subr.mxu0 0.0
    %1614 = vmatpush2.xpose.msra.mxu0 0.0
    %1615 = vmatprep.subr.mxu0 0.0
    %1616 = vmatpush2.xpose.msra.mxu0 0.0
    %1617 = vmatprep.subr.mxu0 0.0
    %1618 = vmatpush2.xpose.msra.mxu0 0.0
    %1619 = vmatprep.subr.mxu0 0.0
    %1620 = vmatpush2.xpose.msra.mxu0 0.0
    %1621 = vmatprep.subr.mxu0 0.0
    %1622 = vmatpush2.xpose.msra.mxu0 0.0
    %1623 = vmatprep.subr.mxu0 0.0
    %1624 = vmatpush2.xpose.msra.mxu0 0.0
    %1625 = vmatprep.subr.mxu0 0.0
    %1626 = vmatpush2.xpose.msra.mxu0 0.0
    %1627 = vmatprep.subr.mxu0 0.0
    %1628 = vmatpush2.xpose.msra.mxu0 0.0
    %1629 = vmatprep.subr.mxu0 0.0
    %1630 = vmatpush2.xpose.msra.mxu0 0.0
    %1631 = vmatprep.subr.mxu0 0.0
    %1632 = vmatpush2.xpose.msra.mxu0 0.0
    %1633 = vmatprep.mubr.f32.mxu0 0.0
    %1634 = vmatmul.mubr.f32.gmra.mxu0 %v1556
    %v1635 = vpop.f32.mrf.mxu0
    %v1636 = vadd.f32 0.0, %v1635
    %v1637 = vpop.f32.mrf.mxu0
    %1638 = vmatprep.mubr.f32.mxu0 0.0
    %1639 = vmatmul.mubr.f32.gmra.mxu0 %v1559
    %v1640 = vpop.f32.mrf.mxu0
    %v1641 = vadd.f32 0.0, %v1640
    %v1642 = vpop.f32.mrf.mxu0
    %1643 = vmatprep.mubr.f32.mxu0 0.0
    %1644 = vmatmul.mubr.f32.gmra.mxu0 %v1562
    %v1645 = vpop.f32.mrf.mxu0
    %v1646 = vadd.f32 0.0, %v1645
    %v1647 = vpop.f32.mrf.mxu0
    %1648 = vmatprep.mubr.f32.mxu0 0.0
    %1649 = vmatmul.mubr.f32.gmra.mxu0 %v1565
    %v1650 = vpop.f32.mrf.mxu0
    %v1651 = vadd.f32 0.0, %v1650
    %v1652 = vpop.f32.mrf.mxu0
    %1653 = vdwg.mxu0
    %v1654 = vsel %vm380, %v1636, -inf
    %1655 = vmax.xlane.f32.xlu0 %v1654
    %v1656 = vpop.xlane.xlu0 %1655
    %v1657 = vsel %vm380, %v1641, -inf
    %1658 = vmax.xlane.f32.xlu0 %v1657
    %v1659 = vpop.xlane.xlu0 %1658
    %v1660 = vsel %vm380, %v1646, -inf
    %1661 = vmax.xlane.f32.xlu0 %v1660
    %v1662 = vpop.xlane.xlu0 %1661
    %v1663 = vsel %vm380, %v1651, -inf
    %1664 = vmax.xlane.f32.xlu0 %v1663
    %v1665 = vpop.xlane.xlu0 %1664
    %v1666 = vsub.f32 %v1636, %v1656
    %v1667 = vsub.f32 %v1641, %v1659
    %v1668 = vsub.f32 %v1646, %v1662
    %v1669 = vsub.f32 %v1651, %v1665
    %v1670 = vmul.f32 %v1666, 1.442695
    %v1671 = vpow.pop %v1670
    %v1672 = vmul.f32 %v1667, 1.442695
    %v1673 = vpow.pop %v1672
    %v1674 = vmul.f32 %v1668, 1.442695
    %v1675 = vpow.pop %v1674
    %v1676 = vmul.f32 %v1669, 1.442695
    %v1677 = vpow.pop %v1676
    %v1678 = vsel %vm380, %v1671, 0.0
    %1679 = vadd.xlane.f32.xlu0 %v1678
    %v1680 = vpop.xlane.xlu0 %1679
    %v1681 = vsel %vm380, %v1673, 0.0
    %1682 = vadd.xlane.f32.xlu0 %v1681
    %v1683 = vpop.xlane.xlu0 %1682
    %v1684 = vsel %vm380, %v1675, 0.0
    %1685 = vadd.xlane.f32.xlu0 %v1684
    %v1686 = vpop.xlane.xlu0 %1685
    %v1687 = vsel %vm380, %v1677, 0.0
    %1688 = vadd.xlane.f32.xlu0 %v1687
    %v1689 = vpop.xlane.xlu0 %1688
    %v1690 = vrcp.pop %v1680
    %v1691 = vmul.f32 %v1671, %v1690
    %v1692 = vrcp.pop %v1683
    %v1693 = vmul.f32 %v1673, %v1692
    %v1694 = vrcp.pop %v1686
    %v1695 = vmul.f32 %v1675, %v1694
    %v1696 = vrcp.pop %v1689
    %v1697 = vmul.f32 %v1677, %v1696
    %1698 = vrot.lane.b32.xlu0 %v1290, 64
    %v1699 = vpop.permute.xlu0 %1698
    %v1702 = vsel %vm380, %v1691, 0
    %v1705 = vsel %vm380, %v1693, 0
    %v1708 = vsel %vm380, %v1695, 0
    %v1711 = vsel %vm380, %v1697, 0
    %1713 = vmatprep.subr.mxu0 0.0
    %1714 = vmatpush1.msra.mxu0 0.0
    %1715 = vmatprep.subr.mxu0 0.0
    %1716 = vmatpush1.msra.mxu0 0.0
    %1717 = vmatprep.subr.mxu0 0.0
    %1718 = vmatpush1.msra.mxu0 0.0
    %1719 = vmatprep.subr.mxu0 0.0
    %1720 = vmatpush1.msra.mxu0 0.0
    %1721 = vmatprep.subr.mxu0 0.0
    %1722 = vmatpush1.msra.mxu0 0.0
    %1723 = vmatprep.subr.mxu0 0.0
    %1724 = vmatpush1.msra.mxu0 0.0
    %1725 = vmatprep.subr.mxu0 0.0
    %1726 = vmatpush1.msra.mxu0 0.0
    %1727 = vmatprep.subr.mxu0 0.0
    %1728 = vmatpush1.msra.mxu0 0.0
    %1729 = vmatprep.subr.mxu0 0.0
    %1730 = vmatpush1.msra.mxu0 0.0
    %1731 = vmatprep.subr.mxu0 0.0
    %1732 = vmatpush1.msra.mxu0 0.0
    %1733 = vmatprep.subr.mxu0 0.0
    %1734 = vmatpush1.msra.mxu0 0.0
    %1735 = vmatprep.subr.mxu0 0.0
    %1736 = vmatpush1.msra.mxu0 0.0
    %1737 = vmatprep.subr.mxu0 0.0
    %1738 = vmatpush1.msra.mxu0 0.0
    %1739 = vmatprep.subr.mxu0 0.0
    %1740 = vmatpush1.msra.mxu0 0.0
    %1741 = vmatprep.subr.mxu0 0.0
    %1742 = vmatpush1.msra.mxu0 0.0
    %1743 = vmatprep.subr.mxu0 0.0
    %1744 = vmatpush1.msra.mxu0 %v1699
    %1745 = vmatprep.subr.mxu0 0.0
    %1746 = vmatpush2.msra.mxu0 0.0
    %1747 = vmatprep.subr.mxu0 0.0
    %1748 = vmatpush2.msra.mxu0 0.0
    %1749 = vmatprep.subr.mxu0 0.0
    %1750 = vmatpush2.msra.mxu0 0.0
    %1751 = vmatprep.subr.mxu0 0.0
    %1752 = vmatpush2.msra.mxu0 0.0
    %1753 = vmatprep.subr.mxu0 0.0
    %1754 = vmatpush2.msra.mxu0 0.0
    %1755 = vmatprep.subr.mxu0 0.0
    %1756 = vmatpush2.msra.mxu0 0.0
    %1757 = vmatprep.subr.mxu0 0.0
    %1758 = vmatpush2.msra.mxu0 0.0
    %1759 = vmatprep.subr.mxu0 0.0
    %1760 = vmatpush2.msra.mxu0 0.0
    %1761 = vmatprep.subr.mxu0 0.0
    %1762 = vmatpush2.msra.mxu0 0.0
    %1763 = vmatprep.subr.mxu0 0.0
    %1764 = vmatpush2.msra.mxu0 0.0
    %1765 = vmatprep.subr.mxu0 0.0
    %1766 = vmatpush2.msra.mxu0 0.0
    %1767 = vmatprep.subr.mxu0 0.0
    %1768 = vmatpush2.msra.mxu0 0.0
    %1769 = vmatprep.subr.mxu0 0.0
    %1770 = vmatpush2.msra.mxu0 0.0
    %1771 = vmatprep.subr.mxu0 0.0
    %1772 = vmatpush2.msra.mxu0 0.0
    %1773 = vmatprep.subr.mxu0 0.0
    %1774 = vmatpush2.msra.mxu0 0.0
    %1775 = vmatprep.subr.mxu0 0.0
    %1776 = vmatpush2.msra.mxu0 0.0
    %1777 = vmatprep.mubr.f32.mxu0 0.0
    %1778 = vmatmul.mubr.f32.gmra.mxu0 %v1702
    %v1779 = vpop.f32.mrf.mxu0
    %v1780 = vadd.f32 0.0, %v1779
    %v1781 = vpop.f32.mrf.mxu0
    %1782 = vmatprep.mubr.f32.mxu0 0.0
    %1783 = vmatmul.mubr.f32.gmra.mxu0 %v1705
    %v1784 = vpop.f32.mrf.mxu0
    %v1785 = vadd.f32 0.0, %v1784
    %v1786 = vpop.f32.mrf.mxu0
    %1787 = vmatprep.mubr.f32.mxu0 0.0
    %1788 = vmatmul.mubr.f32.gmra.mxu0 %v1708
    %v1789 = vpop.f32.mrf.mxu0
    %v1790 = vadd.f32 0.0, %v1789
    %v1791 = vpop.f32.mrf.mxu0
    %1792 = vmatprep.mubr.f32.mxu0 0.0
    %1793 = vmatmul.mubr.f32.gmra.mxu0 %v1711
    %v1794 = vpop.f32.mrf.mxu0
    %v1795 = vadd.f32 0.0, %v1794
    %v1796 = vpop.f32.mrf.mxu0
    %1797 = vdwg.mxu0
    %v1798 = vmul.f32 %v1780, %v26
    %v1799 = vmul.f32 %v1785, %v27
    %v1800 = vmul.f32 %v1790, %v28
    %v1801 = vmul.f32 %v1795, %v29
    %v1802 = vadd.f32 %v1798, %v1799
    %v1803 = vadd.f32 %v1802, %v1800
    %v1804 = vadd.f32 %v1803, %v1801
    %v1805 = vpack.c.bf16 %v1804, %v1547
    %v1810 = vunpack.c.l.b16 %v1064
    %v1811 = vunpack.c.l.b16 %v1065
    %v1812 = vunpack.c.l.b16 %v1066
    %v1813 = vunpack.c.l.b16 %v1067
    %v1814 = vpack.c.b16 %v1811, %v1810
    %v1815 = vpack.c.b16 %v1813, %v1812
    %v1819 = vsel %vm61, %v1805, 0
    %1821 = vmatprep.subr.bf16.mxu0 0
    %1822 = vmatpush1.bf16.msra.mxu0 0
    %1823 = vmatprep.subr.bf16.mxu0 0
    %1824 = vmatpush1.bf16.msra.mxu0 0
    %1825 = vmatprep.subr.bf16.mxu0 0
    %1826 = vmatpush1.bf16.msra.mxu0 0
    %1827 = vmatprep.subr.bf16.mxu0 0
    %1828 = vmatpush1.bf16.msra.mxu0 0
    %1829 = vmatprep.subr.bf16.mxu0 0
    %1830 = vmatpush1.bf16.msra.mxu0 0
    %1831 = vmatprep.subr.bf16.mxu0 0
    %1832 = vmatpush1.bf16.msra.mxu0 0
    %1833 = vmatprep.subr.bf16.mxu0 0
    %1834 = vmatpush1.bf16.msra.mxu0 %v1815
    %1835 = vmatprep.subr.bf16.mxu0 0
    %1836 = vmatpush1.bf16.msra.mxu0 %v1814
    %1837 = vmatprep.subr.bf16.mxu0 0
    %1838 = vmatpush2.bf16.msra.mxu0 0
    %1839 = vmatprep.subr.bf16.mxu0 0
    %1840 = vmatpush2.bf16.msra.mxu0 0
    %1841 = vmatprep.subr.bf16.mxu0 0
    %1842 = vmatpush2.bf16.msra.mxu0 0
    %1843 = vmatprep.subr.bf16.mxu0 0
    %1844 = vmatpush2.bf16.msra.mxu0 0
    %1845 = vmatprep.subr.bf16.mxu0 0
    %1846 = vmatpush2.bf16.msra.mxu0 0
    %1847 = vmatprep.subr.bf16.mxu0 0
    %1848 = vmatpush2.bf16.msra.mxu0 0
    %1849 = vmatprep.subr.bf16.mxu0 0
    %1850 = vmatpush2.bf16.msra.mxu0 0
    %1851 = vmatprep.subr.bf16.mxu0 0
    %1852 = vmatpush2.bf16.msra.mxu0 0
    %1853 = vmatprep.mubr.bf16.mxu0 0
    %1854 = vmatmul.mubr.bf16.gmra.mxu0 %v1819
    %v1855 = vpop.f32.mrf.mxu0
    %v1856 = vadd.f32 0.0, %v1855
    %v1857 = vpop.f32.mrf.mxu0
    %v1858 = vpop.f32.mrf.mxu0
    %v1859 = vadd.f32 0.0, %v1858
    %v1860 = vpop.f32.mrf.mxu0
    %1861 = vdwg.mxu0
    %v1862 = vadd.f32 %v1047, %v1856
    %v1863 = vadd.f32 %v1048, %v1859
    %v1864 = vlaneseq
    %v1865 = vshrl.u32 %v1864, 7
    %v1866 = vsub.s32 3, %v1865
    %v1867 = vrot.slane %v1050, %v1866
    %v1868 = vadd.f32 %v1862, %v1867
    %v1869 = vadd.f32 %v1863, %v1867
    %v1870 = vsel %vm61, %v1868, 0.0
    %1871 = vadd.xlane.f32.xlu0 %v1870
    %v1872 = vpop.xlane.xlu0 %1871
    %v1873 = vsel %vm61, %v1869, 0.0
    %1874 = vadd.xlane.f32.xlu0 %v1873
    %v1875 = vpop.xlane.xlu0 %1874
    %v1876 = vmul.f32 %v1872, %v68
    %v1877 = vmul.f32 %v1875, %v68
    %v1878 = vsub.f32 %v1868, %v1876
    %v1879 = vsub.f32 %v1869, %v1877
    %v1880 = vmul.f32 %v1878, %v1878
    %v1881 = vmul.f32 %v1879, %v1879
    %v1882 = vsel %vm61, %v1880, 0.0
    %1883 = vadd.xlane.f32.xlu0 %v1882
    %v1884 = vpop.xlane.xlu0 %1883
    %v1885 = vsel %vm61, %v1881, 0.0
    %1886 = vadd.xlane.f32.xlu0 %v1885
    %v1887 = vpop.xlane.xlu0 %1886
    %v1888 = vmul.f32 %v1884, %v68
    %v1889 = vmul.f32 %v1887, %v68
    %v1890 = vadd.f32 %v1888, 1e-05
    %v1891 = vadd.f32 %v1889, 1e-05
    %v1892 = vrsqrt.pop %v1890
    %v1893 = vrsqrt.pop %v1891
    %v1894 = vmul.f32 %v1878, %v1892
    %v1895 = vmul.f32 %v1879, %v1893
    %v1896 = vlaneseq
    %v1897 = vshrl.u32 %v1896, 7
    %v1898 = vsub.s32 4, %v1897
    %v1899 = vrot.slane %v1050, %v1898
    %v1900 = vmul.f32 %v1894, %v1899
    %v1901 = vmul.f32 %v1895, %v1899
    %v1902 = vlaneseq
    %v1903 = vshrl.u32 %v1902, 7
    %v1904 = vsub.s32 5, %v1903
    %v1905 = vrot.slane %v1050, %v1904
    %v1906 = vadd.f32 %v1900, %v1905
    %v1907 = vadd.f32 %v1901, %v1905
    %v1908 = vpack.c.bf16 %v1907, %v1906
    %v1909 = vlaneseq
    %v1910 = vshrl.u32 %v1909, 7
    %v1911 = vsub.s32 6, %v1910
    %v1912 = vrot.slane %v1050, %v1911
    %v1917 = vunpack.c.l.b16 %v1068
    %v1918 = vunpack.c.l.b16 %v1069
    %v1919 = vunpack.c.l.b16 %v1070
    %v1920 = vunpack.c.l.b16 %v1071
    %v1921 = vpack.c.b16 %v1918, %v1917
    %v1922 = vpack.c.b16 %v1920, %v1919
    %v1926 = vsel %vm61, %v1908, 0
    %1928 = vmatprep.subr.bf16.mxu0 0
    %1929 = vmatpush1.bf16.msra.mxu0 0
    %1930 = vmatprep.subr.bf16.mxu0 0
    %1931 = vmatpush1.bf16.msra.mxu0 0
    %1932 = vmatprep.subr.bf16.mxu0 0
    %1933 = vmatpush1.bf16.msra.mxu0 0
    %1934 = vmatprep.subr.bf16.mxu0 0
    %1935 = vmatpush1.bf16.msra.mxu0 0
    %1936 = vmatprep.subr.bf16.mxu0 0
    %1937 = vmatpush1.bf16.msra.mxu0 0
    %1938 = vmatprep.subr.bf16.mxu0 0
    %1939 = vmatpush1.bf16.msra.mxu0 0
    %1940 = vmatprep.subr.bf16.mxu0 0
    %1941 = vmatpush1.bf16.msra.mxu0 %v1922
    %1942 = vmatprep.subr.bf16.mxu0 0
    %1943 = vmatpush1.bf16.msra.mxu0 %v1921
    %1944 = vmatprep.subr.bf16.mxu0 0
    %1945 = vmatpush2.bf16.msra.mxu0 0
    %1946 = vmatprep.subr.bf16.mxu0 0
    %1947 = vmatpush2.bf16.msra.mxu0 0
    %1948 = vmatprep.subr.bf16.mxu0 0
    %1949 = vmatpush2.bf16.msra.mxu0 0
    %1950 = vmatprep.subr.bf16.mxu0 0
    %1951 = vmatpush2.bf16.msra.mxu0 0
    %1952 = vmatprep.subr.bf16.mxu0 0
    %1953 = vmatpush2.bf16.msra.mxu0 0
    %1954 = vmatprep.subr.bf16.mxu0 0
    %1955 = vmatpush2.bf16.msra.mxu0 0
    %1956 = vmatprep.subr.bf16.mxu0 0
    %1957 = vmatpush2.bf16.msra.mxu0 0
    %1958 = vmatprep.subr.bf16.mxu0 0
    %1959 = vmatpush2.bf16.msra.mxu0 0
    %1960 = vmatprep.mubr.bf16.mxu0 0
    %1961 = vmatmul.mubr.bf16.gmra.mxu0 %v1926
    %v1962 = vpop.f32.mrf.mxu0
    %v1963 = vadd.f32 %v1912, %v1962
    %v1964 = vpop.f32.mrf.mxu0
    %v1965 = vpop.f32.mrf.mxu0
    %v1966 = vadd.f32 %v1912, %v1965
    %v1967 = vpop.f32.mrf.mxu0
    %1968 = vdwg.mxu0
    %v1969 = vmul.f32 %v1963, %v1963
    %v1970 = vmul.f32 %v1966, %v1966
    %v1971 = vmul.f32 %v1963, %v1969
    %v1972 = vmul.f32 %v1966, %v1970
    %v1973 = vmul.f32 %v1971, 0.044715
    %v1974 = vmul.f32 %v1972, 0.044715
    %v1975 = vadd.f32 %v1963, %v1973
    %v1976 = vadd.f32 %v1966, %v1974
    %v1977 = vmul.f32 %v1975, 0.7978846
    %v1978 = vmul.f32 %v1976, 0.7978846
    %v1979 = vtanh.pop %v1977
    %v1980 = vtanh.pop %v1978
    %v1981 = vadd.f32 %v1979, 1.0
    %v1982 = vadd.f32 %v1980, 1.0
    %v1983 = vmul.f32 %v1981, 0.5
    %v1984 = vmul.f32 %v1982, 0.5
    %v1985 = vmul.f32 %v1963, %v1983
    %v1986 = vmul.f32 %v1966, %v1984
    %v1987 = vpack.c.bf16 %v1986, %v1985
    %v1996 = vunpack.c.l.b16 %v1072
    %v1997 = vunpack.c.l.b16 %v1073
    %v1998 = vunpack.c.l.b16 %v1074
    %v1999 = vunpack.c.l.b16 %v1075
    %v2000 = vunpack.c.l.b16 %v1076
    %v2001 = vunpack.c.l.b16 %v1077
    %v2002 = vunpack.c.l.b16 %v1078
    %v2003 = vunpack.c.l.b16 %v1079
    %v2004 = vpack.c.b16 %v1997, %v1996
    %v2005 = vpack.c.b16 %v1999, %v1998
    %v2006 = vpack.c.b16 %v2001, %v2000
    %v2007 = vpack.c.b16 %v2003, %v2002
    %v2013 = vsel %vm996, %v1987, 0
    %2015 = vmatprep.subr.bf16.mxu0 0
    %2016 = vmatpush1.bf16.msra.mxu0 0
    %2017 = vmatprep.subr.bf16.mxu0 0
    %2018 = vmatpush1.bf16.msra.mxu0 0
    %2019 = vmatprep.subr.bf16.mxu0 0
    %2020 = vmatpush1.bf16.msra.mxu0 0
    %2021 = vmatprep.subr.bf16.mxu0 0
    %2022 = vmatpush1.bf16.msra.mxu0 0
    %2023 = vmatprep.subr.bf16.mxu0 0
    %2024 = vmatpush1.bf16.msra.mxu0 %v2007
    %2025 = vmatprep.subr.bf16.mxu0 0
    %2026 = vmatpush1.bf16.msra.mxu0 %v2006
    %2027 = vmatprep.subr.bf16.mxu0 0
    %2028 = vmatpush1.bf16.msra.mxu0 %v2005
    %2029 = vmatprep.subr.bf16.mxu0 0
    %2030 = vmatpush1.bf16.msra.mxu0 %v2004
    %2031 = vmatprep.subr.bf16.mxu0 0
    %2032 = vmatpush2.bf16.msra.mxu0 0
    %2033 = vmatprep.subr.bf16.mxu0 0
    %2034 = vmatpush2.bf16.msra.mxu0 0
    %2035 = vmatprep.subr.bf16.mxu0 0
    %2036 = vmatpush2.bf16.msra.mxu0 0
    %2037 = vmatprep.subr.bf16.mxu0 0
    %2038 = vmatpush2.bf16.msra.mxu0 0
    %2039 = vmatprep.subr.bf16.mxu0 0
    %2040 = vmatpush2.bf16.msra.mxu0 0
    %2041 = vmatprep.subr.bf16.mxu0 0
    %2042 = vmatpush2.bf16.msra.mxu0 0
    %2043 = vmatprep.subr.bf16.mxu0 0
    %2044 = vmatpush2.bf16.msra.mxu0 0
    %2045 = vmatprep.subr.bf16.mxu0 0
    %2046 = vmatpush2.bf16.msra.mxu0 0
    %2047 = vmatprep.mubr.bf16.mxu0 0
    %2048 = vmatmul.mubr.bf16.gmra.mxu0 %v2013
    %v2049 = vpop.f32.mrf.mxu0
    %v2050 = vadd.f32 0.0, %v2049
    %v2051 = vpop.f32.mrf.mxu0
    %v2052 = vpop.f32.mrf.mxu0
    %v2053 = vadd.f32 0.0, %v2052
    %v2054 = vpop.f32.mrf.mxu0
    %2055 = vdwg.mxu0
    %v2056 = vadd.f32 %v1868, %v2050
    %v2057 = vadd.f32 %v1869, %v2053
    %v2058 = vlaneseq
    %v2059 = vshrl.u32 %v2058, 7
    %v2060 = vsub.s32 7, %v2059
    %v2061 = vrot.slane %v1050, %v2060
    %v2062 = vadd.f32 %v2056, %v2061
    %v2063 = vadd.f32 %v2057, %v2061
    %v2064 = vld [vmem:[%s3 + $0x20] sm:$0x1]
    %v2065 = vld [vmem:[%s3 + $0x21] sm:$0x1]
    %v2066 = vsel %vm61, %v2062, 0.0
    %2067 = vadd.xlane.f32.xlu0 %v2066
    %v2068 = vpop.xlane.xlu0 %2067
    %v2069 = vsel %vm61, %v2063, 0.0
    %2070 = vadd.xlane.f32.xlu0 %v2069
    %v2071 = vpop.xlane.xlu0 %2070
    %v2072 = vmul.f32 %v2068, %v68
    %v2073 = vmul.f32 %v2071, %v68
    %v2074 = vsub.f32 %v2062, %v2072
    %v2075 = vsub.f32 %v2063, %v2073
    %v2076 = vmul.f32 %v2074, %v2074
    %v2077 = vmul.f32 %v2075, %v2075
    %v2078 = vsel %vm61, %v2076, 0.0
    %2079 = vadd.xlane.f32.xlu0 %v2078
    %v2080 = vpop.xlane.xlu0 %2079
    %v2081 = vsel %vm61, %v2077, 0.0
    %2082 = vadd.xlane.f32.xlu0 %v2081
    %v2083 = vpop.xlane.xlu0 %2082
    %v2084 = vmul.f32 %v2080, %v68
    %v2085 = vmul.f32 %v2083, %v68
    %v2086 = vadd.f32 %v2084, 1e-05
    %v2087 = vadd.f32 %v2085, 1e-05
    %v2088 = vrsqrt.pop %v2086
    %v2089 = vrsqrt.pop %v2087
    %v2090 = vmul.f32 %v2074, %v2088
    %v2091 = vmul.f32 %v2075, %v2089
    %v2092 = vlaneseq
    %v2093 = vshrl.u32 %v2092, 7
    %v2094 = vsub.s32 0, %v2093
    %v2095 = vrot.slane %v2064, %v2094
    %v2096 = vmul.f32 %v2090, %v2095
    %v2097 = vmul.f32 %v2091, %v2095
    %v2098 = vlaneseq
    %v2099 = vshrl.u32 %v2098, 7
    %v2100 = vsub.s32 0, %v2099
    %v2101 = vrot.slane %v2065, %v2100
    %v2102 = vadd.f32 %v2096, %v2101
    %v2103 = vadd.f32 %v2097, %v2101
    %2104 = vst.msk [vmem:[#allocation2] sm:$0xff] %vm61, %v2102
    %2105 = vst.msk [vmem:[#allocation2 + $0x8] sm:$0xff] %vm61, %v2103
    %v2106 = vld [vmem:[%s3 + $0x22] sm:$0x1]
    %v2107 = vld [vmem:[%s3 + $0x23] sm:$0x1]
    %v2108 = vld [vmem:[%s3 + $0x24] sm:$0x1]
    %v2109 = vld [vmem:[%s3 + $0x25] sm:$0x1]
    %v2110 = vld [vmem:[%s4] sm:$0xf]
    %v2111 = vld [vmem:[%s4 + $0x4] sm:$0xf]
    %v2112 = vld [vmem:[%s4 + $0x8] sm:$0xf]
    %v2113 = vld [vmem:[%s4 + $0xc] sm:$0xf]
    %v2114 = vld [vmem:[%s4 + $0x10] sm:$0xf]
    %v2115 = vld [vmem:[%s4 + $0x14] sm:$0xf]
    %v2116 = vld [vmem:[%s4 + $0x18] sm:$0xf]
    %v2117 = vld [vmem:[%s4 + $0x1c] sm:$0xf]
    %v2118 = vpack.c.bf16 %v2103, %v2102
    %v2119 = vlaneseq
    %v2120 = vshrl.u32 %v2119, 7
    %v2121 = vsub.s32 0, %v2120
    %v2122 = vrot.slane %v2106, %v2121
    %v2127 = vunpack.c.l.b16 %v2110
    %v2128 = vunpack.c.l.b16 %v2111
    %v2129 = vunpack.c.l.b16 %v2112
    %v2130 = vunpack.c.l.b16 %v2113
    %v2131 = vpack.c.b16 %v2128, %v2127
    %v2132 = vpack.c.b16 %v2130, %v2129
    %v2136 = vsel %vm61, %v2118, 0
    %2138 = vmatprep.subr.bf16.mxu0 0
    %2139 = vmatpush1.bf16.msra.mxu0 0
    %2140 = vmatprep.subr.bf16.mxu0 0
    %2141 = vmatpush1.bf16.msra.mxu0 0
    %2142 = vmatprep.subr.bf16.mxu0 0
    %2143 = vmatpush1.bf16.msra.mxu0 0
    %2144 = vmatprep.subr.bf16.mxu0 0
    %2145 = vmatpush1.bf16.msra.mxu0 0
    %2146 = vmatprep.subr.bf16.mxu0 0
    %2147 = vmatpush1.bf16.msra.mxu0 0
    %2148 = vmatprep.subr.bf16.mxu0 0
    %2149 = vmatpush1.bf16.msra.mxu0 0
    %2150 = vmatprep.subr.bf16.mxu0 0
    %2151 = vmatpush1.bf16.msra.mxu0 %v2132
    %2152 = vmatprep.subr.bf16.mxu0 0
    %2153 = vmatpush1.bf16.msra.mxu0 %v2131
    %2154 = vmatprep.subr.bf16.mxu0 0
    %2155 = vmatpush2.bf16.msra.mxu0 0
    %2156 = vmatprep.subr.bf16.mxu0 0
    %2157 = vmatpush2.bf16.msra.mxu0 0
    %2158 = vmatprep.subr.bf16.mxu0 0
    %2159 = vmatpush2.bf16.msra.mxu0 0
    %2160 = vmatprep.subr.bf16.mxu0 0
    %2161 = vmatpush2.bf16.msra.mxu0 0
    %2162 = vmatprep.subr.bf16.mxu0 0
    %2163 = vmatpush2.bf16.msra.mxu0 0
    %2164 = vmatprep.subr.bf16.mxu0 0
    %2165 = vmatpush2.bf16.msra.mxu0 0
    %2166 = vmatprep.subr.bf16.mxu0 0
    %2167 = vmatpush2.bf16.msra.mxu0 0
    %2168 = vmatprep.subr.bf16.mxu0 0
    %2169 = vmatpush2.bf16.msra.mxu0 0
    %2170 = vmatprep.mubr.bf16.mxu0 0
    %2171 = vmatmul.mubr.bf16.gmra.mxu0 %v2136
    %v2172 = vpop.f32.mrf.mxu0
    %v2173 = vadd.f32 %v2122, %v2172
    %v2174 = vpop.f32.mrf.mxu0
    %v2175 = vpop.f32.mrf.mxu0
    %v2176 = vadd.f32 %v2122, %v2175
    %v2177 = vpop.f32.mrf.mxu0
    %2178 = vdwg.mxu0
    %v2179 = vmul.f32 %v2173, %v2173
    %v2180 = vmul.f32 %v2176, %v2176
    %v2181 = vmul.f32 %v2173, %v2179
    %v2182 = vmul.f32 %v2176, %v2180
    %v2183 = vmul.f32 %v2181, 0.044715
    %v2184 = vmul.f32 %v2182, 0.044715
    %v2185 = vadd.f32 %v2173, %v2183
    %v2186 = vadd.f32 %v2176, %v2184
    %v2187 = vmul.f32 %v2185, 0.7978846
    %v2188 = vmul.f32 %v2186, 0.7978846
    %v2189 = vtanh.pop %v2187
    %v2190 = vtanh.pop %v2188
    %v2191 = vadd.f32 %v2189, 1.0
    %v2192 = vadd.f32 %v2190, 1.0
    %v2193 = vmul.f32 %v2191, 0.5
    %v2194 = vmul.f32 %v2192, 0.5
    %v2195 = vmul.f32 %v2173, %v2193
    %v2196 = vmul.f32 %v2176, %v2194
    %v2197 = vsel %vm61, %v2195, 0.0
    %2198 = vadd.xlane.f32.xlu0 %v2197
    %v2199 = vpop.xlane.xlu0 %2198
    %v2200 = vsel %vm61, %v2196, 0.0
    %2201 = vadd.xlane.f32.xlu0 %v2200
    %v2202 = vpop.xlane.xlu0 %2201
    %v2203 = vmul.f32 %v2199, %v68
    %v2204 = vmul.f32 %v2202, %v68
    %v2205 = vsub.f32 %v2195, %v2203
    %v2206 = vsub.f32 %v2196, %v2204
    %v2207 = vmul.f32 %v2205, %v2205
    %v2208 = vmul.f32 %v2206, %v2206
    %v2209 = vsel %vm61, %v2207, 0.0
    %2210 = vadd.xlane.f32.xlu0 %v2209
    %v2211 = vpop.xlane.xlu0 %2210
    %v2212 = vsel %vm61, %v2208, 0.0
    %2213 = vadd.xlane.f32.xlu0 %v2212
    %v2214 = vpop.xlane.xlu0 %2213
    %v2215 = vmul.f32 %v2211, %v68
    %v2216 = vmul.f32 %v2214, %v68
    %v2217 = vadd.f32 %v2215, 1e-05
    %v2218 = vadd.f32 %v2216, 1e-05
    %v2219 = vrsqrt.pop %v2217
    %v2220 = vrsqrt.pop %v2218
    %v2221 = vmul.f32 %v2205, %v2219
    %v2222 = vmul.f32 %v2206, %v2220
    %v2223 = vlaneseq
    %v2224 = vshrl.u32 %v2223, 7
    %v2225 = vsub.s32 0, %v2224
    %v2226 = vrot.slane %v2107, %v2225
    %v2227 = vmul.f32 %v2221, %v2226
    %v2228 = vmul.f32 %v2222, %v2226
    %v2229 = vlaneseq
    %v2230 = vshrl.u32 %v2229, 7
    %v2231 = vsub.s32 0, %v2230
    %v2232 = vrot.slane %v2108, %v2231
    %v2233 = vadd.f32 %v2227, %v2232
    %v2234 = vadd.f32 %v2228, %v2232
    %v2235 = vpack.c.bf16 %v2234, %v2233
    %v2236 = vlaneseq
    %v2237 = vshrl.u32 %v2236, 7
    %v2238 = vsub.s32 0, %v2237
    %v2239 = vrot.slane %v2109, %v2238
    %v2244 = vunpack.c.l.b16 %v2114
    %v2245 = vunpack.c.l.b16 %v2115
    %v2246 = vunpack.c.l.b16 %v2116
    %v2247 = vunpack.c.l.b16 %v2117
    %v2248 = vpack.c.b16 %v2245, %v2244
    %v2249 = vpack.c.b16 %v2247, %v2246
    %v2253 = vsel %vm61, %v2235, 0
    %2255 = vmatprep.subr.bf16.mxu0 0
    %2256 = vmatpush1.bf16.msra.mxu0 0
    %2257 = vmatprep.subr.bf16.mxu0 0
    %2258 = vmatpush1.bf16.msra.mxu0 0
    %2259 = vmatprep.subr.bf16.mxu0 0
    %2260 = vmatpush1.bf16.msra.mxu0 0
    %2261 = vmatprep.subr.bf16.mxu0 0
    %2262 = vmatpush1.bf16.msra.mxu0 0
    %2263 = vmatprep.subr.bf16.mxu0 0
    %2264 = vmatpush1.bf16.msra.mxu0 0
    %2265 = vmatprep.subr.bf16.mxu0 0
    %2266 = vmatpush1.bf16.msra.mxu0 0
    %2267 = vmatprep.subr.bf16.mxu0 0
    %2268 = vmatpush1.bf16.msra.mxu0 %v2249
    %2269 = vmatprep.subr.bf16.mxu0 0
    %2270 = vmatpush1.bf16.msra.mxu0 %v2248
    %2271 = vmatprep.subr.bf16.mxu0 0
    %2272 = vmatpush2.bf16.msra.mxu0 0
    %2273 = vmatprep.subr.bf16.mxu0 0
    %2274 = vmatpush2.bf16.msra.mxu0 0
    %2275 = vmatprep.subr.bf16.mxu0 0
    %2276 = vmatpush2.bf16.msra.mxu0 0
    %2277 = vmatprep.subr.bf16.mxu0 0
    %2278 = vmatpush2.bf16.msra.mxu0 0
    %2279 = vmatprep.subr.bf16.mxu0 0
    %2280 = vmatpush2.bf16.msra.mxu0 0
    %2281 = vmatprep.subr.bf16.mxu0 0
    %2282 = vmatpush2.bf16.msra.mxu0 0
    %2283 = vmatprep.subr.bf16.mxu0 0
    %2284 = vmatpush2.bf16.msra.mxu0 0
    %2285 = vmatprep.subr.bf16.mxu0 0
    %2286 = vmatpush2.bf16.msra.mxu0 0
    %2287 = vmatprep.mubr.bf16.mxu0 0
    %2288 = vmatmul.mubr.bf16.gmra.mxu0 %v2253
    %v2289 = vpop.f32.mrf.mxu0
    %v2290 = vadd.f32 %v2239, %v2289
    %v2291 = vpop.f32.mrf.mxu0
    %v2292 = vpop.f32.mrf.mxu0
    %v2293 = vadd.f32 %v2239, %v2292
    %v2294 = vpop.f32.mrf.mxu0
    %2295 = vdwg.mxu0
    %2296 = vst [vmem:[#allocation4] sm:$0xff] %v2290
    %2297 = vst [vmem:[#allocation4 + $0x8] sm:$0xff] %v2293
    %v2298 = vsel %vm61, %v2102, 0.0
    %v2299 = vrot.slane %v2298, 4
    %v2300 = vadd.f32 %v2298, %v2299
    %v2301 = vrot.slane %v2300, 2
    %v2302 = vadd.f32 %v2300, %v2301
    %v2303 = vrot.slane %v2302, 1
    %v2304 = vadd.f32 %v2302, %v2303
    %v2305 = vrcp.pop 8.0
    %v2306 = vmul.f32 %v2304, %v2305
    %v2307 = vsel %vm61, %v2103, 0.0
    %v2308 = vrot.slane %v2307, 4
    %v2309 = vadd.f32 %v2307, %v2308
    %v2310 = vrot.slane %v2309, 2
    %v2311 = vadd.f32 %v2309, %v2310
    %v2312 = vrot.slane %v2311, 1
    %v2313 = vadd.f32 %v2311, %v2312
    %v2314 = vmul.f32 %v2313, %v2305
    %vm2315 = vcmask 1040384
    %v2316 = vsel %vm2315, %v2306, %v2314
    %vm2317 = vcmask 254976
    %2318 = vst.msk [vmem:[%s7] sm:$0x3] %vm2317, %v2316
    // Predicated region
    $region22: #{enhanced_esm_forward.1} parent=1 // pred_check
      _
    $region23: #{enhanced_esm_forward.1} parent=1 // pred_check_branch
      %2320 = sbr.rel (0) target = $region25
    $region24: #{enhanced_esm_forward.1} parent=1 // pred_region
      %s2322 = ssub.s32 256, 256
      %2323 = vsyncadd [#allocation3], %s2322
      %s2324 = sshll.u32 [#allocation2], 4
      %s2325 = int_to_ptr.vmem [resolvable:$true] %s2324
      %2330 = dma.vmem_to_hbm [thread:$0]  %s2325, 256, %s5, [#allocation3], 128, 128, 8
    $region25: #{enhanced_esm_forward.1} parent=1 // pred_fallthru
      _
    // Predicated region
    $region26: #{enhanced_esm_forward.1} parent=1 // pred_check
      _
    $region27: #{enhanced_esm_forward.1} parent=1 // pred_check_branch
      %2332 = sbr.rel (0) target = $region29
    $region28: #{enhanced_esm_forward.1} parent=1 // pred_region
      %s2334 = ssub.s32 256, 256
      %2335 = vsyncadd [#allocation5], %s2334
      %s2336 = sshll.u32 [#allocation4], 4
      %s2337 = int_to_ptr.vmem [resolvable:$true] %s2336
      %2342 = dma.vmem_to_hbm [thread:$0]  %s2337, 256, %s6, [#allocation5], 128, 128, 8
    $region29: #{enhanced_esm_forward.1} parent=1 // pred_fallthru
      _
    // Predicated region
    $region30: #{enhanced_esm_forward.1} parent=1 // pred_check
      _
    $region31: #{enhanced_esm_forward.1} parent=1 // pred_check_branch
      %2344 = sbr.rel (0) target = $region33
    $region32: #{enhanced_esm_forward.1} parent=1 // pred_region
      _
    $region33: #{enhanced_esm_forward.1} parent=1 // pred_fallthru
      _
    // Predicated region
    $region34: #{enhanced_esm_forward.1} parent=1 // pred_check
      _
    $region35: #{enhanced_esm_forward.1} parent=1 // pred_check_branch
      %2346 = sbr.rel (0) target = $region37
    $region36: #{enhanced_esm_forward.1} parent=1 // pred_region
      %2347 = dma.done [#allocation3], 256
    $region37: #{enhanced_esm_forward.1} parent=1 // pred_fallthru
      _
    // Predicated region
    $region38: #{enhanced_esm_forward.1} parent=1 // pred_check
      _
    $region39: #{enhanced_esm_forward.1} parent=1 // pred_check_branch
      %2349 = sbr.rel (0) target = $region41
    $region40: #{enhanced_esm_forward.1} parent=1 // pred_region
      %2350 = dma.done [#allocation5], 256
    $region41: #{enhanced_esm_forward.1} parent=1 // pred_fallthru
      _
    // Predicated region
    $region42: #{enhanced_esm_forward.1} parent=1 // pred_check
      _
    $region43: #{enhanced_esm_forward.1} parent=1 // pred_check_branch
      %2352 = sbr.rel (0) target = $region45
    $region44: #{enhanced_esm_forward.1} parent=1 // pred_region
      _
    $region45: #{enhanced_esm_forward.1} parent=1 // pred_fallthru
      _
    %2353 = vsyncpa [#allocation3], 1
    %2354 = vsyncpa [#allocation5], 1

</llo_original>
